<compile_context>
chip_gen: v7x
topology: tpu7x:2x2x1
jax: 0.10.0
libtpu: 0.0.40
codegen_flags: <defaults>
</compile_context>

<pallas_src>
import functools

import jax
import jax.numpy as jnp
from jax.experimental import pallas as pl
from jax.experimental.pallas import tpu as pltpu


def _round_up(x, m):
    return (x + m - 1) // m * m


def _device_kind():
    try:
        return jax.devices()[0].device_kind.lower()
    except Exception:  # pragma: no cover
        return ""


def _is_v7(kind):
    return ("v7" in kind) or ("7x" in kind)


def _choose_tiles(n_pad, a_itemsize, d_pad):
    """Pick (tm, tk) dividing n_pad: big tiles for DMA efficiency, but keep
    >= 2 row tiles so the 'parallel' axis can shard across v7x's 2 TCs."""
    tm = n_pad
    for cand in (1024, 512, 256, 128):
        if n_pad % cand == 0 and n_pad // cand >= 2:
            tm = cand
            break
    budget = 4 << 20  # per-buffer VMEM budget for the A tile / Y slab
    tk = 128
    for cand in (n_pad, 4096, 2048, 1024, 512, 256, 128):
        if (n_pad % cand == 0 and tm * cand * a_itemsize <= budget
                and cand * d_pad * 2 <= budget):
            tk = cand
            break
    return tm, tk


# ----------------------------------------------------------------------------
# Stage 1 (small, O(N*d)): MLP + row-wise L2 normalize, writing
#   x  = normalize([preference; MLP_1(leaky_relu(MLP(features)))])   (bf16)
#   Y0 = D^-1/2 * (x @ Wc)                                            (bf16)
# directly into lane-dense (n_pad, d_pad) slabs via pl.ds stores.
# ----------------------------------------------------------------------------
def mlp_norm_kernel(feat_ref, pref_ref, w1_ref, b1_ref, w2_ref, b2_ref,
                    dinv_ref, wc_ref, x_ref, y0_ref,
                    *, num_user, num_item, n_pad):
    f32 = jnp.float32
    bf16 = jnp.bfloat16
    n_nodes = num_user + num_item
    pad_rows = n_pad - n_nodes
    d_pad = x_ref.shape[1]

    # Zero only the padded tail rows (valid rows are fully overwritten below).
    if pad_rows > 0:
        x_ref[pl.ds(n_nodes, pad_rows), :] = jnp.zeros((pad_rows, d_pad), x_ref.dtype)
        y0_ref[pl.ds(n_nodes, pad_rows), :] = jnp.zeros((pad_rows, d_pad), y0_ref.dtype)

    # MLP: Linear(feat_size, 4*dim_latent) -> leaky_relu(0.01) -> Linear(.., dim_latent)
    h0 = jnp.dot(feat_ref[...], w1_ref[...], preferred_element_type=f32) + b1_ref[...]
    h0 = jnp.where(h0 >= 0, h0, 0.01 * h0)
    temp = jnp.dot(h0, w2_ref[...], preferred_element_type=f32) + b2_ref[...]

    # Row-wise L2 normalize with rsqrt (EUP):  v / max(||v||, 1e-12).
    def l2norm(v):
        ss = jnp.sum(v * v, axis=1, keepdims=True)
        return v * jax.lax.rsqrt(jnp.maximum(ss, 1e-24))

    xu = l2norm(pref_ref[...])       # (num_user, d_pad) f32
    xi = l2norm(temp)                # (num_item, d_pad) f32
    x_ref[pl.ds(0, num_user), :] = xu.astype(x_ref.dtype)
    x_ref[pl.ds(num_user, num_item), :] = xi.astype(x_ref.dtype)

    # Y0 = D^-1/2 * (x @ Wc)  in bf16 (moves the Wc matmul out of the conv loop).
    wc = wc_ref[...]                 # (d_pad, d_pad) bf16
    du = dinv_ref[pl.ds(0, num_user), :]
    di = dinv_ref[pl.ds(num_user, num_item), :]
    yu = du * jnp.dot(xu.astype(bf16), wc, preferred_element_type=f32)
    yi = di * jnp.dot(xi.astype(bf16), wc, preferred_element_type=f32)
    y0_ref[pl.ds(0, num_user), :] = yu.astype(y0_ref.dtype)
    y0_ref[pl.ds(num_user, num_item), :] = yi.astype(y0_ref.dtype)


# ----------------------------------------------------------------------------
# Stage 2/3: one GCNConv layer, tiled.
#   grid = (n_pad // tm  [parallel row tiles],  n_pad // tk  [arbitrary k tiles])
#   acc  = sum_k (A+I)[i,k] @ Y[k]            (8-bit A cast to bf16, f32 acc)
#   out  = dinv_i * acc + bc (+ residuals)    at the last k step
#   ynext= dinv_i * (h @ Wc)  (optional, for the next layer)
# ----------------------------------------------------------------------------
def conv_kernel(a_ref, y_ref, dinv_ref, bc_ref, *rest, nres, emit_y):
    idx = 0
    wc_ref = None
    if emit_y:
        wc_ref = rest[idx]
        idx += 1
    res_refs = rest[idx:idx + nres]
    idx += nres
    out_ref = rest[idx]
    idx += 1
    ynext_ref = None
    if emit_y:
        ynext_ref = rest[idx]
        idx += 1
    acc_ref = rest[idx]

    k = pl.program_id(1)

    @pl.when(k == 0)
    def _():
        acc_ref[...] = jnp.zeros_like(acc_ref)

    a = a_ref[...]
    if a.dtype != jnp.bfloat16:
        # int8 / fp8 0-1 adjacency -> bf16 for the MXU (exact values).
        a = a.astype(jnp.float32).astype(jnp.bfloat16)
    acc_ref[...] += jnp.dot(a, y_ref[...], preferred_element_type=jnp.float32)

    @pl.when(k == pl.num_programs(1) - 1)
    def _():
        dinv = dinv_ref[...]                                # (tm, 1) f32
        h = dinv * acc_ref[...] + bc_ref[...]               # (tm, d_pad) f32
        out = h
        for r in res_refs:
            out = out + r[...].astype(jnp.float32)
        out_ref[...] = out.astype(out_ref.dtype)
        if emit_y:
            hb = h.astype(jnp.bfloat16)
            ynext_ref[...] = (dinv * jnp.dot(hb, wc_ref[...],
                                             preferred_element_type=jnp.float32)
                              ).astype(ynext_ref.dtype)


def _gcn_conv(a01, y, dinv, bc, *, wc=None, residuals=(), emit_y=False,
              out_dtype=jnp.float32, tm, tk, vmem_limit):
    n_pad = a01.shape[0]
    d_pad = y.shape[1]
    assert n_pad % tm == 0 and n_pad % tk == 0
    grid = (n_pad // tm, n_pad // tk)
    nres = len(residuals)

    in_specs = [
        pl.BlockSpec((tm, tk), lambda i, k: (i, k)),         # (A+I) tile (8-bit)
        pl.BlockSpec((tk, d_pad), lambda i, k: (k, 0)),      # Y k-slab (bf16)
        pl.BlockSpec((tm, 1), lambda i, k: (i, 0)),          # D^-1/2 row tile
        pl.BlockSpec((1, d_pad), lambda i, k: (0, 0)),       # bias (resident)
    ]
    operands = [a01, y, dinv, bc]
    if emit_y:
        in_specs.append(pl.BlockSpec((d_pad, d_pad), lambda i, k: (0, 0)))  # Wc bf16
        operands.append(wc)
    for r in residuals:
        in_specs.append(pl.BlockSpec((tm, d_pad), lambda i, k: (i, 0)))     # bf16
        operands.append(r)

    out_shape = [jax.ShapeDtypeStruct((n_pad, d_pad), out_dtype)]
    out_specs = [pl.BlockSpec((tm, d_pad), lambda i, k: (i, 0))]
    if emit_y:
        out_shape.append(jax.ShapeDtypeStruct((n_pad, d_pad), jnp.bfloat16))
        out_specs.append(pl.BlockSpec((tm, d_pad), lambda i, k: (i, 0)))

    a_bytes = jnp.dtype(a01.dtype).itemsize
    flops = 2 * n_pad * n_pad * d_pad + (2 * n_pad * d_pad * d_pad if emit_y else 0)
    bytes_accessed = (n_pad * n_pad * a_bytes                 # (A+I) streamed once
                      + grid[0] * n_pad * d_pad * 2           # Y re-read per row tile
                      + nres * n_pad * d_pad * 2               # bf16 residuals
                      + n_pad * d_pad * jnp.dtype(out_dtype).itemsize
                      + (n_pad * d_pad * 2 + d_pad * d_pad * 2 if emit_y else 0)
                      + n_pad * 4 + d_pad * 4)

    results = pl.pallas_call(
        functools.partial(conv_kernel, nres=nres, emit_y=emit_y),
        out_shape=tuple(out_shape),
        grid=grid,
        in_specs=in_specs,
        out_specs=tuple(out_specs),
        scratch_shapes=[pltpu.VMEM((tm, d_pad), jnp.float32)],
        compiler_params=pltpu.CompilerParams(
            dimension_semantics=("parallel", "arbitrary"),
            vmem_limit_bytes=vmem_limit),
        cost_estimate=pl.CostEstimate(flops=int(flops), transcendentals=0,
                                      bytes_accessed=int(bytes_accessed)),
    )(*operands)
    return results if emit_y else results[0]


# ----------------------------------------------------------------------------
# Full forward.  a01 is the dense 0/1 self-loop adjacency (A + I).
# ----------------------------------------------------------------------------
def gcn_forward(features, preference, a01, w1, b1, w2, b2, wc, bc):
    f32 = jnp.float32
    bf16 = jnp.bfloat16
    num_user, dim_latent = preference.shape
    num_item, feat_size = features.shape
    n_nodes = num_user + num_item
    hid = w1.shape[1]

    d_pad = _round_up(max(dim_latent, 128), 128)     # lane-dense feature width
    hid_pad = _round_up(max(hid, 128), 128)
    # Pad only to layout alignment (128); NOT to tile size (A is O(N^2)).
    n_pad = _round_up(n_nodes, 128)

    kind = _device_kind()
    # 0/1 values are exact in both int8 (v5e/v6e MXU-era) and fp8 e4m3 (v7x).
    a_dtype = jnp.float8_e4m3fn if _is_v7(kind) else jnp.int8
    vmem_limit = (48 << 20) if _is_v7(kind) else (64 << 20)
    tm, tk = _choose_tiles(n_pad, jnp.dtype(a_dtype).itemsize, d_pad)

    # Zero-pad parameters / preference to lane-dense widths (padding is inert).
    w1p = jnp.zeros((feat_size, hid_pad), f32).at[:, :hid].set(w1)
    b1p = jnp.zeros((1, hid_pad), f32).at[:, :hid].set(b1.reshape(1, hid))
    w2p = jnp.zeros((hid_pad, d_pad), f32).at[:hid, :dim_latent].set(w2)
    b2p = jnp.zeros((1, d_pad), f32).at[:, :dim_latent].set(b2.reshape(1, dim_latent))
    wcp = jnp.zeros((d_pad, d_pad), bf16).at[:dim_latent, :dim_latent].set(
        wc.astype(bf16))
    bcp = jnp.zeros((1, d_pad), f32).at[:, :dim_latent].set(bc.reshape(1, dim_latent))
    prefp = jnp.zeros((num_user, d_pad), f32).at[:, :dim_latent].set(preference)

    # Factor A_hat = D^-1/2 (A+I) D^-1/2: stream the exact 0/1 matrix in 8-bit,
    # keep the degree scaling as a (n_pad,1) f32 vector (0 on padded rows).
    deg = jnp.sum(a01, axis=1)                               # >= 1 (self loops)
    dinv = jnp.zeros((n_pad, 1), f32).at[:n_nodes, 0].set(jax.lax.rsqrt(deg))
    a_pad = jnp.zeros((n_pad, n_pad), a_dtype)
    a_pad = a_pad.at[:n_nodes, :n_nodes].set(a01.astype(a_dtype))

    # --- Stage 1: x = normalize([preference; MLP(features)]) and Y0 = dinv*(x@Wc)
    vmem = pl.BlockSpec(memory_space=pltpu.MemorySpace.VMEM)
    x_bf, y0 = pl.pallas_call(
        functools.partial(mlp_norm_kernel, num_user=num_user, num_item=num_item,
                          n_pad=n_pad),
        out_shape=(jax.ShapeDtypeStruct((n_pad, d_pad), bf16),
                   jax.ShapeDtypeStruct((n_pad, d_pad), bf16)),
        in_specs=[vmem] * 8,
        out_specs=(vmem, vmem),
    )(features, prefp, w1p, b1p, w2p, b2p, dinv, wcp)

    # --- Stage 2: h = A_hat @ x @ Wc + bc   (also emits Y1 = dinv * (h @ Wc))
    h_bf, y1 = _gcn_conv(a_pad, y0, dinv, bcp, wc=wcp, emit_y=True,
                         out_dtype=bf16, tm=tm, tk=tk, vmem_limit=vmem_limit)

    # --- Stage 3: x_hat = x + h + (A_hat @ h @ Wc + bc), residuals fused.
    x_hat_pad = _gcn_conv(a_pad, y1, dinv, bcp, residuals=(x_bf, h_bf),
                          out_dtype=f32, tm=tm, tk=tk, vmem_limit=vmem_limit)

    x_hat = x_hat_pad[:n_nodes, :dim_latent]
    return x_hat, preference


# ----------------------------------------------------------------------------
# Glue: dense 0/1 self-loop adjacency from edge_index (setup, plain JAX).
# ----------------------------------------------------------------------------
def build_self_loop_adjacency(edge_index, num_nodes):
    src, dst = edge_index[0], edge_index[1]
    adj = jnp.zeros((num_nodes, num_nodes), jnp.float32)
    adj = adj.at[dst, src].add(1.0)                       # message flows src -> dst
    adj = adj + jnp.eye(num_nodes, dtype=jnp.float32)     # add self-loops first
    return adj


# Pure-JAX f32 reference mirroring the PyTorch forward.
def gcn_forward_ref(features, preference, a01, w1, b1, w2, b2, wc, bc):
    deg = jnp.sum(a01, axis=1)
    d_is = 1.0 / jnp.sqrt(deg)
    a_hat = d_is[:, None] * a01 * d_is[None, :]
    h0 = features @ w1 + b1
    h0 = jnp.where(h0 >= 0, h0, 0.01 * h0)
    temp = h0 @ w2 + b2
    x = jnp.concatenate([preference, temp], axis=0)
    x = x / jnp.maximum(jnp.linalg.norm(x, axis=1, keepdims=True), 1e-12)
    h = a_hat @ (x @ wc) + bc
    h1 = a_hat @ (h @ wc) + bc
    return x + h + h1


if __name__ == "__main__":
    # Small synthetic configuration consistent with the module's __init__.
    num_user, num_item = 64, 192          # n_nodes = 256 -> 2x1 grid (tm=128, tk=256)
    dim_latent = 32
    feat_embed_dim = 32                   # stored as self.dim_feat, unused in forward
    feat_size = 16
    n_nodes = num_user + num_item

    key = jax.random.PRNGKey(0)
    k_pref, k_w1, k_b1, k_w2, k_b2, k_wc, k_bc, k_feat = jax.random.split(key, 8)

    # preference: xavier_normal_
    std_pref = (2.0 / (num_user + dim_latent)) ** 0.5
    preference = std_pref * jax.random.normal(k_pref, (num_user, dim_latent), jnp.float32)

    # MLP: Linear(feat_size, 4*dim_latent); MLP_1: Linear(4*dim_latent, dim_latent)
    hid = 4 * dim_latent
    w1 = 0.1 * jax.random.normal(k_w1, (feat_size, hid), jnp.float32)
    b1 = 0.1 * jax.random.normal(k_b1, (1, hid), jnp.float32)
    w2 = 0.1 * jax.random.normal(k_w2, (hid, dim_latent), jnp.float32)
    b2 = 0.1 * jax.random.normal(k_b2, (1, dim_latent), jnp.float32)

    # GCNConv(dim_latent, dim_latent): weight + bias (shared across both layers)
    wc = 0.1 * jax.random.normal(k_wc, (dim_latent, dim_latent), jnp.float32)
    bc = 0.1 * jax.random.normal(k_bc, (1, dim_latent), jnp.float32)

    # item features
    features = jax.random.normal(k_feat, (num_item, feat_size), jnp.float32)

    # deterministic bipartite user<->item edges (both directions)
    src, dst = [], []
    for item in range(num_item):
        u = item % num_user
        v = num_user + item
        src += [u, v]
        dst += [v, u]
    edge_index = jnp.array([src, dst], dtype=jnp.int32)   # shape (2, 2*num_item)

    a01 = build_self_loop_adjacency(edge_index, n_nodes)

    x_hat, pref_out = jax.jit(gcn_forward)(
        features, preference, a01, w1, b1, w2, b2, wc, bc)
    jax.block_until_ready(x_hat)

    ref = gcn_forward_ref(features, preference, a01, w1, b1, w2, b2, wc, bc)
    assert x_hat.shape == (n_nodes, dim_latent)
    assert pref_out.shape == (num_user, dim_latent)
    # x / Y / h / Wc are carried in bf16 (f32 accumulation; the adjacency stream
    # itself is now exact 0/1), so a slightly looser tolerance vs the all-f32
    # reference is expected.
    assert jnp.allclose(x_hat, ref, atol=2e-2, rtol=2e-2), float(
        jnp.max(jnp.abs(x_hat - ref)))

    print("KERNEL_OK")
</pallas_src>

<mosaic_0001>
module attributes {stable_mosaic.version = 11 : i64} {
  func.func @mlp_norm_kernel(%arg0: memref<192x16xf32, #tpu.memory_space<vmem>>, %arg1: memref<64x128xf32, #tpu.memory_space<vmem>>, %arg2: memref<16x128xf32, #tpu.memory_space<vmem>>, %arg3: memref<1x128xf32, #tpu.memory_space<vmem>>, %arg4: memref<128x128xf32, #tpu.memory_space<vmem>>, %arg5: memref<1x128xf32, #tpu.memory_space<vmem>>, %arg6: memref<256x1xf32, #tpu.memory_space<vmem>>, %arg7: memref<128x128xbf16, #tpu.memory_space<vmem>>, %arg8: memref<256x128xbf16, #tpu.memory_space<vmem>>, %arg9: memref<256x128xbf16, #tpu.memory_space<vmem>>) attributes {dimension_semantics = [], scalar_prefetch = 0 : i64, scratch_operands = 0 : i64, tpu.core_type = #tpu.core_type<tc>} {
    %c0 = arith.constant 0 : index
    %c0_0 = arith.constant 0 : index
    %0 = vector.load %arg0[%c0, %c0_0] : memref<192x16xf32, #tpu.memory_space<vmem>>, vector<192x16xf32>
    %c0_1 = arith.constant 0 : index
    %c0_2 = arith.constant 0 : index
    %1 = vector.load %arg2[%c0_1, %c0_2] : memref<16x128xf32, #tpu.memory_space<vmem>>, vector<16x128xf32>
    %cst = arith.constant dense<0.000000e+00> : vector<192x128xf32>
    %2 = tpu.matmul %0, %1, %cst {dimension_numbers = #tpu.dot_dimension_numbers<[1], [0], [0], [1], [0, 0, 1, 1], [], []>} : vector<192x16xf32>, vector<16x128xf32>, vector<192x128xf32> -> vector<192x128xf32>
    %c0_3 = arith.constant 0 : index
    %c0_4 = arith.constant 0 : index
    %3 = vector.load %arg3[%c0_3, %c0_4] : memref<1x128xf32, #tpu.memory_space<vmem>>, vector<1x128xf32>
    %4 = vector.broadcast %3 : vector<1x128xf32> to vector<192x128xf32>
    %5 = arith.addf %2, %4 : vector<192x128xf32>
    %cst_5 = arith.constant 0.000000e+00 : f32
    %6 = vector.broadcast %cst_5 : f32 to vector<192x128xf32>
    %7 = arith.cmpf oge, %5, %6 : vector<192x128xf32>
    %cst_6 = arith.constant 0.00999999977 : f32
    %8 = vector.broadcast %cst_6 : f32 to vector<192x128xf32>
    %9 = arith.mulf %8, %5 : vector<192x128xf32>
    %10 = arith.select %7, %5, %9 : vector<192x128xi1>, vector<192x128xf32>
    %c0_7 = arith.constant 0 : index
    %c0_8 = arith.constant 0 : index
    %11 = vector.load %arg4[%c0_7, %c0_8] : memref<128x128xf32, #tpu.memory_space<vmem>>, vector<128x128xf32>
    %cst_9 = arith.constant dense<0.000000e+00> : vector<192x128xf32>
    %12 = tpu.matmul %10, %11, %cst_9 {dimension_numbers = #tpu.dot_dimension_numbers<[1], [0], [0], [1], [0, 0, 1, 1], [], []>} : vector<192x128xf32>, vector<128x128xf32>, vector<192x128xf32> -> vector<192x128xf32>
    %c0_10 = arith.constant 0 : index
    %c0_11 = arith.constant 0 : index
    %13 = vector.load %arg5[%c0_10, %c0_11] : memref<1x128xf32, #tpu.memory_space<vmem>>, vector<1x128xf32>
    %14 = vector.broadcast %13 : vector<1x128xf32> to vector<192x128xf32>
    %15 = arith.addf %12, %14 : vector<192x128xf32>
    %c0_12 = arith.constant 0 : index
    %c0_13 = arith.constant 0 : index
    %16 = vector.load %arg1[%c0_12, %c0_13] : memref<64x128xf32, #tpu.memory_space<vmem>>, vector<64x128xf32>
    %17 = arith.mulf %16, %16 : vector<64x128xf32>
    %cst_14 = arith.constant dense<0.000000e+00> : vector<64xf32>
    %18 = vector.multi_reduction <add>, %17, %cst_14 [1] : vector<64x128xf32> to vector<64xf32>
    %19 = vector.shape_cast %18 : vector<64xf32> to vector<64x1xf32>
    %cst_15 = arith.constant 1.000000e-24 : f32
    %20 = vector.broadcast %cst_15 : f32 to vector<64x1xf32>
    %21 = arith.maximumf %19, %20 : vector<64x1xf32>
    %22 = math.rsqrt %21 : vector<64x1xf32>
    %23 = vector.broadcast %22 : vector<64x1xf32> to vector<64x128xf32>
    %24 = arith.mulf %16, %23 : vector<64x128xf32>
    %25 = arith.mulf %15, %15 : vector<192x128xf32>
    %cst_16 = arith.constant dense<0.000000e+00> : vector<192xf32>
    %26 = vector.multi_reduction <add>, %25, %cst_16 [1] : vector<192x128xf32> to vector<192xf32>
    %27 = vector.shape_cast %26 : vector<192xf32> to vector<192x1xf32>
    %cst_17 = arith.constant 1.000000e-24 : f32
    %28 = vector.broadcast %cst_17 : f32 to vector<192x1xf32>
    %29 = arith.maximumf %27, %28 : vector<192x1xf32>
    %30 = math.rsqrt %29 : vector<192x1xf32>
    %31 = vector.broadcast %30 : vector<192x1xf32> to vector<192x128xf32>
    %32 = arith.mulf %15, %31 : vector<192x128xf32>
    %33 = arith.truncf %24 : vector<64x128xf32> to vector<64x128xbf16>
    %c0_18 = arith.constant 0 : index
    %c0_19 = arith.constant 0 : index
    %34 = vector.load %arg8[%c0_18, %c0_19] : memref<256x128xbf16, #tpu.memory_space<vmem>>, vector<64x128xbf16>
    tpu.vector_store %arg8[%c0_18, %c0_19], %33 {strides = array<i32>} : memref<256x128xbf16, #tpu.memory_space<vmem>>, vector<64x128xbf16>,
    %35 = arith.truncf %32 : vector<192x128xf32> to vector<192x128xbf16>
    %c64 = arith.constant 64 : index
    %c0_20 = arith.constant 0 : index
    %36 = vector.load %arg8[%c64, %c0_20] : memref<256x128xbf16, #tpu.memory_space<vmem>>, vector<192x128xbf16>
    tpu.vector_store %arg8[%c64, %c0_20], %35 {strides = array<i32>} : memref<256x128xbf16, #tpu.memory_space<vmem>>, vector<192x128xbf16>,
    %c0_21 = arith.constant 0 : index
    %c0_22 = arith.constant 0 : index
    %37 = vector.load %arg7[%c0_21, %c0_22] : memref<128x128xbf16, #tpu.memory_space<vmem>>, vector<128x128xbf16>
    %c0_23 = arith.constant 0 : index
    %c0_24 = arith.constant 0 : index
    %38 = vector.load %arg6[%c0_23, %c0_24] : memref<256x1xf32, #tpu.memory_space<vmem>>, vector<64x1xf32>
    %c64_25 = arith.constant 64 : index
    %c0_26 = arith.constant 0 : index
    %39 = vector.load %arg6[%c64_25, %c0_26] : memref<256x1xf32, #tpu.memory_space<vmem>>, vector<192x1xf32>
    %40 = arith.truncf %24 : vector<64x128xf32> to vector<64x128xbf16>
    %cst_27 = arith.constant dense<0.000000e+00> : vector<64x128xf32>
    %41 = tpu.matmul %40, %37, %cst_27 {dimension_numbers = #tpu.dot_dimension_numbers<[1], [0], [0], [1], [0, 0, 1, 1], [], []>} : vector<64x128xbf16>, vector<128x128xbf16>, vector<64x128xf32> -> vector<64x128xf32>
    %42 = vector.broadcast %38 : vector<64x1xf32> to vector<64x128xf32>
    %43 = arith.mulf %42, %41 : vector<64x128xf32>
    %44 = arith.truncf %32 : vector<192x128xf32> to vector<192x128xbf16>
    %cst_28 = arith.constant dense<0.000000e+00> : vector<192x128xf32>
    %45 = tpu.matmul %44, %37, %cst_28 {dimension_numbers = #tpu.dot_dimension_numbers<[1], [0], [0], [1], [0, 0, 1, 1], [], []>} : vector<192x128xbf16>, vector<128x128xbf16>, vector<192x128xf32> -> vector<192x128xf32>
    %46 = vector.broadcast %39 : vector<192x1xf32> to vector<192x128xf32>
    %47 = arith.mulf %46, %45 : vector<192x128xf32>
    %48 = arith.truncf %43 : vector<64x128xf32> to vector<64x128xbf16>
    %c0_29 = arith.constant 0 : index
    %c0_30 = arith.constant 0 : index
    %49 = vector.load %arg9[%c0_29, %c0_30] : memref<256x128xbf16, #tpu.memory_space<vmem>>, vector<64x128xbf16>
    tpu.vector_store %arg9[%c0_29, %c0_30], %48 {strides = array<i32>} : memref<256x128xbf16, #tpu.memory_space<vmem>>, vector<64x128xbf16>,
    %50 = arith.truncf %47 : vector<192x128xf32> to vector<192x128xbf16>
    %c64_31 = arith.constant 64 : index
    %c0_32 = arith.constant 0 : index
    %51 = vector.load %arg9[%c64_31, %c0_32] : memref<256x128xbf16, #tpu.memory_space<vmem>>, vector<192x128xbf16>
    tpu.vector_store %arg9[%c64_31, %c0_32], %50 {strides = array<i32>} : memref<256x128xbf16, #tpu.memory_space<vmem>>, vector<192x128xbf16>,
    return
  }
}

module attributes {stable_mosaic.version = 11 : i64} {
  func.func @conv_kernel(%arg0: i32, %arg1: i32, %arg2: memref<128x256xi8, #tpu.memory_space<vmem>>, %arg3: memref<256x128xbf16, #tpu.memory_space<vmem>>, %arg4: memref<128x1xf32, #tpu.memory_space<vmem>>, %arg5: memref<1x128xf32, #tpu.memory_space<vmem>>, %arg6: memref<128x128xbf16, #tpu.memory_space<vmem>>, %arg7: memref<128x128xbf16, #tpu.memory_space<vmem>>, %arg8: memref<128x128xbf16, #tpu.memory_space<vmem>>, %arg9: memref<128x128xf32, #tpu.memory_space<vmem>>) attributes {dimension_semantics = [#tpu.dimension_semantics<parallel>, #tpu.dimension_semantics<arbitrary>], iteration_bounds = array<i64: 2, 1>, scalar_prefetch = 0 : i64, scratch_operands = 1 : i64, tpu.core_type = #tpu.core_type<tc>, window_params = [{transform_indices = @transform_0, window_bounds = array<i64: 128, 256>}, {transform_indices = @transform_1, window_bounds = array<i64: 256, 128>}, {transform_indices = @transform_2, window_bounds = array<i64: 128, 1>}, {pipeline_mode = #tpu.pipeline_mode<synchronous>, transform_indices = @transform_3, window_bounds = array<i64: 1, 128>}, {pipeline_mode = #tpu.pipeline_mode<synchronous>, transform_indices = @transform_4, window_bounds = array<i64: 128, 128>}, {transform_indices = @transform_5, window_bounds = array<i64: 128, 128>}, {transform_indices = @transform_6, window_bounds = array<i64: 128, 128>}]} {
    %c0_i32 = arith.constant 0 : i32
    %0 = arith.cmpi eq, %arg1, %c0_i32 : i32
    %1 = arith.extui %0 : i1 to i32
    %c0_i32_0 = arith.constant 0 : i32
    %2 = arith.cmpi ne, %1, %c0_i32_0 : i32
    scf.if %2 {
      %cst_10 = arith.constant 0.000000e+00 : f32
      %14 = vector.broadcast %cst_10 : f32 to vector<128x128xf32>
      %c0_11 = arith.constant 0 : index
      %c0_12 = arith.constant 0 : index
      %15 = vector.load %arg9[%c0_11, %c0_12] : memref<128x128xf32, #tpu.memory_space<vmem>>, vector<128x128xf32>
      tpu.vector_store %arg9[%c0_11, %c0_12], %14 {strides = array<i32>} : memref<128x128xf32, #tpu.memory_space<vmem>>, vector<128x128xf32>,
    } else {
    }
    %c0 = arith.constant 0 : index
    %c0_1 = arith.constant 0 : index
    %3 = vector.load %arg2[%c0, %c0_1] : memref<128x256xi8, #tpu.memory_space<vmem>>, vector<128x256xi8>
    %4 = arith.sitofp %3 : vector<128x256xi8> to vector<128x256xf32>
    %5 = arith.truncf %4 : vector<128x256xf32> to vector<128x256xbf16>
    %c0_2 = arith.constant 0 : index
    %c0_3 = arith.constant 0 : index
    %6 = vector.load %arg9[%c0_2, %c0_3] : memref<128x128xf32, #tpu.memory_space<vmem>>, vector<128x128xf32>
    %c0_4 = arith.constant 0 : index
    %c0_5 = arith.constant 0 : index
    %7 = vector.load %arg3[%c0_4, %c0_5] : memref<256x128xbf16, #tpu.memory_space<vmem>>, vector<256x128xbf16>
    %cst = arith.constant dense<0.000000e+00> : vector<128x128xf32>
    %8 = tpu.matmul %5, %7, %cst {dimension_numbers = #tpu.dot_dimension_numbers<[1], [0], [0], [1], [0, 0, 1, 1], [], []>} : vector<128x256xbf16>, vector<256x128xbf16>, vector<128x128xf32> -> vector<128x128xf32>
    %9 = arith.addf %6, %8 : vector<128x128xf32>
    %c0_6 = arith.constant 0 : index
    %c0_7 = arith.constant 0 : index
    %10 = vector.load %arg9[%c0_6, %c0_7] : memref<128x128xf32, #tpu.memory_space<vmem>>, vector<128x128xf32>
    tpu.vector_store %arg9[%c0_6, %c0_7], %9 {strides = array<i32>} : memref<128x128xf32, #tpu.memory_space<vmem>>, vector<128x128xf32>,
    %c0_i32_8 = arith.constant 0 : i32
    %11 = arith.cmpi eq, %arg1, %c0_i32_8 : i32
    %12 = arith.extui %11 : i1 to i32
    %c0_i32_9 = arith.constant 0 : i32
    %13 = arith.cmpi ne, %12, %c0_i32_9 : i32
    scf.if %13 {
      %c0_10 = arith.constant 0 : index
      %c0_11 = arith.constant 0 : index
      %14 = vector.load %arg4[%c0_10, %c0_11] : memref<128x1xf32, #tpu.memory_space<vmem>>, vector<128x1xf32>
      %c0_12 = arith.constant 0 : index
      %c0_13 = arith.constant 0 : index
      %15 = vector.load %arg9[%c0_12, %c0_13] : memref<128x128xf32, #tpu.memory_space<vmem>>, vector<128x128xf32>
      %16 = vector.broadcast %14 : vector<128x1xf32> to vector<128x128xf32>
      %17 = arith.mulf %16, %15 : vector<128x128xf32>
      %c0_14 = arith.constant 0 : index
      %c0_15 = arith.constant 0 : index
      %18 = vector.load %arg5[%c0_14, %c0_15] : memref<1x128xf32, #tpu.memory_space<vmem>>, vector<1x128xf32>
      %19 = vector.broadcast %18 : vector<1x128xf32> to vector<128x128xf32>
      %20 = arith.addf %17, %19 : vector<128x128xf32>
      %21 = arith.truncf %20 : vector<128x128xf32> to vector<128x128xbf16>
      %c0_16 = arith.constant 0 : index
      %c0_17 = arith.constant 0 : index
      %22 = vector.load %arg7[%c0_16, %c0_17] : memref<128x128xbf16, #tpu.memory_space<vmem>>, vector<128x128xbf16>
      tpu.vector_store %arg7[%c0_16, %c0_17], %21 {strides = array<i32>} : memref<128x128xbf16, #tpu.memory_space<vmem>>, vector<128x128xbf16>,
      %23 = arith.truncf %20 : vector<128x128xf32> to vector<128x128xbf16>
      %c0_18 = arith.constant 0 : index
      %c0_19 = arith.constant 0 : index
      %24 = vector.load %arg6[%c0_18, %c0_19] : memref<128x128xbf16, #tpu.memory_space<vmem>>, vector<128x128xbf16>
      %cst_20 = arith.constant dense<0.000000e+00> : vector<128x128xf32>
      %25 = tpu.matmul %23, %24, %cst_20 {dimension_numbers = #tpu.dot_dimension_numbers<[1], [0], [0], [1], [0, 0, 1, 1], [], []>} : vector<128x128xbf16>, vector<128x128xbf16>, vector<128x128xf32> -> vector<128x128xf32>
      %26 = vector.broadcast %14 : vector<128x1xf32> to vector<128x128xf32>
      %27 = arith.mulf %26, %25 : vector<128x128xf32>
      %28 = arith.truncf %27 : vector<128x128xf32> to vector<128x128xbf16>
      %c0_21 = arith.constant 0 : index
      %c0_22 = arith.constant 0 : index
      %29 = vector.load %arg8[%c0_21, %c0_22] : memref<128x128xbf16, #tpu.memory_space<vmem>>, vector<128x128xbf16>
      tpu.vector_store %arg8[%c0_21, %c0_22], %28 {strides = array<i32>} : memref<128x128xbf16, #tpu.memory_space<vmem>>, vector<128x128xbf16>,
    } else {
    }
    return
  }
  func.func @transform_0(%arg0: i32, %arg1: i32) -> (i32, i32) {
    %c0_i32 = arith.constant 0 : i32
    return %arg0, %arg1 : i32, i32
  }
  func.func @transform_1(%arg0: i32, %arg1: i32) -> (i32, i32) {
    %c0_i32 = arith.constant 0 : i32
    %c0_i32_0 = arith.constant 0 : i32
    return %arg1, %c0_i32 : i32, i32
  }
  func.func @transform_2(%arg0: i32, %arg1: i32) -> (i32, i32) {
    %c0_i32 = arith.constant 0 : i32
    %c0_i32_0 = arith.constant 0 : i32
    return %arg0, %c0_i32 : i32, i32
  }
  func.func @transform_3(%arg0: i32, %arg1: i32) -> (i32, i32) {
    %c0_i32 = arith.constant 0 : i32
    %c0_i32_0 = arith.constant 0 : i32
    %c0_i32_1 = arith.constant 0 : i32
    return %c0_i32, %c0_i32_0 : i32, i32
  }
  func.func @transform_4(%arg0: i32, %arg1: i32) -> (i32, i32) {
    %c0_i32 = arith.constant 0 : i32
    %c0_i32_0 = arith.constant 0 : i32
    %c0_i32_1 = arith.constant 0 : i32
    return %c0_i32, %c0_i32_0 : i32, i32
  }
  func.func @transform_5(%arg0: i32, %arg1: i32) -> (i32, i32) {
    %c0_i32 = arith.constant 0 : i32
    %c0_i32_0 = arith.constant 0 : i32
    return %arg0, %c0_i32 : i32, i32
  }
  func.func @transform_6(%arg0: i32, %arg1: i32) -> (i32, i32) {
    %c0_i32 = arith.constant 0 : i32
    %c0_i32_0 = arith.constant 0 : i32
    return %arg0, %c0_i32 : i32, i32
  }
}

module attributes {stable_mosaic.version = 11 : i64} {
  func.func @conv_kernel(%arg0: i32, %arg1: i32, %arg2: memref<128x256xi8, #tpu.memory_space<vmem>>, %arg3: memref<256x128xbf16, #tpu.memory_space<vmem>>, %arg4: memref<128x1xf32, #tpu.memory_space<vmem>>, %arg5: memref<1x128xf32, #tpu.memory_space<vmem>>, %arg6: memref<128x128xbf16, #tpu.memory_space<vmem>>, %arg7: memref<128x128xbf16, #tpu.memory_space<vmem>>, %arg8: memref<128x128xf32, #tpu.memory_space<vmem>>, %arg9: memref<128x128xf32, #tpu.memory_space<vmem>>) attributes {dimension_semantics = [#tpu.dimension_semantics<parallel>, #tpu.dimension_semantics<arbitrary>], iteration_bounds = array<i64: 2, 1>, scalar_prefetch = 0 : i64, scratch_operands = 1 : i64, tpu.core_type = #tpu.core_type<tc>, window_params = [{transform_indices = @transform_0, window_bounds = array<i64: 128, 256>}, {transform_indices = @transform_1, window_bounds = array<i64: 256, 128>}, {transform_indices = @transform_2, window_bounds = array<i64: 128, 1>}, {pipeline_mode = #tpu.pipeline_mode<synchronous>, transform_indices = @transform_3, window_bounds = array<i64: 1, 128>}, {transform_indices = @transform_4, window_bounds = array<i64: 128, 128>}, {transform_indices = @transform_5, window_bounds = array<i64: 128, 128>}, {transform_indices = @transform_6, window_bounds = array<i64: 128, 128>}]} {
    %c0_i32 = arith.constant 0 : i32
    %0 = arith.cmpi eq, %arg1, %c0_i32 : i32
    %1 = arith.extui %0 : i1 to i32
    %c0_i32_0 = arith.constant 0 : i32
    %2 = arith.cmpi ne, %1, %c0_i32_0 : i32
    scf.if %2 {
      %cst_10 = arith.constant 0.000000e+00 : f32
      %14 = vector.broadcast %cst_10 : f32 to vector<128x128xf32>
      %c0_11 = arith.constant 0 : index
      %c0_12 = arith.constant 0 : index
      %15 = vector.load %arg9[%c0_11, %c0_12] : memref<128x128xf32, #tpu.memory_space<vmem>>, vector<128x128xf32>
      tpu.vector_store %arg9[%c0_11, %c0_12], %14 {strides = array<i32>} : memref<128x128xf32, #tpu.memory_space<vmem>>, vector<128x128xf32>,
    } else {
    }
    %c0 = arith.constant 0 : index
    %c0_1 = arith.constant 0 : index
    %3 = vector.load %arg2[%c0, %c0_1] : memref<128x256xi8, #tpu.memory_space<vmem>>, vector<128x256xi8>
    %4 = arith.sitofp %3 : vector<128x256xi8> to vector<128x256xf32>
    %5 = arith.truncf %4 : vector<128x256xf32> to vector<128x256xbf16>
    %c0_2 = arith.constant 0 : index
    %c0_3 = arith.constant 0 : index
    %6 = vector.load %arg9[%c0_2, %c0_3] : memref<128x128xf32, #tpu.memory_space<vmem>>, vector<128x128xf32>
    %c0_4 = arith.constant 0 : index
    %c0_5 = arith.constant 0 : index
    %7 = vector.load %arg3[%c0_4, %c0_5] : memref<256x128xbf16, #tpu.memory_space<vmem>>, vector<256x128xbf16>
    %cst = arith.constant dense<0.000000e+00> : vector<128x128xf32>
    %8 = tpu.matmul %5, %7, %cst {dimension_numbers = #tpu.dot_dimension_numbers<[1], [0], [0], [1], [0, 0, 1, 1], [], []>} : vector<128x256xbf16>, vector<256x128xbf16>, vector<128x128xf32> -> vector<128x128xf32>
    %9 = arith.addf %6, %8 : vector<128x128xf32>
    %c0_6 = arith.constant 0 : index
    %c0_7 = arith.constant 0 : index
    %10 = vector.load %arg9[%c0_6, %c0_7] : memref<128x128xf32, #tpu.memory_space<vmem>>, vector<128x128xf32>
    tpu.vector_store %arg9[%c0_6, %c0_7], %9 {strides = array<i32>} : memref<128x128xf32, #tpu.memory_space<vmem>>, vector<128x128xf32>,
    %c0_i32_8 = arith.constant 0 : i32
    %11 = arith.cmpi eq, %arg1, %c0_i32_8 : i32
    %12 = arith.extui %11 : i1 to i32
    %c0_i32_9 = arith.constant 0 : i32
    %13 = arith.cmpi ne, %12, %c0_i32_9 : i32
    scf.if %13 {
      %c0_10 = arith.constant 0 : index
      %c0_11 = arith.constant 0 : index
      %14 = vector.load %arg4[%c0_10, %c0_11] : memref<128x1xf32, #tpu.memory_space<vmem>>, vector<128x1xf32>
      %c0_12 = arith.constant 0 : index
      %c0_13 = arith.constant 0 : index
      %15 = vector.load %arg9[%c0_12, %c0_13] : memref<128x128xf32, #tpu.memory_space<vmem>>, vector<128x128xf32>
      %16 = vector.broadcast %14 : vector<128x1xf32> to vector<128x128xf32>
      %17 = arith.mulf %16, %15 : vector<128x128xf32>
      %c0_14 = arith.constant 0 : index
      %c0_15 = arith.constant 0 : index
      %18 = vector.load %arg5[%c0_14, %c0_15] : memref<1x128xf32, #tpu.memory_space<vmem>>, vector<1x128xf32>
      %19 = vector.broadcast %18 : vector<1x128xf32> to vector<128x128xf32>
      %20 = arith.addf %17, %19 : vector<128x128xf32>
      %c0_16 = arith.constant 0 : index
      %c0_17 = arith.constant 0 : index
      %21 = vector.load %arg6[%c0_16, %c0_17] : memref<128x128xbf16, #tpu.memory_space<vmem>>, vector<128x128xbf16>
      %22 = arith.extf %21 : vector<128x128xbf16> to vector<128x128xf32>
      %23 = arith.addf %20, %22 : vector<128x128xf32>
      %c0_18 = arith.constant 0 : index
      %c0_19 = arith.constant 0 : index
      %24 = vector.load %arg7[%c0_18, %c0_19] : memref<128x128xbf16, #tpu.memory_space<vmem>>, vector<128x128xbf16>
      %25 = arith.extf %24 : vector<128x128xbf16> to vector<128x128xf32>
      %26 = arith.addf %23, %25 : vector<128x128xf32>
      %c0_20 = arith.constant 0 : index
      %c0_21 = arith.constant 0 : index
      %27 = vector.load %arg8[%c0_20, %c0_21] : memref<128x128xf32, #tpu.memory_space<vmem>>, vector<128x128xf32>
      tpu.vector_store %arg8[%c0_20, %c0_21], %26 {strides = array<i32>} : memref<128x128xf32, #tpu.memory_space<vmem>>, vector<128x128xf32>,
    } else {
    }
    return
  }
  func.func @transform_0(%arg0: i32, %arg1: i32) -> (i32, i32) {
    %c0_i32 = arith.constant 0 : i32
    return %arg0, %arg1 : i32, i32
  }
  func.func @transform_1(%arg0: i32, %arg1: i32) -> (i32, i32) {
    %c0_i32 = arith.constant 0 : i32
    %c0_i32_0 = arith.constant 0 : i32
    return %arg1, %c0_i32 : i32, i32
  }
  func.func @transform_2(%arg0: i32, %arg1: i32) -> (i32, i32) {
    %c0_i32 = arith.constant 0 : i32
    %c0_i32_0 = arith.constant 0 : i32
    return %arg0, %c0_i32 : i32, i32
  }
  func.func @transform_3(%arg0: i32, %arg1: i32) -> (i32, i32) {
    %c0_i32 = arith.constant 0 : i32
    %c0_i32_0 = arith.constant 0 : i32
    %c0_i32_1 = arith.constant 0 : i32
    return %c0_i32, %c0_i32_0 : i32, i32
  }
  func.func @transform_4(%arg0: i32, %arg1: i32) -> (i32, i32) {
    %c0_i32 = arith.constant 0 : i32
    %c0_i32_0 = arith.constant 0 : i32
    return %arg0, %c0_i32 : i32, i32
  }
  func.func @transform_5(%arg0: i32, %arg1: i32) -> (i32, i32) {
    %c0_i32 = arith.constant 0 : i32
    %c0_i32_0 = arith.constant 0 : i32
    return %arg0, %c0_i32 : i32, i32
  }
  func.func @transform_6(%arg0: i32, %arg1: i32) -> (i32, i32) {
    %c0_i32 = arith.constant 0 : i32
    %c0_i32_0 = arith.constant 0 : i32
    return %arg0, %c0_i32 : i32, i32
  }
}

</mosaic_0001>

<llo_original>
// kernel: gcn_forward.5
$region0: #{gcn_forward.5}
  #allocation0 [shape = 'u32[]', space=smem, size = 0x4, offset = 0x4, fixed_abs, tag = 'smem constant byte address 0x4 - core index']
  #allocation1 [shape = 'u32[144,128]{1,0:T(1,128)}', space=vmem, size = 0x12000, scoped, tag = 'internal scratch']
  #allocation2 [shape = 'f32[128,128]{1,0:T(8,128)}', space=vmem, size = 0x10000, scoped, tag = 'scratch operand']
  %s0 = inlined_call_operand.hbm [shape: s8[256,256], index: 0, kind: input, shape index: {}]
  %s1 = inlined_call_operand.hbm [shape: bf16[256,128], index: 1, kind: input, shape index: {}]
  %s2 = inlined_call_operand.hbm [shape: f32[256,1], index: 2, kind: input, shape index: {}]
  %s3 = inlined_call_operand.hbm [shape: f32[1,128], index: 3, kind: input, shape index: {}]
  %s4 = inlined_call_operand.hbm [shape: bf16[256,128], index: 4, kind: input, shape index: {}]
  %s5 = inlined_call_operand.hbm [shape: bf16[256,128], index: 5, kind: input, shape index: {}]
  %s6 = inlined_call_operand.hbm [shape: f32[256,128], index: 6, kind: output, shape index: {}]
  %s7 = sld [smem:[#allocation0]]
  $region89: #{gcn_forward.5} parent=0
    _
  %s9 = ssub.s32 1, %s7
  %s10 = scalar_select 0, %s9, %s7
  $region1: #{gcn_forward.5} parent=0
    #allocation3 [shape = 'u8[65536]{0}', space=vmem, size = 0x10000, scoped, tag = 'input window, operand 0']
    #allocation4 [shape = 's32[2]{0}', space=sflag, size = 0x8, scoped, tag = 'scoped memory for gcn_forward.5']
    #allocation5 [shape = 's32[2]{0}', space=sflag, size = 0x8, scoped, tag = 'scoped memory for gcn_forward.5']
    #allocation6 [shape = 'u8[65536]{0}', space=vmem, size = 0x10000, scoped, tag = 'input window, operand 1, single buffered']
    #allocation7 [shape = 's32[1]{0}', space=sflag, size = 0x4, scoped, tag = 'scoped memory for gcn_forward.5']
    #allocation8 [shape = 'u8[131072]{0}', space=vmem, size = 0x20000, scoped, tag = 'input window, operand 2']
    #allocation9 [shape = 'u8[512]{0}', space=vmem, size = 0x400, scoped, tag = 'input window, operand 3, single buffered']
    #allocation10 [shape = 'u8[65536]{0}', space=vmem, size = 0x10000, scoped, tag = 'input window, operand 4']
    #allocation11 [shape = 's32[2]{0}', space=sflag, size = 0x8, scoped, tag = 'scoped memory for gcn_forward.5']
    #allocation12 [shape = 'u8[65536]{0}', space=vmem, size = 0x10000, scoped, tag = 'input window, operand 5']
    #allocation13 [shape = 'u8[131072]{0}', space=vmem, size = 0x20000, scoped, tag = 'output window, operand 0']
    %11 = vsyncpa [#allocation4], 0
    %s12 = scalar_lea.sflag [#allocation4], 1
    %13 = vsyncpa %s12, 0
    %14 = vsyncpa [#allocation7], 0
    %15 = vsyncpa [#allocation11], 0
    %s16 = scalar_lea.sflag [#allocation11], 1
    %17 = vsyncpa %s16, 0
    %18 = vsyncpa [#allocation5], 0
    %s19 = scalar_lea.sflag [#allocation5], 1
    %20 = vsyncpa %s19, 0
    loop: start=0, step=1, limit=4
    $region2: #{gcn_forward.5} parent=1 // loop_pre_header
      _
    $region3: #{gcn_forward.5} parent=1 // loop_header
      %s22 = sphi 0, %s26
      %p23 = scmp.ge.s32.totalorder %s22, 4
      %s29 = sphi 0, %s41
      %s30 = sphi 0, %s37
      %s31 = sphi 0, %s29
      %s32 = sphi 0, %s30
      %s33 = sphi 0, %s31
      %s34 = sphi 0, %s32
      %s46 = sphi 0, %s48
      %s49 = sphi 0, %s46
      %s50 = sphi 0, %s49
      %s66 = sphi 0, %s50
      %s72 = sphi 0, %s74
      %s75 = sphi 0, %s72
      %s76 = sphi 0, %s75
      %s92 = sphi 0, %s76
      %s98 = sphi 0, %s100
      %s101 = sphi 0, %s98
      %s102 = sphi 0, %s101
      %s118 = sphi 0, %s102
      %s122 = sphi 0, %s122
      %s124 = sphi 0, %s122
      %s125 = sphi 0, %s124
      %s139 = sphi 0, %s125
      %s145 = sphi 0, %s147
      %s148 = sphi 0, %s145
      %s149 = sphi 0, %s148
      %s165 = sphi 0, %s149
      %s171 = sphi 0, %s173
      %s174 = sphi 0, %s171
      %s175 = sphi 0, %s174
      %s191 = sphi 0, %s175
      %s197 = sphi 0, %s199
      %s200 = sphi 0, %s197
      %s201 = sphi 0, %s200
      %s217 = sphi 0, %s201
    $region4: #{gcn_forward.5} parent=1 // loop_header_branch
      %25 = sbr.rel (%p23) target = $region8
    $region5: #{gcn_forward.5} parent=1 // loop_body
      %s27 = ssub.s32 %s22, 1
      %s28 = ssub.s32 %s22, 2
      %s35 = sadd.s32 1, %s30
      %p36 = scmp.ge.s32.totalorder %s35, 1
      %s37 = scalar_select %p36, 0, %s35
      %s38 = sadd.s32 1, %s29
      %s39 = scalar_select %p36, %s38, %s29
      %p40 = scmp.ge.s32.totalorder %s39, 2
      %s41 = scalar_select %p40, 0, %s39
      %s42 = ssub.s32 %s29, %s41
      %s43 = ssub.s32 %s30, %s37
      %s44 = sor.u32 %s42, %s43
      %p45 = scmp.eq.s32.totalorder %s44, 0
      %s47 = sadd.s32 %s46, 1
      %s48 = scalar_select %p45, %s46, %s47
      %p51 = pneg %p45
      %p52 = scmp.eq.s32.totalorder %s22, 1
      %p53 = por %p51, %p52
      %p54 = scmp.ne.s32.totalorder %s46, %s49
      %p55 = scmp.eq.s32.totalorder %s22, 0
      %p56 = por %p54, %p55
      %p57 = scmp.ne.s32.totalorder %s46, %s49
      %p58 = scmp.eq.s32.totalorder %s27, 1
      %p59 = por %p57, %p58
      %p60 = scmp.ne.s32.totalorder %s49, %s50
      %p61 = scmp.eq.s32.totalorder %s27, 0
      %p62 = por %p60, %p61
      %p63 = scmp.ne.s32.totalorder %s49, %s50
      %p64 = scmp.eq.s32.totalorder %s28, 1
      %p65 = por %p63, %p64
      %p67 = scmp.ne.s32.totalorder %s50, %s66
      %p68 = scmp.eq.s32.totalorder %s28, 0
      %p69 = por %p67, %p68
      %s70 = ssub.s32 %s30, %s37
      %p71 = scmp.eq.s32.totalorder %s70, 0
      %s73 = sadd.s32 %s72, 1
      %s74 = scalar_select %p71, %s72, %s73
      %p77 = pneg %p71
      %p78 = scmp.eq.s32.totalorder %s22, 1
      %p79 = por %p77, %p78
      %p80 = scmp.ne.s32.totalorder %s72, %s75
      %p81 = scmp.eq.s32.totalorder %s22, 0
      %p82 = por %p80, %p81
      %p83 = scmp.ne.s32.totalorder %s72, %s75
      %p84 = scmp.eq.s32.totalorder %s27, 1
      %p85 = por %p83, %p84
      %p86 = scmp.ne.s32.totalorder %s75, %s76
      %p87 = scmp.eq.s32.totalorder %s27, 0
      %p88 = por %p86, %p87
      %p89 = scmp.ne.s32.totalorder %s75, %s76
      %p90 = scmp.eq.s32.totalorder %s28, 1
      %p91 = por %p89, %p90
      %p93 = scmp.ne.s32.totalorder %s76, %s92
      %p94 = scmp.eq.s32.totalorder %s28, 0
      %p95 = por %p93, %p94
      %s96 = ssub.s32 %s29, %s41
      %p97 = scmp.eq.s32.totalorder %s96, 0
      %s99 = sadd.s32 %s98, 1
      %s100 = scalar_select %p97, %s98, %s99
      %p103 = pneg %p97
      %p104 = scmp.eq.s32.totalorder %s22, 1
      %p105 = por %p103, %p104
      %p106 = scmp.ne.s32.totalorder %s98, %s101
      %p107 = scmp.eq.s32.totalorder %s22, 0
      %p108 = por %p106, %p107
      %p109 = scmp.ne.s32.totalorder %s98, %s101
      %p110 = scmp.eq.s32.totalorder %s27, 1
      %p111 = por %p109, %p110
      %p112 = scmp.ne.s32.totalorder %s101, %s102
      %p113 = scmp.eq.s32.totalorder %s27, 0
      %p114 = por %p112, %p113
      %p115 = scmp.ne.s32.totalorder %s101, %s102
      %p116 = scmp.eq.s32.totalorder %s28, 1
      %p117 = por %p115, %p116
      %p119 = scmp.ne.s32.totalorder %s102, %s118
      %p120 = scmp.eq.s32.totalorder %s28, 0
      %p121 = por %p119, %p120
      %s123 = sadd.s32 %s122, 1
      %p126 = scmp.eq.s32.totalorder %s22, 1
      %p127 = scmp.ne.s32.totalorder %s122, %s124
      %p128 = scmp.eq.s32.totalorder %s22, 0
      %p129 = por %p127, %p128
      %p130 = scmp.ne.s32.totalorder %s122, %s124
      %p131 = scmp.eq.s32.totalorder %s27, 1
      %p132 = por %p130, %p131
      %p133 = scmp.ne.s32.totalorder %s124, %s125
      %p134 = scmp.eq.s32.totalorder %s27, 0
      %p135 = por %p133, %p134
      %p136 = scmp.ne.s32.totalorder %s124, %s125
      %p137 = scmp.eq.s32.totalorder %s28, 1
      %p138 = por %p136, %p137
      %p140 = scmp.ne.s32.totalorder %s125, %s139
      %p141 = scmp.eq.s32.totalorder %s28, 0
      %p142 = por %p140, %p141
      %s143 = ssub.s32 %s29, %s41
      %p144 = scmp.eq.s32.totalorder %s143, 0
      %s146 = sadd.s32 %s145, 1
      %s147 = scalar_select %p144, %s145, %s146
      %p150 = pneg %p144
      %p151 = scmp.eq.s32.totalorder %s22, 1
      %p152 = por %p150, %p151
      %p153 = scmp.ne.s32.totalorder %s145, %s148
      %p154 = scmp.eq.s32.totalorder %s22, 0
      %p155 = por %p153, %p154
      %p156 = scmp.ne.s32.totalorder %s145, %s148
      %p157 = scmp.eq.s32.totalorder %s27, 1
      %p158 = por %p156, %p157
      %p159 = scmp.ne.s32.totalorder %s148, %s149
      %p160 = scmp.eq.s32.totalorder %s27, 0
      %p161 = por %p159, %p160
      %p162 = scmp.ne.s32.totalorder %s148, %s149
      %p163 = scmp.eq.s32.totalorder %s28, 1
      %p164 = por %p162, %p163
      %p166 = scmp.ne.s32.totalorder %s149, %s165
      %p167 = scmp.eq.s32.totalorder %s28, 0
      %p168 = por %p166, %p167
      %s169 = ssub.s32 %s29, %s41
      %p170 = scmp.eq.s32.totalorder %s169, 0
      %s172 = sadd.s32 %s171, 1
      %s173 = scalar_select %p170, %s171, %s172
      %p176 = pneg %p170
      %p177 = scmp.eq.s32.totalorder %s22, 1
      %p178 = por %p176, %p177
      %p179 = scmp.ne.s32.totalorder %s171, %s174
      %p180 = scmp.eq.s32.totalorder %s22, 0
      %p181 = por %p179, %p180
      %p182 = scmp.ne.s32.totalorder %s171, %s174
      %p183 = scmp.eq.s32.totalorder %s27, 1
      %p184 = por %p182, %p183
      %p185 = scmp.ne.s32.totalorder %s174, %s175
      %p186 = scmp.eq.s32.totalorder %s27, 0
      %p187 = por %p185, %p186
      %p188 = scmp.ne.s32.totalorder %s174, %s175
      %p189 = scmp.eq.s32.totalorder %s28, 1
      %p190 = por %p188, %p189
      %p192 = scmp.ne.s32.totalorder %s175, %s191
      %p193 = scmp.eq.s32.totalorder %s28, 0
      %p194 = por %p192, %p193
      %s195 = ssub.s32 %s29, %s41
      %p196 = scmp.eq.s32.totalorder %s195, 0
      %s198 = sadd.s32 %s197, 1
      %s199 = scalar_select %p196, %s197, %s198
      %p202 = pneg %p196
      %p203 = scmp.eq.s32.totalorder %s22, 1
      %p204 = por %p202, %p203
      %p205 = scmp.ne.s32.totalorder %s197, %s200
      %p206 = scmp.eq.s32.totalorder %s22, 0
      %p207 = por %p205, %p206
      %p208 = scmp.ne.s32.totalorder %s197, %s200
      %p209 = scmp.eq.s32.totalorder %s27, 1
      %p210 = por %p208, %p209
      %p211 = scmp.ne.s32.totalorder %s200, %s201
      %p212 = scmp.eq.s32.totalorder %s27, 0
      %p213 = por %p211, %p212
      %p214 = scmp.ne.s32.totalorder %s200, %s201
      %p215 = scmp.eq.s32.totalorder %s28, 1
      %p216 = por %p214, %p215
      %p218 = scmp.ne.s32.totalorder %s201, %s217
      %p219 = scmp.eq.s32.totalorder %s28, 0
      %p220 = por %p218, %p219
      %p221 = scmp.le.s32.totalorder 1, %s22
      %p222 = scmp.lt.s32.totalorder %s22, 3
      %p223 = pnand %p221, %p222
      %p224 = pneg %p223
      // Predicated region
      $region9: #{gcn_forward.5} parent=5 // pred_check
        _
      $region10: #{gcn_forward.5} parent=5 // pred_check_branch
        %226 = sbr.rel (%p223) target = $region12
      $region11: #{gcn_forward.5} parent=5 // pred_region
        %s227 = ssub.s32 %s22, 1
        // Predicated region
        $region13: #{gcn_forward.5} parent=11 // pred_check
          %p228 = pneg %p88
        $region14: #{gcn_forward.5} parent=11 // pred_check_branch
          %230 = sbr.rel (%p228) target = $region16
        $region15: #{gcn_forward.5} parent=11 // pred_region
          %s231 = smul.u32 32, %s32
          %s233 = ssub.s32 2048, 2048
          %234 = vsyncadd [#allocation7], %s233
          %s235 = smul.addr %s231, 64
          %s236 = scalar_lea.hbm %s1, %s235
          %s237 = sshll.u32 [#allocation6], 4
          %s238 = int_to_ptr.vmem [resolvable:$true] %s237
          %243 = dma.hbm_to_vmem [thread:$0]  %s236, 2048, %s238, [#allocation7], 64, 64, 4
        $region16: #{gcn_forward.5} parent=11 // pred_fallthru
          _
        // Predicated region
        $region17: #{gcn_forward.5} parent=11 // pred_check
          %p244 = pneg %p135
        $region18: #{gcn_forward.5} parent=11 // pred_check_branch
          %246 = sbr.rel (%p244) target = $region20
        $region19: #{gcn_forward.5} parent=11 // pred_region
          %s248 = ssub.s32 16, 16
          %249 = vsyncadd [#allocation7], %s248
          %s251 = sshll.u32 [#allocation9], 4
          %s252 = int_to_ptr.vmem [resolvable:$true] %s251
          %254 = dma.hbm_to_vmem [thread:$0]  %s3, 16, %s252, [#allocation7]
        $region20: #{gcn_forward.5} parent=11 // pred_fallthru
          _
      $region12: #{gcn_forward.5} parent=5 // pred_fallthru
        _
      %p255 = scmp.lt.s32.totalorder %s22, 2
      // Predicated region
      $region21: #{gcn_forward.5} parent=5 // pred_check
        %p256 = pneg %p255
      $region22: #{gcn_forward.5} parent=5 // pred_check_branch
        %258 = sbr.rel (%p256) target = $region24
      $region23: #{gcn_forward.5} parent=5 // pred_region
        // Predicated region
        $region25: #{gcn_forward.5} parent=23 // pred_check
          %p259 = pneg %p56
        $region26: #{gcn_forward.5} parent=23 // pred_check_branch
          %261 = sbr.rel (%p259) target = $region28
        $region27: #{gcn_forward.5} parent=23 // pred_region
          %s262 = sand.u32 %s22, 1
          %s263 = scalar_lea.sflag [#allocation4], %s262
          %s264 = sand.u32 %s46, 1
          %s265 = smul.addr %s264, 64
          %s266 = scalar_lea.vmem [#allocation3], %s265
          %s267 = smul.u32 4, %s29
          %s268 = smul.u32 2, %s30
          %s270 = ssub.s32 1024, 1024
          %271 = vsyncadd %s263, %s270
          %s272 = smul.addr %s267, 2
          %s273 = sadd.s32 %s268, %s272
          %s274 = smul.addr %s273, 128
          %s275 = scalar_lea.hbm %s0, %s274
          %s276 = sshll.u32 %s266, 4
          %s277 = int_to_ptr.vmem [resolvable:$true] %s276
          %282 = dma.hbm_to_vmem [thread:$0]  %s275, 1024, %s277, %s263, 256, 256, 16
        $region28: #{gcn_forward.5} parent=23 // pred_fallthru
          _
        // Predicated region
        $region29: #{gcn_forward.5} parent=23 // pred_check
          %p283 = pneg %p108
        $region30: #{gcn_forward.5} parent=23 // pred_check_branch
          %285 = sbr.rel (%p283) target = $region32
        $region31: #{gcn_forward.5} parent=23 // pred_region
          %s286 = sand.u32 %s22, 1
          %s287 = scalar_lea.sflag [#allocation4], %s286
          %s288 = sand.u32 %s98, 1
          %s289 = smul.addr %s288, 128
          %s290 = scalar_lea.vmem [#allocation8], %s289
          %s291 = smul.u32 16, %s29
          %s293 = ssub.s32 2048, 2048
          %294 = vsyncadd %s287, %s293
          %s295 = smul.addr %s291, 128
          %s296 = scalar_lea.hbm %s2, %s295
          %s297 = sshll.u32 %s290, 4
          %s298 = int_to_ptr.vmem [resolvable:$true] %s297
          %303 = dma.hbm_to_vmem [thread:$0]  %s296, 2048, %s298, %s287, 128, 128, 8
        $region32: #{gcn_forward.5} parent=23 // pred_fallthru
          _
        // Predicated region
        $region33: #{gcn_forward.5} parent=23 // pred_check
          %p304 = pneg %p155
        $region34: #{gcn_forward.5} parent=23 // pred_check_branch
          %306 = sbr.rel (%p304) target = $region36
        $region35: #{gcn_forward.5} parent=23 // pred_region
          %s307 = sand.u32 %s22, 1
          %s308 = scalar_lea.sflag [#allocation11], %s307
          %s309 = sand.u32 %s145, 1
          %s310 = smul.addr %s309, 64
          %s311 = scalar_lea.vmem [#allocation10], %s310
          %s312 = smul.u32 16, %s29
          %s314 = ssub.s32 1024, 1024
          %315 = vsyncadd %s308, %s314
          %s316 = smul.addr %s312, 64
          %s317 = scalar_lea.hbm %s4, %s316
          %s318 = sshll.u32 %s311, 4
          %s319 = int_to_ptr.vmem [resolvable:$true] %s318
          %324 = dma.hbm_to_vmem [thread:$0]  %s317, 1024, %s319, %s308, 64, 64, 4
        $region36: #{gcn_forward.5} parent=23 // pred_fallthru
          _
        // Predicated region
        $region37: #{gcn_forward.5} parent=23 // pred_check
          %p325 = pneg %p181
        $region38: #{gcn_forward.5} parent=23 // pred_check_branch
          %327 = sbr.rel (%p325) target = $region40
        $region39: #{gcn_forward.5} parent=23 // pred_region
          %s328 = sand.u32 %s22, 1
          %s329 = scalar_lea.sflag [#allocation11], %s328
          %s330 = sand.u32 %s171, 1
          %s331 = smul.addr %s330, 64
          %s332 = scalar_lea.vmem [#allocation12], %s331
          %s333 = smul.u32 16, %s29
          %s335 = ssub.s32 1024, 1024
          %336 = vsyncadd %s329, %s335
          %s337 = smul.addr %s333, 64
          %s338 = scalar_lea.hbm %s5, %s337
          %s339 = sshll.u32 %s332, 4
          %s340 = int_to_ptr.vmem [resolvable:$true] %s339
          %345 = dma.hbm_to_vmem [thread:$0]  %s338, 1024, %s340, %s329, 64, 64, 4
        $region40: #{gcn_forward.5} parent=23 // pred_fallthru
          _
      $region24: #{gcn_forward.5} parent=5 // pred_fallthru
        _
      %p346 = scmp.le.s32.totalorder 1, %s22
      %p347 = scmp.lt.s32.totalorder %s22, 3
      %p348 = pnand %p346, %p347
      %p349 = pneg %p348
      // Predicated region
      $region41: #{gcn_forward.5} parent=5 // pred_check
        _
      $region42: #{gcn_forward.5} parent=5 // pred_check_branch
        %351 = sbr.rel (%p348) target = $region44
      $region43: #{gcn_forward.5} parent=5 // pred_region
        %s352 = ssub.s32 %s22, 1
        %s353 = sand.u32 %s27, 1
        %s354 = scalar_lea.sflag [#allocation4], %s353
        %s355 = sand.u32 %s49, 1
        %s356 = smul.addr %s355, 64
        %s357 = scalar_lea.vmem [#allocation3], %s356
        // Predicated region
        $region45: #{gcn_forward.5} parent=43 // pred_check
          %p358 = pneg %p62
        $region46: #{gcn_forward.5} parent=43 // pred_check_branch
          %360 = sbr.rel (%p358) target = $region48
        $region47: #{gcn_forward.5} parent=43 // pred_region
          %361 = dma.done %s354, 1024
        $region48: #{gcn_forward.5} parent=43 // pred_fallthru
          _
        // Predicated region
        $region49: #{gcn_forward.5} parent=43 // pred_check
          %p362 = pneg %p88
        $region50: #{gcn_forward.5} parent=43 // pred_check_branch
          %364 = sbr.rel (%p362) target = $region52
        $region51: #{gcn_forward.5} parent=43 // pred_region
          %365 = dma.done [#allocation7], 2048
        $region52: #{gcn_forward.5} parent=43 // pred_fallthru
          _
        %s366 = sand.u32 %s27, 1
        %s367 = scalar_lea.sflag [#allocation4], %s366
        %s368 = sand.u32 %s101, 1
        %s369 = smul.addr %s368, 128
        %s370 = scalar_lea.vmem [#allocation8], %s369
        // Predicated region
        $region53: #{gcn_forward.5} parent=43 // pred_check
          %p371 = pneg %p114
        $region54: #{gcn_forward.5} parent=43 // pred_check_branch
          %373 = sbr.rel (%p371) target = $region56
        $region55: #{gcn_forward.5} parent=43 // pred_region
          %374 = dma.done %s367, 2048
        $region56: #{gcn_forward.5} parent=43 // pred_fallthru
          _
        // Predicated region
        $region57: #{gcn_forward.5} parent=43 // pred_check
          %p375 = pneg %p135
        $region58: #{gcn_forward.5} parent=43 // pred_check_branch
          %377 = sbr.rel (%p375) target = $region60
        $region59: #{gcn_forward.5} parent=43 // pred_region
          %378 = dma.done [#allocation7], 16
        $region60: #{gcn_forward.5} parent=43 // pred_fallthru
          _
        %s379 = sand.u32 %s27, 1
        %s380 = scalar_lea.sflag [#allocation11], %s379
        %s381 = sand.u32 %s148, 1
        %s382 = smul.addr %s381, 64
        %s383 = scalar_lea.vmem [#allocation10], %s382
        // Predicated region
        $region61: #{gcn_forward.5} parent=43 // pred_check
          %p384 = pneg %p161
        $region62: #{gcn_forward.5} parent=43 // pred_check_branch
          %386 = sbr.rel (%p384) target = $region64
        $region63: #{gcn_forward.5} parent=43 // pred_region
          %387 = dma.done %s380, 1024
        $region64: #{gcn_forward.5} parent=43 // pred_fallthru
          _
        %s388 = sand.u32 %s27, 1
        %s389 = scalar_lea.sflag [#allocation11], %s388
        %s390 = sand.u32 %s174, 1
        %s391 = smul.addr %s390, 64
        %s392 = scalar_lea.vmem [#allocation12], %s391
        // Predicated region
        $region65: #{gcn_forward.5} parent=43 // pred_check
          %p393 = pneg %p187
        $region66: #{gcn_forward.5} parent=43 // pred_check_branch
          %395 = sbr.rel (%p393) target = $region68
        $region67: #{gcn_forward.5} parent=43 // pred_region
          %396 = dma.done %s389, 1024
        $region68: #{gcn_forward.5} parent=43 // pred_fallthru
          _
        %s397 = sand.u32 %s27, 1
        %s398 = scalar_lea.sflag [#allocation4], %s397
        %s399 = sand.u32 %s49, 1
        %s400 = smul.addr %s399, 64
        %s401 = scalar_lea.vmem [#allocation3], %s400
        %p402 = pneg %p62
        %p403 = pneg %p59
        %p404 = pneg %p88
        %p405 = pneg %p85
        %s406 = sand.u32 %s27, 1
        %s407 = scalar_lea.sflag [#allocation4], %s406
        %s408 = sand.u32 %s101, 1
        %s409 = smul.addr %s408, 128
        %s410 = scalar_lea.vmem [#allocation8], %s409
        %p411 = pneg %p114
        %p412 = pneg %p111
        %p413 = pneg %p135
        %p414 = pneg %p132
        %s415 = sand.u32 %s27, 1
        %s416 = scalar_lea.sflag [#allocation11], %s415
        %s417 = sand.u32 %s148, 1
        %s418 = smul.addr %s417, 64
        %s419 = scalar_lea.vmem [#allocation10], %s418
        %p420 = pneg %p161
        %p421 = pneg %p158
        %s422 = sand.u32 %s27, 1
        %s423 = scalar_lea.sflag [#allocation11], %s422
        %s424 = sand.u32 %s174, 1
        %s425 = smul.addr %s424, 64
        %s426 = scalar_lea.vmem [#allocation12], %s425
        %p427 = pneg %p187
        %p428 = pneg %p184
        %p429 = pneg %p213
        %p430 = pneg %p210
        %s431 = sand.u32 %s200, 1
        %s432 = scalar_lea.sflag [#allocation5], %s431
        %s433 = sand.u32 %s200, 1
        %s434 = smul.addr %s433, 128
        %s435 = scalar_lea.vmem [#allocation13], %s434
        %s436 = smul.u32 4, %s31
        %s437 = smul.u32 2, %s32
        %s438 = smul.u32 32, %s32
        %s439 = smul.u32 16, %s31
        %s440 = smul.u32 16, %s31
        %s441 = smul.u32 16, %s31
        %s442 = smul.u32 16, %s31
        %p444 = scmp.eq.s32.totalorder %s32, 0
        // Predicated region
        $region69: #{gcn_forward.5} parent=43 // pred_check
          %p445 = pneg %p444
        $region70: #{gcn_forward.5} parent=43 // pred_check_branch
          %447 = sbr.rel (%p445) target = $region72
        $region71: #{gcn_forward.5} parent=43 // pred_region
          %448 = vst [vmem:[#allocation2] sm:$0xff] 0.0
          %449 = vst [vmem:[#allocation2 + $0x8] sm:$0xff] 0.0
          %450 = vst [vmem:[#allocation2 + $0x10] sm:$0xff] 0.0
          %451 = vst [vmem:[#allocation2 + $0x18] sm:$0xff] 0.0
          %452 = vst [vmem:[#allocation2 + $0x20] sm:$0xff] 0.0
          %453 = vst [vmem:[#allocation2 + $0x28] sm:$0xff] 0.0
          %454 = vst [vmem:[#allocation2 + $0x30] sm:$0xff] 0.0
          %455 = vst [vmem:[#allocation2 + $0x38] sm:$0xff] 0.0
          %456 = vst [vmem:[#allocation2 + $0x40] sm:$0xff] 0.0
          %457 = vst [vmem:[#allocation2 + $0x48] sm:$0xff] 0.0
          %458 = vst [vmem:[#allocation2 + $0x50] sm:$0xff] 0.0
          %459 = vst [vmem:[#allocation2 + $0x58] sm:$0xff] 0.0
          %460 = vst [vmem:[#allocation2 + $0x60] sm:$0xff] 0.0
          %461 = vst [vmem:[#allocation2 + $0x68] sm:$0xff] 0.0
          %462 = vst [vmem:[#allocation2 + $0x70] sm:$0xff] 0.0
          %463 = vst [vmem:[#allocation2 + $0x78] sm:$0xff] 0.0
        $region72: #{gcn_forward.5} parent=43 // pred_fallthru
          _
        %v464 = vld [vmem:[%s357] sm:$0xff]
        %v465 = vld [vmem:[%s357 + $0x8] sm:$0xff]
        %v466 = vld [vmem:[%s357 + $0x10] sm:$0xff]
        %v467 = vld [vmem:[%s357 + $0x18] sm:$0xff]
        %v468 = vld [vmem:[%s357 + $0x20] sm:$0xff]
        %v469 = vld [vmem:[%s357 + $0x28] sm:$0xff]
        %v470 = vld [vmem:[%s357 + $0x30] sm:$0xff]
        %v471 = vld [vmem:[%s357 + $0x38] sm:$0xff]
        %v472 = vunpack.c.l.s8.bf16 %v464
        %v473 = vunpack.c.l.s8.bf16 %v465
        %v474 = vunpack.c.h.s8.bf16 %v464
        %v475 = vunpack.c.h.s8.bf16 %v465
        %v476 = vunpack.c.l.s8.bf16 %v466
        %v477 = vunpack.c.l.s8.bf16 %v467
        %v478 = vunpack.c.h.s8.bf16 %v466
        %v479 = vunpack.c.h.s8.bf16 %v467
        %v480 = vunpack.c.l.s8.bf16 %v468
        %v481 = vunpack.c.l.s8.bf16 %v469
        %v482 = vunpack.c.h.s8.bf16 %v468
        %v483 = vunpack.c.h.s8.bf16 %v469
        %v484 = vunpack.c.l.s8.bf16 %v470
        %v485 = vunpack.c.l.s8.bf16 %v471
        %v486 = vunpack.c.h.s8.bf16 %v470
        %v487 = vunpack.c.h.s8.bf16 %v471
        %v488 = vld [vmem:[#allocation2] sm:$0xff]
        %v489 = vld [vmem:[#allocation2 + $0x8] sm:$0xff]
        %v490 = vld [vmem:[#allocation2 + $0x10] sm:$0xff]
        %v491 = vld [vmem:[#allocation2 + $0x18] sm:$0xff]
        %v492 = vld [vmem:[#allocation2 + $0x20] sm:$0xff]
        %v493 = vld [vmem:[#allocation2 + $0x28] sm:$0xff]
        %v494 = vld [vmem:[#allocation2 + $0x30] sm:$0xff]
        %v495 = vld [vmem:[#allocation2 + $0x38] sm:$0xff]
        %v496 = vld [vmem:[#allocation2 + $0x40] sm:$0xff]
        %v497 = vld [vmem:[#allocation2 + $0x48] sm:$0xff]
        %v498 = vld [vmem:[#allocation2 + $0x50] sm:$0xff]
        %v499 = vld [vmem:[#allocation2 + $0x58] sm:$0xff]
        %v500 = vld [vmem:[#allocation2 + $0x60] sm:$0xff]
        %v501 = vld [vmem:[#allocation2 + $0x68] sm:$0xff]
        %v502 = vld [vmem:[#allocation2 + $0x70] sm:$0xff]
        %v503 = vld [vmem:[#allocation2 + $0x78] sm:$0xff]
        %v504 = vld [vmem:[#allocation6] sm:$0xf]
        %v505 = vld [vmem:[#allocation6 + $0x4] sm:$0xf]
        %v506 = vld [vmem:[#allocation6 + $0x8] sm:$0xf]
        %v507 = vld [vmem:[#allocation6 + $0xc] sm:$0xf]
        %v508 = vld [vmem:[#allocation6 + $0x10] sm:$0xf]
        %v509 = vld [vmem:[#allocation6 + $0x14] sm:$0xf]
        %v510 = vld [vmem:[#allocation6 + $0x18] sm:$0xf]
        %v511 = vld [vmem:[#allocation6 + $0x1c] sm:$0xf]
        %v512 = vld [vmem:[#allocation6 + $0x20] sm:$0xf]
        %v513 = vld [vmem:[#allocation6 + $0x24] sm:$0xf]
        %v514 = vld [vmem:[#allocation6 + $0x28] sm:$0xf]
        %v515 = vld [vmem:[#allocation6 + $0x2c] sm:$0xf]
        %v516 = vld [vmem:[#allocation6 + $0x30] sm:$0xf]
        %v517 = vld [vmem:[#allocation6 + $0x34] sm:$0xf]
        %v518 = vld [vmem:[#allocation6 + $0x38] sm:$0xf]
        %v519 = vld [vmem:[#allocation6 + $0x3c] sm:$0xf]
        %v520 = vld [vmem:[#allocation6 + $0x40] sm:$0xf]
        %v521 = vld [vmem:[#allocation6 + $0x44] sm:$0xf]
        %v522 = vld [vmem:[#allocation6 + $0x48] sm:$0xf]
        %v523 = vld [vmem:[#allocation6 + $0x4c] sm:$0xf]
        %v524 = vld [vmem:[#allocation6 + $0x50] sm:$0xf]
        %v525 = vld [vmem:[#allocation6 + $0x54] sm:$0xf]
        %v526 = vld [vmem:[#allocation6 + $0x58] sm:$0xf]
        %v527 = vld [vmem:[#allocation6 + $0x5c] sm:$0xf]
        %v528 = vld [vmem:[#allocation6 + $0x60] sm:$0xf]
        %v529 = vld [vmem:[#allocation6 + $0x64] sm:$0xf]
        %v530 = vld [vmem:[#allocation6 + $0x68] sm:$0xf]
        %v531 = vld [vmem:[#allocation6 + $0x6c] sm:$0xf]
        %v532 = vld [vmem:[#allocation6 + $0x70] sm:$0xf]
        %v533 = vld [vmem:[#allocation6 + $0x74] sm:$0xf]
        %v534 = vld [vmem:[#allocation6 + $0x78] sm:$0xf]
        %v535 = vld [vmem:[#allocation6 + $0x7c] sm:$0xf]
        %v568 = vunpack.c.l.b16 %v504
        %v569 = vunpack.c.l.b16 %v505
        %v570 = vunpack.c.l.b16 %v506
        %v571 = vunpack.c.l.b16 %v507
        %v572 = vunpack.c.l.b16 %v508
        %v573 = vunpack.c.l.b16 %v509
        %v574 = vunpack.c.l.b16 %v510
        %v575 = vunpack.c.l.b16 %v511
        %v576 = vunpack.c.l.b16 %v512
        %v577 = vunpack.c.l.b16 %v513
        %v578 = vunpack.c.l.b16 %v514
        %v579 = vunpack.c.l.b16 %v515
        %v580 = vunpack.c.l.b16 %v516
        %v581 = vunpack.c.l.b16 %v517
        %v582 = vunpack.c.l.b16 %v518
        %v583 = vunpack.c.l.b16 %v519
        %v584 = vunpack.c.l.b16 %v520
        %v585 = vunpack.c.l.b16 %v521
        %v586 = vunpack.c.l.b16 %v522
        %v587 = vunpack.c.l.b16 %v523
        %v588 = vunpack.c.l.b16 %v524
        %v589 = vunpack.c.l.b16 %v525
        %v590 = vunpack.c.l.b16 %v526
        %v591 = vunpack.c.l.b16 %v527
        %v592 = vunpack.c.l.b16 %v528
        %v593 = vunpack.c.l.b16 %v529
        %v594 = vunpack.c.l.b16 %v530
        %v595 = vunpack.c.l.b16 %v531
        %v596 = vunpack.c.l.b16 %v532
        %v597 = vunpack.c.l.b16 %v533
        %v598 = vunpack.c.l.b16 %v534
        %v599 = vunpack.c.l.b16 %v535
        %v600 = vpack.c.b16 %v569, %v568
        %v601 = vpack.c.b16 %v571, %v570
        %v602 = vpack.c.b16 %v573, %v572
        %v603 = vpack.c.b16 %v575, %v574
        %v604 = vpack.c.b16 %v577, %v576
        %v605 = vpack.c.b16 %v579, %v578
        %v606 = vpack.c.b16 %v581, %v580
        %v607 = vpack.c.b16 %v583, %v582
        %v608 = vpack.c.b16 %v585, %v584
        %v609 = vpack.c.b16 %v587, %v586
        %v610 = vpack.c.b16 %v589, %v588
        %v611 = vpack.c.b16 %v591, %v590
        %v612 = vpack.c.b16 %v593, %v592
        %v613 = vpack.c.b16 %v595, %v594
        %v614 = vpack.c.b16 %v597, %v596
        %v615 = vpack.c.b16 %v599, %v598
        %632 = vmatprep.subr.bf16.mxu0 0
        %633 = vmatpush1.bf16.msra.mxu0 %v600
        %634 = vmatprep.subr.bf16.mxu0 0
        %635 = vmatpush1.bf16.msra.mxu0 %v601
        %636 = vmatprep.subr.bf16.mxu0 0
        %637 = vmatpush1.bf16.msra.mxu0 %v602
        %638 = vmatprep.subr.bf16.mxu0 0
        %639 = vmatpush1.bf16.msra.mxu0 %v603
        %640 = vmatprep.subr.bf16.mxu0 0
        %641 = vmatpush1.bf16.msra.mxu0 %v604
        %642 = vmatprep.subr.bf16.mxu0 0
        %643 = vmatpush1.bf16.msra.mxu0 %v605
        %644 = vmatprep.subr.bf16.mxu0 0
        %645 = vmatpush1.bf16.msra.mxu0 %v606
        %646 = vmatprep.subr.bf16.mxu0 0
        %647 = vmatpush1.bf16.msra.mxu0 %v607
        %648 = vmatprep.subr.bf16.mxu0 0
        %649 = vmatpush1.bf16.msra.mxu0 %v608
        %650 = vmatprep.subr.bf16.mxu0 0
        %651 = vmatpush1.bf16.msra.mxu0 %v609
        %652 = vmatprep.subr.bf16.mxu0 0
        %653 = vmatpush1.bf16.msra.mxu0 %v610
        %654 = vmatprep.subr.bf16.mxu0 0
        %655 = vmatpush1.bf16.msra.mxu0 %v611
        %656 = vmatprep.subr.bf16.mxu0 0
        %657 = vmatpush1.bf16.msra.mxu0 %v612
        %658 = vmatprep.subr.bf16.mxu0 0
        %659 = vmatpush1.bf16.msra.mxu0 %v613
        %660 = vmatprep.subr.bf16.mxu0 0
        %661 = vmatpush1.bf16.msra.mxu0 %v614
        %662 = vmatprep.subr.bf16.mxu0 0
        %663 = vmatpush1.bf16.msra.mxu0 %v615
        %664 = vmatprep.mubr.bf16.mxu0 %v473
        %665 = vmatmul.mubr.bf16.gmra.mrb[0].mxu0 %v472
        %v666 = vpop.f32.mrb[0].mxu0
        %v667 = vadd.f32 0.0, %v666
        %v668 = vpop.f32.mrb[0].mxu0
        %v669 = vpop.f32.mrb[0].mxu0
        %v670 = vadd.f32 0.0, %v669
        %v671 = vpop.f32.mrb[0].mxu0
        %672 = vmatprep.mubr.bf16.mxu0 %v475
        %673 = vmatmul.mubr.bf16.gmra.mrb[0].mxu0 %v474
        %v674 = vpop.f32.mrb[0].mxu0
        %v675 = vadd.f32 0.0, %v674
        %v676 = vpop.f32.mrb[0].mxu0
        %v677 = vpop.f32.mrb[0].mxu0
        %v678 = vadd.f32 0.0, %v677
        %v679 = vpop.f32.mrb[0].mxu0
        %680 = vmatprep.mubr.bf16.mxu0 %v477
        %681 = vmatmul.mubr.bf16.gmra.mrb[0].mxu0 %v476
        %v682 = vpop.f32.mrb[0].mxu0
        %v683 = vadd.f32 0.0, %v682
        %v684 = vpop.f32.mrb[0].mxu0
        %v685 = vpop.f32.mrb[0].mxu0
        %v686 = vadd.f32 0.0, %v685
        %v687 = vpop.f32.mrb[0].mxu0
        %688 = vmatprep.mubr.bf16.mxu0 %v479
        %689 = vmatmul.mubr.bf16.gmra.mrb[0].mxu0 %v478
        %v690 = vpop.f32.mrb[0].mxu0
        %v691 = vadd.f32 0.0, %v690
        %v692 = vpop.f32.mrb[0].mxu0
        %v693 = vpop.f32.mrb[0].mxu0
        %v694 = vadd.f32 0.0, %v693
        %v695 = vpop.f32.mrb[0].mxu0
        %696 = vmatprep.mubr.bf16.mxu0 %v481
        %697 = vmatmul.mubr.bf16.gmra.mrb[0].mxu0 %v480
        %v698 = vpop.f32.mrb[0].mxu0
        %v699 = vadd.f32 0.0, %v698
        %v700 = vpop.f32.mrb[0].mxu0
        %v701 = vpop.f32.mrb[0].mxu0
        %v702 = vadd.f32 0.0, %v701
        %v703 = vpop.f32.mrb[0].mxu0
        %704 = vmatprep.mubr.bf16.mxu0 %v483
        %705 = vmatmul.mubr.bf16.gmra.mrb[0].mxu0 %v482
        %v706 = vpop.f32.mrb[0].mxu0
        %v707 = vadd.f32 0.0, %v706
        %v708 = vpop.f32.mrb[0].mxu0
        %v709 = vpop.f32.mrb[0].mxu0
        %v710 = vadd.f32 0.0, %v709
        %v711 = vpop.f32.mrb[0].mxu0
        %712 = vmatprep.mubr.bf16.mxu0 %v485
        %713 = vmatmul.mubr.bf16.gmra.mrb[0].mxu0 %v484
        %v714 = vpop.f32.mrb[0].mxu0
        %v715 = vadd.f32 0.0, %v714
        %v716 = vpop.f32.mrb[0].mxu0
        %v717 = vpop.f32.mrb[0].mxu0
        %v718 = vadd.f32 0.0, %v717
        %v719 = vpop.f32.mrb[0].mxu0
        %720 = vmatprep.mubr.bf16.mxu0 %v487
        %721 = vmatmul.mubr.bf16.gmra.mrb[0].mxu0 %v486
        %v722 = vpop.f32.mrb[0].mxu0
        %v723 = vadd.f32 0.0, %v722
        %v724 = vpop.f32.mrb[0].mxu0
        %v725 = vpop.f32.mrb[0].mxu0
        %v726 = vadd.f32 0.0, %v725
        %v727 = vpop.f32.mrb[0].mxu0
        %728 = vdwg.mxu0
        %v729 = vadd.f32 %v488, %v667
        %v730 = vadd.f32 %v489, %v670
        %v731 = vadd.f32 %v490, %v675
        %v732 = vadd.f32 %v491, %v678
        %v733 = vadd.f32 %v492, %v683
        %v734 = vadd.f32 %v493, %v686
        %v735 = vadd.f32 %v494, %v691
        %v736 = vadd.f32 %v495, %v694
        %v737 = vadd.f32 %v496, %v699
        %v738 = vadd.f32 %v497, %v702
        %v739 = vadd.f32 %v498, %v707
        %v740 = vadd.f32 %v499, %v710
        %v741 = vadd.f32 %v500, %v715
        %v742 = vadd.f32 %v501, %v718
        %v743 = vadd.f32 %v502, %v723
        %v744 = vadd.f32 %v503, %v726
        %745 = vst [vmem:[#allocation2] sm:$0xff] %v729
        %746 = vst [vmem:[#allocation2 + $0x8] sm:$0xff] %v730
        %747 = vst [vmem:[#allocation2 + $0x10] sm:$0xff] %v731
        %748 = vst [vmem:[#allocation2 + $0x18] sm:$0xff] %v732
        %749 = vst [vmem:[#allocation2 + $0x20] sm:$0xff] %v733
        %750 = vst [vmem:[#allocation2 + $0x28] sm:$0xff] %v734
        %751 = vst [vmem:[#allocation2 + $0x30] sm:$0xff] %v735
        %752 = vst [vmem:[#allocation2 + $0x38] sm:$0xff] %v736
        %753 = vst [vmem:[#allocation2 + $0x40] sm:$0xff] %v737
        %754 = vst [vmem:[#allocation2 + $0x48] sm:$0xff] %v738
        %755 = vst [vmem:[#allocation2 + $0x50] sm:$0xff] %v739
        %756 = vst [vmem:[#allocation2 + $0x58] sm:$0xff] %v740
        %757 = vst [vmem:[#allocation2 + $0x60] sm:$0xff] %v741
        %758 = vst [vmem:[#allocation2 + $0x68] sm:$0xff] %v742
        %759 = vst [vmem:[#allocation2 + $0x70] sm:$0xff] %v743
        %760 = vst [vmem:[#allocation2 + $0x78] sm:$0xff] %v744
        // Predicated region
        $region73: #{gcn_forward.5} parent=43 // pred_check
          %p761 = pneg %p444
        $region74: #{gcn_forward.5} parent=43 // pred_check_branch
          %763 = sbr.rel (%p761) target = $region76
        $region75: #{gcn_forward.5} parent=43 // pred_region
          %v764 = vld [vmem:[%s370] sm:$0xff]
          %v765 = vld [vmem:[%s370 + $0x8] sm:$0xff]
          %v766 = vld [vmem:[%s370 + $0x10] sm:$0xff]
          %v767 = vld [vmem:[%s370 + $0x18] sm:$0xff]
          %v768 = vld [vmem:[%s370 + $0x20] sm:$0xff]
          %v769 = vld [vmem:[%s370 + $0x28] sm:$0xff]
          %v770 = vld [vmem:[%s370 + $0x30] sm:$0xff]
          %v771 = vld [vmem:[%s370 + $0x38] sm:$0xff]
          %v772 = vld [vmem:[%s370 + $0x40] sm:$0xff]
          %v773 = vld [vmem:[%s370 + $0x48] sm:$0xff]
          %v774 = vld [vmem:[%s370 + $0x50] sm:$0xff]
          %v775 = vld [vmem:[%s370 + $0x58] sm:$0xff]
          %v776 = vld [vmem:[%s370 + $0x60] sm:$0xff]
          %v777 = vld [vmem:[%s370 + $0x68] sm:$0xff]
          %v778 = vld [vmem:[%s370 + $0x70] sm:$0xff]
          %v779 = vld [vmem:[%s370 + $0x78] sm:$0xff]
          %v780 = vld [vmem:[#allocation2] sm:$0xff]
          %v781 = vld [vmem:[#allocation2 + $0x8] sm:$0xff]
          %v782 = vld [vmem:[#allocation2 + $0x10] sm:$0xff]
          %v783 = vld [vmem:[#allocation2 + $0x18] sm:$0xff]
          %v784 = vld [vmem:[#allocation2 + $0x20] sm:$0xff]
          %v785 = vld [vmem:[#allocation2 + $0x28] sm:$0xff]
          %v786 = vld [vmem:[#allocation2 + $0x30] sm:$0xff]
          %v787 = vld [vmem:[#allocation2 + $0x38] sm:$0xff]
          %v788 = vld [vmem:[#allocation2 + $0x40] sm:$0xff]
          %v789 = vld [vmem:[#allocation2 + $0x48] sm:$0xff]
          %v790 = vld [vmem:[#allocation2 + $0x50] sm:$0xff]
          %v791 = vld [vmem:[#allocation2 + $0x58] sm:$0xff]
          %v792 = vld [vmem:[#allocation2 + $0x60] sm:$0xff]
          %v793 = vld [vmem:[#allocation2 + $0x68] sm:$0xff]
          %v794 = vld [vmem:[#allocation2 + $0x70] sm:$0xff]
          %v795 = vld [vmem:[#allocation2 + $0x78] sm:$0xff]
          %797 = vset.pattern.permute.xlu0 0
          %798 = vperm.xlu0 %797, %v764
          %v799 = vpop.permute.xlu0 %798
          %802 = vset.pattern.permute.xlu0 0
          %803 = vperm.xlu0 %802, %v765
          %v804 = vpop.permute.xlu0 %803
          %807 = vset.pattern.permute.xlu0 0
          %808 = vperm.xlu0 %807, %v766
          %v809 = vpop.permute.xlu0 %808
          %812 = vset.pattern.permute.xlu0 0
          %813 = vperm.xlu0 %812, %v767
          %v814 = vpop.permute.xlu0 %813
          %817 = vset.pattern.permute.xlu0 0
          %818 = vperm.xlu0 %817, %v768
          %v819 = vpop.permute.xlu0 %818
          %822 = vset.pattern.permute.xlu0 0
          %823 = vperm.xlu0 %822, %v769
          %v824 = vpop.permute.xlu0 %823
          %827 = vset.pattern.permute.xlu0 0
          %828 = vperm.xlu0 %827, %v770
          %v829 = vpop.permute.xlu0 %828
          %832 = vset.pattern.permute.xlu0 0
          %833 = vperm.xlu0 %832, %v771
          %v834 = vpop.permute.xlu0 %833
          %837 = vset.pattern.permute.xlu0 0
          %838 = vperm.xlu0 %837, %v772
          %v839 = vpop.permute.xlu0 %838
          %842 = vset.pattern.permute.xlu0 0
          %843 = vperm.xlu0 %842, %v773
          %v844 = vpop.permute.xlu0 %843
          %847 = vset.pattern.permute.xlu0 0
          %848 = vperm.xlu0 %847, %v774
          %v849 = vpop.permute.xlu0 %848
          %852 = vset.pattern.permute.xlu0 0
          %853 = vperm.xlu0 %852, %v775
          %v854 = vpop.permute.xlu0 %853
          %857 = vset.pattern.permute.xlu0 0
          %858 = vperm.xlu0 %857, %v776
          %v859 = vpop.permute.xlu0 %858
          %862 = vset.pattern.permute.xlu0 0
          %863 = vperm.xlu0 %862, %v777
          %v864 = vpop.permute.xlu0 %863
          %867 = vset.pattern.permute.xlu0 0
          %868 = vperm.xlu0 %867, %v778
          %v869 = vpop.permute.xlu0 %868
          %872 = vset.pattern.permute.xlu0 0
          %873 = vperm.xlu0 %872, %v779
          %v874 = vpop.permute.xlu0 %873
          %v876 = vmul.f32 %v799, %v780
          %v877 = vmul.f32 %v804, %v781
          %v878 = vmul.f32 %v809, %v782
          %v879 = vmul.f32 %v814, %v783
          %v880 = vmul.f32 %v819, %v784
          %v881 = vmul.f32 %v824, %v785
          %v882 = vmul.f32 %v829, %v786
          %v883 = vmul.f32 %v834, %v787
          %v884 = vmul.f32 %v839, %v788
          %v885 = vmul.f32 %v844, %v789
          %v886 = vmul.f32 %v849, %v790
          %v887 = vmul.f32 %v854, %v791
          %v888 = vmul.f32 %v859, %v792
          %v889 = vmul.f32 %v864, %v793
          %v890 = vmul.f32 %v869, %v794
          %v891 = vmul.f32 %v874, %v795
          %v892 = vld [vmem:[#allocation9] sm:$0x1]
          %v894 = vlaneseq
          %v895 = vshrl.u32 %v894, 7
          %v896 = vsub.s32 0, %v895
          %v897 = vrot.slane %v892, %v896
          %v899 = vadd.f32 %v876, %v897
          %v900 = vadd.f32 %v877, %v897
          %v901 = vadd.f32 %v878, %v897
          %v902 = vadd.f32 %v879, %v897
          %v903 = vadd.f32 %v880, %v897
          %v904 = vadd.f32 %v881, %v897
          %v905 = vadd.f32 %v882, %v897
          %v906 = vadd.f32 %v883, %v897
          %v907 = vadd.f32 %v884, %v897
          %v908 = vadd.f32 %v885, %v897
          %v909 = vadd.f32 %v886, %v897
          %v910 = vadd.f32 %v887, %v897
          %v911 = vadd.f32 %v888, %v897
          %v912 = vadd.f32 %v889, %v897
          %v913 = vadd.f32 %v890, %v897
          %v914 = vadd.f32 %v891, %v897
          %v915 = vld [vmem:[%s383] sm:$0xf]
          %v916 = vld [vmem:[%s383 + $0x4] sm:$0xf]
          %v917 = vld [vmem:[%s383 + $0x8] sm:$0xf]
          %v918 = vld [vmem:[%s383 + $0xc] sm:$0xf]
          %v919 = vld [vmem:[%s383 + $0x10] sm:$0xf]
          %v920 = vld [vmem:[%s383 + $0x14] sm:$0xf]
          %v921 = vld [vmem:[%s383 + $0x18] sm:$0xf]
          %v922 = vld [vmem:[%s383 + $0x1c] sm:$0xf]
          %v923 = vld [vmem:[%s383 + $0x20] sm:$0xf]
          %v924 = vld [vmem:[%s383 + $0x24] sm:$0xf]
          %v925 = vld [vmem:[%s383 + $0x28] sm:$0xf]
          %v926 = vld [vmem:[%s383 + $0x2c] sm:$0xf]
          %v927 = vld [vmem:[%s383 + $0x30] sm:$0xf]
          %v928 = vld [vmem:[%s383 + $0x34] sm:$0xf]
          %v929 = vld [vmem:[%s383 + $0x38] sm:$0xf]
          %v930 = vld [vmem:[%s383 + $0x3c] sm:$0xf]
          %v931 = vunpack.c.l.bf16 %v915
          %v932 = vunpack.c.l.bf16 %v916
          %v933 = vunpack.c.l.bf16 %v917
          %v934 = vunpack.c.l.bf16 %v918
          %v935 = vunpack.c.l.bf16 %v919
          %v936 = vunpack.c.l.bf16 %v920
          %v937 = vunpack.c.l.bf16 %v921
          %v938 = vunpack.c.l.bf16 %v922
          %v939 = vunpack.c.l.bf16 %v923
          %v940 = vunpack.c.l.bf16 %v924
          %v941 = vunpack.c.l.bf16 %v925
          %v942 = vunpack.c.l.bf16 %v926
          %v943 = vunpack.c.l.bf16 %v927
          %v944 = vunpack.c.l.bf16 %v928
          %v945 = vunpack.c.l.bf16 %v929
          %v946 = vunpack.c.l.bf16 %v930
          %v947 = vadd.f32 %v899, %v931
          %v948 = vadd.f32 %v900, %v932
          %v949 = vadd.f32 %v901, %v933
          %v950 = vadd.f32 %v902, %v934
          %v951 = vadd.f32 %v903, %v935
          %v952 = vadd.f32 %v904, %v936
          %v953 = vadd.f32 %v905, %v937
          %v954 = vadd.f32 %v906, %v938
          %v955 = vadd.f32 %v907, %v939
          %v956 = vadd.f32 %v908, %v940
          %v957 = vadd.f32 %v909, %v941
          %v958 = vadd.f32 %v910, %v942
          %v959 = vadd.f32 %v911, %v943
          %v960 = vadd.f32 %v912, %v944
          %v961 = vadd.f32 %v913, %v945
          %v962 = vadd.f32 %v914, %v946
          %v963 = vld [vmem:[%s392] sm:$0xf]
          %v964 = vld [vmem:[%s392 + $0x4] sm:$0xf]
          %v965 = vld [vmem:[%s392 + $0x8] sm:$0xf]
          %v966 = vld [vmem:[%s392 + $0xc] sm:$0xf]
          %v967 = vld [vmem:[%s392 + $0x10] sm:$0xf]
          %v968 = vld [vmem:[%s392 + $0x14] sm:$0xf]
          %v969 = vld [vmem:[%s392 + $0x18] sm:$0xf]
          %v970 = vld [vmem:[%s392 + $0x1c] sm:$0xf]
          %v971 = vld [vmem:[%s392 + $0x20] sm:$0xf]
          %v972 = vld [vmem:[%s392 + $0x24] sm:$0xf]
          %v973 = vld [vmem:[%s392 + $0x28] sm:$0xf]
          %v974 = vld [vmem:[%s392 + $0x2c] sm:$0xf]
          %v975 = vld [vmem:[%s392 + $0x30] sm:$0xf]
          %v976 = vld [vmem:[%s392 + $0x34] sm:$0xf]
          %v977 = vld [vmem:[%s392 + $0x38] sm:$0xf]
          %v978 = vld [vmem:[%s392 + $0x3c] sm:$0xf]
          %v979 = vunpack.c.l.bf16 %v963
          %v980 = vunpack.c.l.bf16 %v964
          %v981 = vunpack.c.l.bf16 %v965
          %v982 = vunpack.c.l.bf16 %v966
          %v983 = vunpack.c.l.bf16 %v967
          %v984 = vunpack.c.l.bf16 %v968
          %v985 = vunpack.c.l.bf16 %v969
          %v986 = vunpack.c.l.bf16 %v970
          %v987 = vunpack.c.l.bf16 %v971
          %v988 = vunpack.c.l.bf16 %v972
          %v989 = vunpack.c.l.bf16 %v973
          %v990 = vunpack.c.l.bf16 %v974
          %v991 = vunpack.c.l.bf16 %v975
          %v992 = vunpack.c.l.bf16 %v976
          %v993 = vunpack.c.l.bf16 %v977
          %v994 = vunpack.c.l.bf16 %v978
          %v995 = vadd.f32 %v947, %v979
          %v996 = vadd.f32 %v948, %v980
          %v997 = vadd.f32 %v949, %v981
          %v998 = vadd.f32 %v950, %v982
          %v999 = vadd.f32 %v951, %v983
          %v1000 = vadd.f32 %v952, %v984
          %v1001 = vadd.f32 %v953, %v985
          %v1002 = vadd.f32 %v954, %v986
          %v1003 = vadd.f32 %v955, %v987
          %v1004 = vadd.f32 %v956, %v988
          %v1005 = vadd.f32 %v957, %v989
          %v1006 = vadd.f32 %v958, %v990
          %v1007 = vadd.f32 %v959, %v991
          %v1008 = vadd.f32 %v960, %v992
          %v1009 = vadd.f32 %v961, %v993
          %v1010 = vadd.f32 %v962, %v994
          %1011 = vst [vmem:[%s435] sm:$0xff] %v995
          %1012 = vst [vmem:[%s435 + $0x8] sm:$0xff] %v996
          %1013 = vst [vmem:[%s435 + $0x10] sm:$0xff] %v997
          %1014 = vst [vmem:[%s435 + $0x18] sm:$0xff] %v998
          %1015 = vst [vmem:[%s435 + $0x20] sm:$0xff] %v999
          %1016 = vst [vmem:[%s435 + $0x28] sm:$0xff] %v1000
          %1017 = vst [vmem:[%s435 + $0x30] sm:$0xff] %v1001
          %1018 = vst [vmem:[%s435 + $0x38] sm:$0xff] %v1002
          %1019 = vst [vmem:[%s435 + $0x40] sm:$0xff] %v1003
          %1020 = vst [vmem:[%s435 + $0x48] sm:$0xff] %v1004
          %1021 = vst [vmem:[%s435 + $0x50] sm:$0xff] %v1005
          %1022 = vst [vmem:[%s435 + $0x58] sm:$0xff] %v1006
          %1023 = vst [vmem:[%s435 + $0x60] sm:$0xff] %v1007
          %1024 = vst [vmem:[%s435 + $0x68] sm:$0xff] %v1008
          %1025 = vst [vmem:[%s435 + $0x70] sm:$0xff] %v1009
          %1026 = vst [vmem:[%s435 + $0x78] sm:$0xff] %v1010
        $region76: #{gcn_forward.5} parent=43 // pred_fallthru
          _
        %s1027 = sand.u32 %s200, 1
        %s1028 = scalar_lea.sflag [#allocation5], %s1027
        %s1029 = sand.u32 %s200, 1
        %s1030 = smul.addr %s1029, 128
        %s1031 = scalar_lea.vmem [#allocation13], %s1030
        // Predicated region
        $region77: #{gcn_forward.5} parent=43 // pred_check
          %p1032 = pneg %p210
        $region78: #{gcn_forward.5} parent=43 // pred_check_branch
          %1034 = sbr.rel (%p1032) target = $region80
        $region79: #{gcn_forward.5} parent=43 // pred_region
          %s1035 = smul.u32 16, %s31
          %s1037 = ssub.s32 2048, 2048
          %1038 = vsyncadd %s1028, %s1037
          %s1039 = smul.addr %s1035, 128
          %s1040 = scalar_lea.hbm %s6, %s1039
          %s1041 = sshll.u32 %s1031, 4
          %s1042 = int_to_ptr.vmem [resolvable:$true] %s1041
          %1047 = dma.vmem_to_hbm [thread:$0]  %s1042, 2048, %s1040, %s1028, 128, 128, 8
        $region80: #{gcn_forward.5} parent=43 // pred_fallthru
          _
      $region44: #{gcn_forward.5} parent=5 // pred_fallthru
        _
      %p1048 = scmp.le.s32.totalorder 2, %s22
      // Predicated region
      $region81: #{gcn_forward.5} parent=5 // pred_check
        %p1049 = pneg %p1048
      $region82: #{gcn_forward.5} parent=5 // pred_check_branch
        %1051 = sbr.rel (%p1049) target = $region84
      $region83: #{gcn_forward.5} parent=5 // pred_region
        %s1052 = ssub.s32 %s22, 2
        // Predicated region
        $region85: #{gcn_forward.5} parent=83 // pred_check
          %p1053 = pneg %p216
        $region86: #{gcn_forward.5} parent=83 // pred_check_branch
          %1055 = sbr.rel (%p1053) target = $region88
        $region87: #{gcn_forward.5} parent=83 // pred_region
          %s1056 = sand.u32 %s201, 1
          %s1057 = scalar_lea.sflag [#allocation5], %s1056
          %s1058 = sand.u32 %s201, 1
          %s1059 = smul.addr %s1058, 128
          %s1060 = scalar_lea.vmem [#allocation13], %s1059
          %1061 = dma.done %s1057, 2048
        $region88: #{gcn_forward.5} parent=83 // pred_fallthru
          _
      $region84: #{gcn_forward.5} parent=5 // pred_fallthru
        _
    $region6: #{gcn_forward.5} parent=1 // loop_footer
      %s26 = sadd.s32 1, %s22
    $region7: #{gcn_forward.5} parent=1 // loop_footer_branch
      %21 = sbr.rel target = $region3
    $region8: #{gcn_forward.5} parent=1 // loop_exit
      _
    %1062 = vsyncpa [#allocation4], 1
    %s1063 = scalar_lea.sflag [#allocation4], 1
    %1064 = vsyncpa %s1063, 1
    %1065 = vsyncpa [#allocation7], 1
    %1066 = vsyncpa [#allocation11], 1
    %s1067 = scalar_lea.sflag [#allocation11], 1
    %1068 = vsyncpa %s1067, 1
    %1069 = vsyncpa [#allocation5], 1
    %s1070 = scalar_lea.sflag [#allocation5], 1
    %1071 = vsyncpa %s1070, 1

// kernel: gcn_forward.4
$region0: #{gcn_forward.4}
  #allocation0 [shape = 'u32[]', space=smem, size = 0x4, offset = 0x4, fixed_abs, tag = 'smem constant byte address 0x4 - core index']
  #allocation1 [shape = 'u32[144,128]{1,0:T(1,128)}', space=vmem, size = 0x12000, scoped, tag = 'internal scratch']
  #allocation2 [shape = 'f32[128,128]{1,0:T(8,128)}', space=vmem, size = 0x10000, scoped, tag = 'scratch operand']
  %s0 = inlined_call_operand.hbm [shape: s8[256,256], index: 0, kind: input, shape index: {}]
  %s1 = inlined_call_operand.hbm [shape: bf16[256,128], index: 1, kind: input, shape index: {}]
  %s2 = inlined_call_operand.hbm [shape: f32[256,1], index: 2, kind: input, shape index: {}]
  %s3 = inlined_call_operand.hbm [shape: f32[1,128], index: 3, kind: input, shape index: {}]
  %s4 = inlined_call_operand.hbm [shape: bf16[128,128], index: 4, kind: input, shape index: {}]
  %s5 = inlined_call_operand.hbm [shape: bf16[256,128], index: 5, kind: output, shape index: {0}]
  %s6 = inlined_call_operand.hbm [shape: bf16[256,128], index: 6, kind: output, shape index: {1}]
  %7 = xla_tuple %s5, %s6
  %s8 = sld [smem:[#allocation0]]
  $region89: #{gcn_forward.4} parent=0
    _
  %s10 = ssub.s32 1, %s8
  %s11 = scalar_select 0, %s10, %s8
  $region1: #{gcn_forward.4} parent=0
    #allocation3 [shape = 'u8[65536]{0}', space=vmem, size = 0x10000, scoped, tag = 'input window, operand 0']
    #allocation4 [shape = 's32[2]{0}', space=sflag, size = 0x8, scoped, tag = 'scoped memory for gcn_forward.4']
    #allocation5 [shape = 's32[2]{0}', space=sflag, size = 0x8, scoped, tag = 'scoped memory for gcn_forward.4']
    #allocation6 [shape = 'u8[65536]{0}', space=vmem, size = 0x10000, scoped, tag = 'input window, operand 1, single buffered']
    #allocation7 [shape = 's32[1]{0}', space=sflag, size = 0x4, scoped, tag = 'scoped memory for gcn_forward.4']
    #allocation8 [shape = 'u8[131072]{0}', space=vmem, size = 0x20000, scoped, tag = 'input window, operand 2']
    #allocation9 [shape = 'u8[512]{0}', space=vmem, size = 0x400, scoped, tag = 'input window, operand 3, single buffered']
    #allocation10 [shape = 'u8[32768]{0}', space=vmem, size = 0x8000, scoped, tag = 'input window, operand 4, single buffered']
    #allocation11 [shape = 's32[1]{0}', space=sflag, size = 0x4, scoped, tag = 'scoped memory for gcn_forward.4']
    #allocation12 [shape = 'u8[65536]{0}', space=vmem, size = 0x10000, scoped, tag = 'output window, operand 0']
    #allocation13 [shape = 'u8[65536]{0}', space=vmem, size = 0x10000, scoped, tag = 'output window, operand 1']
    #allocation14 [shape = 's32[2]{0}', space=sflag, size = 0x8, scoped, tag = 'scoped memory for gcn_forward.4']
    %12 = vsyncpa [#allocation4], 0
    %s13 = scalar_lea.sflag [#allocation4], 1
    %14 = vsyncpa %s13, 0
    %15 = vsyncpa [#allocation7], 0
    %16 = vsyncpa [#allocation11], 0
    %17 = vsyncpa [#allocation5], 0
    %s18 = scalar_lea.sflag [#allocation5], 1
    %19 = vsyncpa %s18, 0
    %20 = vsyncpa [#allocation14], 0
    %s21 = scalar_lea.sflag [#allocation14], 1
    %22 = vsyncpa %s21, 0
    loop: start=0, step=1, limit=4
    $region2: #{gcn_forward.4} parent=1 // loop_pre_header
      _
    $region3: #{gcn_forward.4} parent=1 // loop_header
      %s24 = sphi 0, %s28
      %p25 = scmp.ge.s32.totalorder %s24, 4
      %s31 = sphi 0, %s43
      %s32 = sphi 0, %s39
      %s33 = sphi 0, %s31
      %s34 = sphi 0, %s32
      %s35 = sphi 0, %s33
      %s36 = sphi 0, %s34
      %s48 = sphi 0, %s50
      %s51 = sphi 0, %s48
      %s52 = sphi 0, %s51
      %s68 = sphi 0, %s52
      %s74 = sphi 0, %s76
      %s77 = sphi 0, %s74
      %s78 = sphi 0, %s77
      %s94 = sphi 0, %s78
      %s100 = sphi 0, %s102
      %s103 = sphi 0, %s100
      %s104 = sphi 0, %s103
      %s120 = sphi 0, %s104
      %s124 = sphi 0, %s124
      %s126 = sphi 0, %s124
      %s127 = sphi 0, %s126
      %s141 = sphi 0, %s127
      %s145 = sphi 0, %s145
      %s147 = sphi 0, %s145
      %s148 = sphi 0, %s147
      %s162 = sphi 0, %s148
      %s168 = sphi 0, %s170
      %s171 = sphi 0, %s168
      %s172 = sphi 0, %s171
      %s188 = sphi 0, %s172
      %s194 = sphi 0, %s196
      %s197 = sphi 0, %s194
      %s198 = sphi 0, %s197
      %s214 = sphi 0, %s198
    $region4: #{gcn_forward.4} parent=1 // loop_header_branch
      %27 = sbr.rel (%p25) target = $region8
    $region5: #{gcn_forward.4} parent=1 // loop_body
      %s29 = ssub.s32 %s24, 1
      %s30 = ssub.s32 %s24, 2
      %s37 = sadd.s32 1, %s32
      %p38 = scmp.ge.s32.totalorder %s37, 1
      %s39 = scalar_select %p38, 0, %s37
      %s40 = sadd.s32 1, %s31
      %s41 = scalar_select %p38, %s40, %s31
      %p42 = scmp.ge.s32.totalorder %s41, 2
      %s43 = scalar_select %p42, 0, %s41
      %s44 = ssub.s32 %s31, %s43
      %s45 = ssub.s32 %s32, %s39
      %s46 = sor.u32 %s44, %s45
      %p47 = scmp.eq.s32.totalorder %s46, 0
      %s49 = sadd.s32 %s48, 1
      %s50 = scalar_select %p47, %s48, %s49
      %p53 = pneg %p47
      %p54 = scmp.eq.s32.totalorder %s24, 1
      %p55 = por %p53, %p54
      %p56 = scmp.ne.s32.totalorder %s48, %s51
      %p57 = scmp.eq.s32.totalorder %s24, 0
      %p58 = por %p56, %p57
      %p59 = scmp.ne.s32.totalorder %s48, %s51
      %p60 = scmp.eq.s32.totalorder %s29, 1
      %p61 = por %p59, %p60
      %p62 = scmp.ne.s32.totalorder %s51, %s52
      %p63 = scmp.eq.s32.totalorder %s29, 0
      %p64 = por %p62, %p63
      %p65 = scmp.ne.s32.totalorder %s51, %s52
      %p66 = scmp.eq.s32.totalorder %s30, 1
      %p67 = por %p65, %p66
      %p69 = scmp.ne.s32.totalorder %s52, %s68
      %p70 = scmp.eq.s32.totalorder %s30, 0
      %p71 = por %p69, %p70
      %s72 = ssub.s32 %s32, %s39
      %p73 = scmp.eq.s32.totalorder %s72, 0
      %s75 = sadd.s32 %s74, 1
      %s76 = scalar_select %p73, %s74, %s75
      %p79 = pneg %p73
      %p80 = scmp.eq.s32.totalorder %s24, 1
      %p81 = por %p79, %p80
      %p82 = scmp.ne.s32.totalorder %s74, %s77
      %p83 = scmp.eq.s32.totalorder %s24, 0
      %p84 = por %p82, %p83
      %p85 = scmp.ne.s32.totalorder %s74, %s77
      %p86 = scmp.eq.s32.totalorder %s29, 1
      %p87 = por %p85, %p86
      %p88 = scmp.ne.s32.totalorder %s77, %s78
      %p89 = scmp.eq.s32.totalorder %s29, 0
      %p90 = por %p88, %p89
      %p91 = scmp.ne.s32.totalorder %s77, %s78
      %p92 = scmp.eq.s32.totalorder %s30, 1
      %p93 = por %p91, %p92
      %p95 = scmp.ne.s32.totalorder %s78, %s94
      %p96 = scmp.eq.s32.totalorder %s30, 0
      %p97 = por %p95, %p96
      %s98 = ssub.s32 %s31, %s43
      %p99 = scmp.eq.s32.totalorder %s98, 0
      %s101 = sadd.s32 %s100, 1
      %s102 = scalar_select %p99, %s100, %s101
      %p105 = pneg %p99
      %p106 = scmp.eq.s32.totalorder %s24, 1
      %p107 = por %p105, %p106
      %p108 = scmp.ne.s32.totalorder %s100, %s103
      %p109 = scmp.eq.s32.totalorder %s24, 0
      %p110 = por %p108, %p109
      %p111 = scmp.ne.s32.totalorder %s100, %s103
      %p112 = scmp.eq.s32.totalorder %s29, 1
      %p113 = por %p111, %p112
      %p114 = scmp.ne.s32.totalorder %s103, %s104
      %p115 = scmp.eq.s32.totalorder %s29, 0
      %p116 = por %p114, %p115
      %p117 = scmp.ne.s32.totalorder %s103, %s104
      %p118 = scmp.eq.s32.totalorder %s30, 1
      %p119 = por %p117, %p118
      %p121 = scmp.ne.s32.totalorder %s104, %s120
      %p122 = scmp.eq.s32.totalorder %s30, 0
      %p123 = por %p121, %p122
      %s125 = sadd.s32 %s124, 1
      %p128 = scmp.eq.s32.totalorder %s24, 1
      %p129 = scmp.ne.s32.totalorder %s124, %s126
      %p130 = scmp.eq.s32.totalorder %s24, 0
      %p131 = por %p129, %p130
      %p132 = scmp.ne.s32.totalorder %s124, %s126
      %p133 = scmp.eq.s32.totalorder %s29, 1
      %p134 = por %p132, %p133
      %p135 = scmp.ne.s32.totalorder %s126, %s127
      %p136 = scmp.eq.s32.totalorder %s29, 0
      %p137 = por %p135, %p136
      %p138 = scmp.ne.s32.totalorder %s126, %s127
      %p139 = scmp.eq.s32.totalorder %s30, 1
      %p140 = por %p138, %p139
      %p142 = scmp.ne.s32.totalorder %s127, %s141
      %p143 = scmp.eq.s32.totalorder %s30, 0
      %p144 = por %p142, %p143
      %s146 = sadd.s32 %s145, 1
      %p149 = scmp.eq.s32.totalorder %s24, 1
      %p150 = scmp.ne.s32.totalorder %s145, %s147
      %p151 = scmp.eq.s32.totalorder %s24, 0
      %p152 = por %p150, %p151
      %p153 = scmp.ne.s32.totalorder %s145, %s147
      %p154 = scmp.eq.s32.totalorder %s29, 1
      %p155 = por %p153, %p154
      %p156 = scmp.ne.s32.totalorder %s147, %s148
      %p157 = scmp.eq.s32.totalorder %s29, 0
      %p158 = por %p156, %p157
      %p159 = scmp.ne.s32.totalorder %s147, %s148
      %p160 = scmp.eq.s32.totalorder %s30, 1
      %p161 = por %p159, %p160
      %p163 = scmp.ne.s32.totalorder %s148, %s162
      %p164 = scmp.eq.s32.totalorder %s30, 0
      %p165 = por %p163, %p164
      %s166 = ssub.s32 %s31, %s43
      %p167 = scmp.eq.s32.totalorder %s166, 0
      %s169 = sadd.s32 %s168, 1
      %s170 = scalar_select %p167, %s168, %s169
      %p173 = pneg %p167
      %p174 = scmp.eq.s32.totalorder %s24, 1
      %p175 = por %p173, %p174
      %p176 = scmp.ne.s32.totalorder %s168, %s171
      %p177 = scmp.eq.s32.totalorder %s24, 0
      %p178 = por %p176, %p177
      %p179 = scmp.ne.s32.totalorder %s168, %s171
      %p180 = scmp.eq.s32.totalorder %s29, 1
      %p181 = por %p179, %p180
      %p182 = scmp.ne.s32.totalorder %s171, %s172
      %p183 = scmp.eq.s32.totalorder %s29, 0
      %p184 = por %p182, %p183
      %p185 = scmp.ne.s32.totalorder %s171, %s172
      %p186 = scmp.eq.s32.totalorder %s30, 1
      %p187 = por %p185, %p186
      %p189 = scmp.ne.s32.totalorder %s172, %s188
      %p190 = scmp.eq.s32.totalorder %s30, 0
      %p191 = por %p189, %p190
      %s192 = ssub.s32 %s31, %s43
      %p193 = scmp.eq.s32.totalorder %s192, 0
      %s195 = sadd.s32 %s194, 1
      %s196 = scalar_select %p193, %s194, %s195
      %p199 = pneg %p193
      %p200 = scmp.eq.s32.totalorder %s24, 1
      %p201 = por %p199, %p200
      %p202 = scmp.ne.s32.totalorder %s194, %s197
      %p203 = scmp.eq.s32.totalorder %s24, 0
      %p204 = por %p202, %p203
      %p205 = scmp.ne.s32.totalorder %s194, %s197
      %p206 = scmp.eq.s32.totalorder %s29, 1
      %p207 = por %p205, %p206
      %p208 = scmp.ne.s32.totalorder %s197, %s198
      %p209 = scmp.eq.s32.totalorder %s29, 0
      %p210 = por %p208, %p209
      %p211 = scmp.ne.s32.totalorder %s197, %s198
      %p212 = scmp.eq.s32.totalorder %s30, 1
      %p213 = por %p211, %p212
      %p215 = scmp.ne.s32.totalorder %s198, %s214
      %p216 = scmp.eq.s32.totalorder %s30, 0
      %p217 = por %p215, %p216
      %p218 = scmp.le.s32.totalorder 1, %s24
      %p219 = scmp.lt.s32.totalorder %s24, 3
      %p220 = pnand %p218, %p219
      %p221 = pneg %p220
      // Predicated region
      $region9: #{gcn_forward.4} parent=5 // pred_check
        _
      $region10: #{gcn_forward.4} parent=5 // pred_check_branch
        %223 = sbr.rel (%p220) target = $region12
      $region11: #{gcn_forward.4} parent=5 // pred_region
        %s224 = ssub.s32 %s24, 1
        // Predicated region
        $region13: #{gcn_forward.4} parent=11 // pred_check
          %p225 = pneg %p90
        $region14: #{gcn_forward.4} parent=11 // pred_check_branch
          %227 = sbr.rel (%p225) target = $region16
        $region15: #{gcn_forward.4} parent=11 // pred_region
          %s228 = smul.u32 32, %s34
          %s230 = ssub.s32 2048, 2048
          %231 = vsyncadd [#allocation7], %s230
          %s232 = smul.addr %s228, 64
          %s233 = scalar_lea.hbm %s1, %s232
          %s234 = sshll.u32 [#allocation6], 4
          %s235 = int_to_ptr.vmem [resolvable:$true] %s234
          %240 = dma.hbm_to_vmem [thread:$0]  %s233, 2048, %s235, [#allocation7], 64, 64, 4
        $region16: #{gcn_forward.4} parent=11 // pred_fallthru
          _
        // Predicated region
        $region17: #{gcn_forward.4} parent=11 // pred_check
          %p241 = pneg %p137
        $region18: #{gcn_forward.4} parent=11 // pred_check_branch
          %243 = sbr.rel (%p241) target = $region20
        $region19: #{gcn_forward.4} parent=11 // pred_region
          %s245 = ssub.s32 16, 16
          %246 = vsyncadd [#allocation7], %s245
          %s248 = sshll.u32 [#allocation9], 4
          %s249 = int_to_ptr.vmem [resolvable:$true] %s248
          %251 = dma.hbm_to_vmem [thread:$0]  %s3, 16, %s249, [#allocation7]
        $region20: #{gcn_forward.4} parent=11 // pred_fallthru
          _
        // Predicated region
        $region21: #{gcn_forward.4} parent=11 // pred_check
          %p252 = pneg %p158
        $region22: #{gcn_forward.4} parent=11 // pred_check_branch
          %254 = sbr.rel (%p252) target = $region24
        $region23: #{gcn_forward.4} parent=11 // pred_region
          %s256 = ssub.s32 1024, 1024
          %257 = vsyncadd [#allocation11], %s256
          %s258 = sshll.u32 [#allocation10], 4
          %s259 = int_to_ptr.vmem [resolvable:$true] %s258
          %264 = dma.hbm_to_vmem [thread:$0]  %s4, 1024, %s259, [#allocation11], 64, 64, 4
        $region24: #{gcn_forward.4} parent=11 // pred_fallthru
          _
      $region12: #{gcn_forward.4} parent=5 // pred_fallthru
        _
      %p265 = scmp.lt.s32.totalorder %s24, 2
      // Predicated region
      $region25: #{gcn_forward.4} parent=5 // pred_check
        %p266 = pneg %p265
      $region26: #{gcn_forward.4} parent=5 // pred_check_branch
        %268 = sbr.rel (%p266) target = $region28
      $region27: #{gcn_forward.4} parent=5 // pred_region
        // Predicated region
        $region29: #{gcn_forward.4} parent=27 // pred_check
          %p269 = pneg %p58
        $region30: #{gcn_forward.4} parent=27 // pred_check_branch
          %271 = sbr.rel (%p269) target = $region32
        $region31: #{gcn_forward.4} parent=27 // pred_region
          %s272 = sand.u32 %s24, 1
          %s273 = scalar_lea.sflag [#allocation4], %s272
          %s274 = sand.u32 %s48, 1
          %s275 = smul.addr %s274, 64
          %s276 = scalar_lea.vmem [#allocation3], %s275
          %s277 = smul.u32 4, %s31
          %s278 = smul.u32 2, %s32
          %s280 = ssub.s32 1024, 1024
          %281 = vsyncadd %s273, %s280
          %s282 = smul.addr %s277, 2
          %s283 = sadd.s32 %s278, %s282
          %s284 = smul.addr %s283, 128
          %s285 = scalar_lea.hbm %s0, %s284
          %s286 = sshll.u32 %s276, 4
          %s287 = int_to_ptr.vmem [resolvable:$true] %s286
          %292 = dma.hbm_to_vmem [thread:$0]  %s285, 1024, %s287, %s273, 256, 256, 16
        $region32: #{gcn_forward.4} parent=27 // pred_fallthru
          _
        // Predicated region
        $region33: #{gcn_forward.4} parent=27 // pred_check
          %p293 = pneg %p110
        $region34: #{gcn_forward.4} parent=27 // pred_check_branch
          %295 = sbr.rel (%p293) target = $region36
        $region35: #{gcn_forward.4} parent=27 // pred_region
          %s296 = sand.u32 %s24, 1
          %s297 = scalar_lea.sflag [#allocation4], %s296
          %s298 = sand.u32 %s100, 1
          %s299 = smul.addr %s298, 128
          %s300 = scalar_lea.vmem [#allocation8], %s299
          %s301 = smul.u32 16, %s31
          %s303 = ssub.s32 2048, 2048
          %304 = vsyncadd %s297, %s303
          %s305 = smul.addr %s301, 128
          %s306 = scalar_lea.hbm %s2, %s305
          %s307 = sshll.u32 %s300, 4
          %s308 = int_to_ptr.vmem [resolvable:$true] %s307
          %313 = dma.hbm_to_vmem [thread:$0]  %s306, 2048, %s308, %s297, 128, 128, 8
        $region36: #{gcn_forward.4} parent=27 // pred_fallthru
          _
      $region28: #{gcn_forward.4} parent=5 // pred_fallthru
        _
      %p314 = scmp.le.s32.totalorder 1, %s24
      %p315 = scmp.lt.s32.totalorder %s24, 3
      %p316 = pnand %p314, %p315
      %p317 = pneg %p316
      // Predicated region
      $region37: #{gcn_forward.4} parent=5 // pred_check
        _
      $region38: #{gcn_forward.4} parent=5 // pred_check_branch
        %319 = sbr.rel (%p316) target = $region40
      $region39: #{gcn_forward.4} parent=5 // pred_region
        %s320 = ssub.s32 %s24, 1
        %s321 = sand.u32 %s29, 1
        %s322 = scalar_lea.sflag [#allocation4], %s321
        %s323 = sand.u32 %s51, 1
        %s324 = smul.addr %s323, 64
        %s325 = scalar_lea.vmem [#allocation3], %s324
        // Predicated region
        $region41: #{gcn_forward.4} parent=39 // pred_check
          %p326 = pneg %p64
        $region42: #{gcn_forward.4} parent=39 // pred_check_branch
          %328 = sbr.rel (%p326) target = $region44
        $region43: #{gcn_forward.4} parent=39 // pred_region
          %329 = dma.done %s322, 1024
        $region44: #{gcn_forward.4} parent=39 // pred_fallthru
          _
        // Predicated region
        $region45: #{gcn_forward.4} parent=39 // pred_check
          %p330 = pneg %p90
        $region46: #{gcn_forward.4} parent=39 // pred_check_branch
          %332 = sbr.rel (%p330) target = $region48
        $region47: #{gcn_forward.4} parent=39 // pred_region
          %333 = dma.done [#allocation7], 2048
        $region48: #{gcn_forward.4} parent=39 // pred_fallthru
          _
        %s334 = sand.u32 %s29, 1
        %s335 = scalar_lea.sflag [#allocation4], %s334
        %s336 = sand.u32 %s103, 1
        %s337 = smul.addr %s336, 128
        %s338 = scalar_lea.vmem [#allocation8], %s337
        // Predicated region
        $region49: #{gcn_forward.4} parent=39 // pred_check
          %p339 = pneg %p116
        $region50: #{gcn_forward.4} parent=39 // pred_check_branch
          %341 = sbr.rel (%p339) target = $region52
        $region51: #{gcn_forward.4} parent=39 // pred_region
          %342 = dma.done %s335, 2048
        $region52: #{gcn_forward.4} parent=39 // pred_fallthru
          _
        // Predicated region
        $region53: #{gcn_forward.4} parent=39 // pred_check
          %p343 = pneg %p137
        $region54: #{gcn_forward.4} parent=39 // pred_check_branch
          %345 = sbr.rel (%p343) target = $region56
        $region55: #{gcn_forward.4} parent=39 // pred_region
          %346 = dma.done [#allocation7], 16
        $region56: #{gcn_forward.4} parent=39 // pred_fallthru
          _
        // Predicated region
        $region57: #{gcn_forward.4} parent=39 // pred_check
          %p347 = pneg %p158
        $region58: #{gcn_forward.4} parent=39 // pred_check_branch
          %349 = sbr.rel (%p347) target = $region60
        $region59: #{gcn_forward.4} parent=39 // pred_region
          %350 = dma.done [#allocation11], 1024
        $region60: #{gcn_forward.4} parent=39 // pred_fallthru
          _
        %s351 = sand.u32 %s29, 1
        %s352 = scalar_lea.sflag [#allocation4], %s351
        %s353 = sand.u32 %s51, 1
        %s354 = smul.addr %s353, 64
        %s355 = scalar_lea.vmem [#allocation3], %s354
        %p356 = pneg %p64
        %p357 = pneg %p61
        %p358 = pneg %p90
        %p359 = pneg %p87
        %s360 = sand.u32 %s29, 1
        %s361 = scalar_lea.sflag [#allocation4], %s360
        %s362 = sand.u32 %s103, 1
        %s363 = smul.addr %s362, 128
        %s364 = scalar_lea.vmem [#allocation8], %s363
        %p365 = pneg %p116
        %p366 = pneg %p113
        %p367 = pneg %p137
        %p368 = pneg %p134
        %p369 = pneg %p158
        %p370 = pneg %p155
        %p371 = pneg %p184
        %p372 = pneg %p181
        %s373 = sand.u32 %s171, 1
        %s374 = scalar_lea.sflag [#allocation5], %s373
        %s375 = sand.u32 %s171, 1
        %s376 = smul.addr %s375, 64
        %s377 = scalar_lea.vmem [#allocation12], %s376
        %p378 = pneg %p210
        %p379 = pneg %p207
        %s380 = sand.u32 %s197, 1
        %s381 = scalar_lea.sflag [#allocation14], %s380
        %s382 = sand.u32 %s197, 1
        %s383 = smul.addr %s382, 64
        %s384 = scalar_lea.vmem [#allocation13], %s383
        %s385 = smul.u32 4, %s33
        %s386 = smul.u32 2, %s34
        %s387 = smul.u32 32, %s34
        %s388 = smul.u32 16, %s33
        %s389 = smul.u32 16, %s33
        %s390 = smul.u32 16, %s33
        %p392 = scmp.eq.s32.totalorder %s34, 0
        // Predicated region
        $region61: #{gcn_forward.4} parent=39 // pred_check
          %p393 = pneg %p392
        $region62: #{gcn_forward.4} parent=39 // pred_check_branch
          %395 = sbr.rel (%p393) target = $region64
        $region63: #{gcn_forward.4} parent=39 // pred_region
          %396 = vst [vmem:[#allocation2] sm:$0xff] 0.0
          %397 = vst [vmem:[#allocation2 + $0x8] sm:$0xff] 0.0
          %398 = vst [vmem:[#allocation2 + $0x10] sm:$0xff] 0.0
          %399 = vst [vmem:[#allocation2 + $0x18] sm:$0xff] 0.0
          %400 = vst [vmem:[#allocation2 + $0x20] sm:$0xff] 0.0
          %401 = vst [vmem:[#allocation2 + $0x28] sm:$0xff] 0.0
          %402 = vst [vmem:[#allocation2 + $0x30] sm:$0xff] 0.0
          %403 = vst [vmem:[#allocation2 + $0x38] sm:$0xff] 0.0
          %404 = vst [vmem:[#allocation2 + $0x40] sm:$0xff] 0.0
          %405 = vst [vmem:[#allocation2 + $0x48] sm:$0xff] 0.0
          %406 = vst [vmem:[#allocation2 + $0x50] sm:$0xff] 0.0
          %407 = vst [vmem:[#allocation2 + $0x58] sm:$0xff] 0.0
          %408 = vst [vmem:[#allocation2 + $0x60] sm:$0xff] 0.0
          %409 = vst [vmem:[#allocation2 + $0x68] sm:$0xff] 0.0
          %410 = vst [vmem:[#allocation2 + $0x70] sm:$0xff] 0.0
          %411 = vst [vmem:[#allocation2 + $0x78] sm:$0xff] 0.0
        $region64: #{gcn_forward.4} parent=39 // pred_fallthru
          _
        %v412 = vld [vmem:[%s325] sm:$0xff]
        %v413 = vld [vmem:[%s325 + $0x8] sm:$0xff]
        %v414 = vld [vmem:[%s325 + $0x10] sm:$0xff]
        %v415 = vld [vmem:[%s325 + $0x18] sm:$0xff]
        %v416 = vld [vmem:[%s325 + $0x20] sm:$0xff]
        %v417 = vld [vmem:[%s325 + $0x28] sm:$0xff]
        %v418 = vld [vmem:[%s325 + $0x30] sm:$0xff]
        %v419 = vld [vmem:[%s325 + $0x38] sm:$0xff]
        %v420 = vunpack.c.l.s8.bf16 %v412
        %v421 = vunpack.c.l.s8.bf16 %v413
        %v422 = vunpack.c.h.s8.bf16 %v412
        %v423 = vunpack.c.h.s8.bf16 %v413
        %v424 = vunpack.c.l.s8.bf16 %v414
        %v425 = vunpack.c.l.s8.bf16 %v415
        %v426 = vunpack.c.h.s8.bf16 %v414
        %v427 = vunpack.c.h.s8.bf16 %v415
        %v428 = vunpack.c.l.s8.bf16 %v416
        %v429 = vunpack.c.l.s8.bf16 %v417
        %v430 = vunpack.c.h.s8.bf16 %v416
        %v431 = vunpack.c.h.s8.bf16 %v417
        %v432 = vunpack.c.l.s8.bf16 %v418
        %v433 = vunpack.c.l.s8.bf16 %v419
        %v434 = vunpack.c.h.s8.bf16 %v418
        %v435 = vunpack.c.h.s8.bf16 %v419
        %v436 = vld [vmem:[#allocation2] sm:$0xff]
        %v437 = vld [vmem:[#allocation2 + $0x8] sm:$0xff]
        %v438 = vld [vmem:[#allocation2 + $0x10] sm:$0xff]
        %v439 = vld [vmem:[#allocation2 + $0x18] sm:$0xff]
        %v440 = vld [vmem:[#allocation2 + $0x20] sm:$0xff]
        %v441 = vld [vmem:[#allocation2 + $0x28] sm:$0xff]
        %v442 = vld [vmem:[#allocation2 + $0x30] sm:$0xff]
        %v443 = vld [vmem:[#allocation2 + $0x38] sm:$0xff]
        %v444 = vld [vmem:[#allocation2 + $0x40] sm:$0xff]
        %v445 = vld [vmem:[#allocation2 + $0x48] sm:$0xff]
        %v446 = vld [vmem:[#allocation2 + $0x50] sm:$0xff]
        %v447 = vld [vmem:[#allocation2 + $0x58] sm:$0xff]
        %v448 = vld [vmem:[#allocation2 + $0x60] sm:$0xff]
        %v449 = vld [vmem:[#allocation2 + $0x68] sm:$0xff]
        %v450 = vld [vmem:[#allocation2 + $0x70] sm:$0xff]
        %v451 = vld [vmem:[#allocation2 + $0x78] sm:$0xff]
        %v452 = vld [vmem:[#allocation6] sm:$0xf]
        %v453 = vld [vmem:[#allocation6 + $0x4] sm:$0xf]
        %v454 = vld [vmem:[#allocation6 + $0x8] sm:$0xf]
        %v455 = vld [vmem:[#allocation6 + $0xc] sm:$0xf]
        %v456 = vld [vmem:[#allocation6 + $0x10] sm:$0xf]
        %v457 = vld [vmem:[#allocation6 + $0x14] sm:$0xf]
        %v458 = vld [vmem:[#allocation6 + $0x18] sm:$0xf]
        %v459 = vld [vmem:[#allocation6 + $0x1c] sm:$0xf]
        %v460 = vld [vmem:[#allocation6 + $0x20] sm:$0xf]
        %v461 = vld [vmem:[#allocation6 + $0x24] sm:$0xf]
        %v462 = vld [vmem:[#allocation6 + $0x28] sm:$0xf]
        %v463 = vld [vmem:[#allocation6 + $0x2c] sm:$0xf]
        %v464 = vld [vmem:[#allocation6 + $0x30] sm:$0xf]
        %v465 = vld [vmem:[#allocation6 + $0x34] sm:$0xf]
        %v466 = vld [vmem:[#allocation6 + $0x38] sm:$0xf]
        %v467 = vld [vmem:[#allocation6 + $0x3c] sm:$0xf]
        %v468 = vld [vmem:[#allocation6 + $0x40] sm:$0xf]
        %v469 = vld [vmem:[#allocation6 + $0x44] sm:$0xf]
        %v470 = vld [vmem:[#allocation6 + $0x48] sm:$0xf]
        %v471 = vld [vmem:[#allocation6 + $0x4c] sm:$0xf]
        %v472 = vld [vmem:[#allocation6 + $0x50] sm:$0xf]
        %v473 = vld [vmem:[#allocation6 + $0x54] sm:$0xf]
        %v474 = vld [vmem:[#allocation6 + $0x58] sm:$0xf]
        %v475 = vld [vmem:[#allocation6 + $0x5c] sm:$0xf]
        %v476 = vld [vmem:[#allocation6 + $0x60] sm:$0xf]
        %v477 = vld [vmem:[#allocation6 + $0x64] sm:$0xf]
        %v478 = vld [vmem:[#allocation6 + $0x68] sm:$0xf]
        %v479 = vld [vmem:[#allocation6 + $0x6c] sm:$0xf]
        %v480 = vld [vmem:[#allocation6 + $0x70] sm:$0xf]
        %v481 = vld [vmem:[#allocation6 + $0x74] sm:$0xf]
        %v482 = vld [vmem:[#allocation6 + $0x78] sm:$0xf]
        %v483 = vld [vmem:[#allocation6 + $0x7c] sm:$0xf]
        %v516 = vunpack.c.l.b16 %v452
        %v517 = vunpack.c.l.b16 %v453
        %v518 = vunpack.c.l.b16 %v454
        %v519 = vunpack.c.l.b16 %v455
        %v520 = vunpack.c.l.b16 %v456
        %v521 = vunpack.c.l.b16 %v457
        %v522 = vunpack.c.l.b16 %v458
        %v523 = vunpack.c.l.b16 %v459
        %v524 = vunpack.c.l.b16 %v460
        %v525 = vunpack.c.l.b16 %v461
        %v526 = vunpack.c.l.b16 %v462
        %v527 = vunpack.c.l.b16 %v463
        %v528 = vunpack.c.l.b16 %v464
        %v529 = vunpack.c.l.b16 %v465
        %v530 = vunpack.c.l.b16 %v466
        %v531 = vunpack.c.l.b16 %v467
        %v532 = vunpack.c.l.b16 %v468
        %v533 = vunpack.c.l.b16 %v469
        %v534 = vunpack.c.l.b16 %v470
        %v535 = vunpack.c.l.b16 %v471
        %v536 = vunpack.c.l.b16 %v472
        %v537 = vunpack.c.l.b16 %v473
        %v538 = vunpack.c.l.b16 %v474
        %v539 = vunpack.c.l.b16 %v475
        %v540 = vunpack.c.l.b16 %v476
        %v541 = vunpack.c.l.b16 %v477
        %v542 = vunpack.c.l.b16 %v478
        %v543 = vunpack.c.l.b16 %v479
        %v544 = vunpack.c.l.b16 %v480
        %v545 = vunpack.c.l.b16 %v481
        %v546 = vunpack.c.l.b16 %v482
        %v547 = vunpack.c.l.b16 %v483
        %v548 = vpack.c.b16 %v517, %v516
        %v549 = vpack.c.b16 %v519, %v518
        %v550 = vpack.c.b16 %v521, %v520
        %v551 = vpack.c.b16 %v523, %v522
        %v552 = vpack.c.b16 %v525, %v524
        %v553 = vpack.c.b16 %v527, %v526
        %v554 = vpack.c.b16 %v529, %v528
        %v555 = vpack.c.b16 %v531, %v530
        %v556 = vpack.c.b16 %v533, %v532
        %v557 = vpack.c.b16 %v535, %v534
        %v558 = vpack.c.b16 %v537, %v536
        %v559 = vpack.c.b16 %v539, %v538
        %v560 = vpack.c.b16 %v541, %v540
        %v561 = vpack.c.b16 %v543, %v542
        %v562 = vpack.c.b16 %v545, %v544
        %v563 = vpack.c.b16 %v547, %v546
        %580 = vmatprep.subr.bf16.mxu0 0
        %581 = vmatpush1.bf16.msra.mxu0 %v548
        %582 = vmatprep.subr.bf16.mxu0 0
        %583 = vmatpush1.bf16.msra.mxu0 %v549
        %584 = vmatprep.subr.bf16.mxu0 0
        %585 = vmatpush1.bf16.msra.mxu0 %v550
        %586 = vmatprep.subr.bf16.mxu0 0
        %587 = vmatpush1.bf16.msra.mxu0 %v551
        %588 = vmatprep.subr.bf16.mxu0 0
        %589 = vmatpush1.bf16.msra.mxu0 %v552
        %590 = vmatprep.subr.bf16.mxu0 0
        %591 = vmatpush1.bf16.msra.mxu0 %v553
        %592 = vmatprep.subr.bf16.mxu0 0
        %593 = vmatpush1.bf16.msra.mxu0 %v554
        %594 = vmatprep.subr.bf16.mxu0 0
        %595 = vmatpush1.bf16.msra.mxu0 %v555
        %596 = vmatprep.subr.bf16.mxu0 0
        %597 = vmatpush1.bf16.msra.mxu0 %v556
        %598 = vmatprep.subr.bf16.mxu0 0
        %599 = vmatpush1.bf16.msra.mxu0 %v557
        %600 = vmatprep.subr.bf16.mxu0 0
        %601 = vmatpush1.bf16.msra.mxu0 %v558
        %602 = vmatprep.subr.bf16.mxu0 0
        %603 = vmatpush1.bf16.msra.mxu0 %v559
        %604 = vmatprep.subr.bf16.mxu0 0
        %605 = vmatpush1.bf16.msra.mxu0 %v560
        %606 = vmatprep.subr.bf16.mxu0 0
        %607 = vmatpush1.bf16.msra.mxu0 %v561
        %608 = vmatprep.subr.bf16.mxu0 0
        %609 = vmatpush1.bf16.msra.mxu0 %v562
        %610 = vmatprep.subr.bf16.mxu0 0
        %611 = vmatpush1.bf16.msra.mxu0 %v563
        %612 = vmatprep.mubr.bf16.mxu0 %v421
        %613 = vmatmul.mubr.bf16.gmra.mrb[0].mxu0 %v420
        %v614 = vpop.f32.mrb[0].mxu0
        %v615 = vadd.f32 0.0, %v614
        %v616 = vpop.f32.mrb[0].mxu0
        %v617 = vpop.f32.mrb[0].mxu0
        %v618 = vadd.f32 0.0, %v617
        %v619 = vpop.f32.mrb[0].mxu0
        %620 = vmatprep.mubr.bf16.mxu0 %v423
        %621 = vmatmul.mubr.bf16.gmra.mrb[0].mxu0 %v422
        %v622 = vpop.f32.mrb[0].mxu0
        %v623 = vadd.f32 0.0, %v622
        %v624 = vpop.f32.mrb[0].mxu0
        %v625 = vpop.f32.mrb[0].mxu0
        %v626 = vadd.f32 0.0, %v625
        %v627 = vpop.f32.mrb[0].mxu0
        %628 = vmatprep.mubr.bf16.mxu0 %v425
        %629 = vmatmul.mubr.bf16.gmra.mrb[0].mxu0 %v424
        %v630 = vpop.f32.mrb[0].mxu0
        %v631 = vadd.f32 0.0, %v630
        %v632 = vpop.f32.mrb[0].mxu0
        %v633 = vpop.f32.mrb[0].mxu0
        %v634 = vadd.f32 0.0, %v633
        %v635 = vpop.f32.mrb[0].mxu0
        %636 = vmatprep.mubr.bf16.mxu0 %v427
        %637 = vmatmul.mubr.bf16.gmra.mrb[0].mxu0 %v426
        %v638 = vpop.f32.mrb[0].mxu0
        %v639 = vadd.f32 0.0, %v638
        %v640 = vpop.f32.mrb[0].mxu0
        %v641 = vpop.f32.mrb[0].mxu0
        %v642 = vadd.f32 0.0, %v641
        %v643 = vpop.f32.mrb[0].mxu0
        %644 = vmatprep.mubr.bf16.mxu0 %v429
        %645 = vmatmul.mubr.bf16.gmra.mrb[0].mxu0 %v428
        %v646 = vpop.f32.mrb[0].mxu0
        %v647 = vadd.f32 0.0, %v646
        %v648 = vpop.f32.mrb[0].mxu0
        %v649 = vpop.f32.mrb[0].mxu0
        %v650 = vadd.f32 0.0, %v649
        %v651 = vpop.f32.mrb[0].mxu0
        %652 = vmatprep.mubr.bf16.mxu0 %v431
        %653 = vmatmul.mubr.bf16.gmra.mrb[0].mxu0 %v430
        %v654 = vpop.f32.mrb[0].mxu0
        %v655 = vadd.f32 0.0, %v654
        %v656 = vpop.f32.mrb[0].mxu0
        %v657 = vpop.f32.mrb[0].mxu0
        %v658 = vadd.f32 0.0, %v657
        %v659 = vpop.f32.mrb[0].mxu0
        %660 = vmatprep.mubr.bf16.mxu0 %v433
        %661 = vmatmul.mubr.bf16.gmra.mrb[0].mxu0 %v432
        %v662 = vpop.f32.mrb[0].mxu0
        %v663 = vadd.f32 0.0, %v662
        %v664 = vpop.f32.mrb[0].mxu0
        %v665 = vpop.f32.mrb[0].mxu0
        %v666 = vadd.f32 0.0, %v665
        %v667 = vpop.f32.mrb[0].mxu0
        %668 = vmatprep.mubr.bf16.mxu0 %v435
        %669 = vmatmul.mubr.bf16.gmra.mrb[0].mxu0 %v434
        %v670 = vpop.f32.mrb[0].mxu0
        %v671 = vadd.f32 0.0, %v670
        %v672 = vpop.f32.mrb[0].mxu0
        %v673 = vpop.f32.mrb[0].mxu0
        %v674 = vadd.f32 0.0, %v673
        %v675 = vpop.f32.mrb[0].mxu0
        %676 = vdwg.mxu0
        %v677 = vadd.f32 %v436, %v615
        %v678 = vadd.f32 %v437, %v618
        %v679 = vadd.f32 %v438, %v623
        %v680 = vadd.f32 %v439, %v626
        %v681 = vadd.f32 %v440, %v631
        %v682 = vadd.f32 %v441, %v634
        %v683 = vadd.f32 %v442, %v639
        %v684 = vadd.f32 %v443, %v642
        %v685 = vadd.f32 %v444, %v647
        %v686 = vadd.f32 %v445, %v650
        %v687 = vadd.f32 %v446, %v655
        %v688 = vadd.f32 %v447, %v658
        %v689 = vadd.f32 %v448, %v663
        %v690 = vadd.f32 %v449, %v666
        %v691 = vadd.f32 %v450, %v671
        %v692 = vadd.f32 %v451, %v674
        %693 = vst [vmem:[#allocation2] sm:$0xff] %v677
        %694 = vst [vmem:[#allocation2 + $0x8] sm:$0xff] %v678
        %695 = vst [vmem:[#allocation2 + $0x10] sm:$0xff] %v679
        %696 = vst [vmem:[#allocation2 + $0x18] sm:$0xff] %v680
        %697 = vst [vmem:[#allocation2 + $0x20] sm:$0xff] %v681
        %698 = vst [vmem:[#allocation2 + $0x28] sm:$0xff] %v682
        %699 = vst [vmem:[#allocation2 + $0x30] sm:$0xff] %v683
        %700 = vst [vmem:[#allocation2 + $0x38] sm:$0xff] %v684
        %701 = vst [vmem:[#allocation2 + $0x40] sm:$0xff] %v685
        %702 = vst [vmem:[#allocation2 + $0x48] sm:$0xff] %v686
        %703 = vst [vmem:[#allocation2 + $0x50] sm:$0xff] %v687
        %704 = vst [vmem:[#allocation2 + $0x58] sm:$0xff] %v688
        %705 = vst [vmem:[#allocation2 + $0x60] sm:$0xff] %v689
        %706 = vst [vmem:[#allocation2 + $0x68] sm:$0xff] %v690
        %707 = vst [vmem:[#allocation2 + $0x70] sm:$0xff] %v691
        %708 = vst [vmem:[#allocation2 + $0x78] sm:$0xff] %v692
        // Predicated region
        $region65: #{gcn_forward.4} parent=39 // pred_check
          %p709 = pneg %p392
        $region66: #{gcn_forward.4} parent=39 // pred_check_branch
          %711 = sbr.rel (%p709) target = $region68
        $region67: #{gcn_forward.4} parent=39 // pred_region
          %v712 = vld [vmem:[%s338] sm:$0xff]
          %v713 = vld [vmem:[%s338 + $0x8] sm:$0xff]
          %v714 = vld [vmem:[%s338 + $0x10] sm:$0xff]
          %v715 = vld [vmem:[%s338 + $0x18] sm:$0xff]
          %v716 = vld [vmem:[%s338 + $0x20] sm:$0xff]
          %v717 = vld [vmem:[%s338 + $0x28] sm:$0xff]
          %v718 = vld [vmem:[%s338 + $0x30] sm:$0xff]
          %v719 = vld [vmem:[%s338 + $0x38] sm:$0xff]
          %v720 = vld [vmem:[%s338 + $0x40] sm:$0xff]
          %v721 = vld [vmem:[%s338 + $0x48] sm:$0xff]
          %v722 = vld [vmem:[%s338 + $0x50] sm:$0xff]
          %v723 = vld [vmem:[%s338 + $0x58] sm:$0xff]
          %v724 = vld [vmem:[%s338 + $0x60] sm:$0xff]
          %v725 = vld [vmem:[%s338 + $0x68] sm:$0xff]
          %v726 = vld [vmem:[%s338 + $0x70] sm:$0xff]
          %v727 = vld [vmem:[%s338 + $0x78] sm:$0xff]
          %v728 = vld [vmem:[#allocation2] sm:$0xff]
          %v729 = vld [vmem:[#allocation2 + $0x8] sm:$0xff]
          %v730 = vld [vmem:[#allocation2 + $0x10] sm:$0xff]
          %v731 = vld [vmem:[#allocation2 + $0x18] sm:$0xff]
          %v732 = vld [vmem:[#allocation2 + $0x20] sm:$0xff]
          %v733 = vld [vmem:[#allocation2 + $0x28] sm:$0xff]
          %v734 = vld [vmem:[#allocation2 + $0x30] sm:$0xff]
          %v735 = vld [vmem:[#allocation2 + $0x38] sm:$0xff]
          %v736 = vld [vmem:[#allocation2 + $0x40] sm:$0xff]
          %v737 = vld [vmem:[#allocation2 + $0x48] sm:$0xff]
          %v738 = vld [vmem:[#allocation2 + $0x50] sm:$0xff]
          %v739 = vld [vmem:[#allocation2 + $0x58] sm:$0xff]
          %v740 = vld [vmem:[#allocation2 + $0x60] sm:$0xff]
          %v741 = vld [vmem:[#allocation2 + $0x68] sm:$0xff]
          %v742 = vld [vmem:[#allocation2 + $0x70] sm:$0xff]
          %v743 = vld [vmem:[#allocation2 + $0x78] sm:$0xff]
          %745 = vset.pattern.permute.xlu0 0
          %746 = vperm.xlu0 %745, %v712
          %v747 = vpop.permute.xlu0 %746
          %750 = vset.pattern.permute.xlu0 0
          %751 = vperm.xlu0 %750, %v713
          %v752 = vpop.permute.xlu0 %751
          %755 = vset.pattern.permute.xlu0 0
          %756 = vperm.xlu0 %755, %v714
          %v757 = vpop.permute.xlu0 %756
          %760 = vset.pattern.permute.xlu0 0
          %761 = vperm.xlu0 %760, %v715
          %v762 = vpop.permute.xlu0 %761
          %765 = vset.pattern.permute.xlu0 0
          %766 = vperm.xlu0 %765, %v716
          %v767 = vpop.permute.xlu0 %766
          %770 = vset.pattern.permute.xlu0 0
          %771 = vperm.xlu0 %770, %v717
          %v772 = vpop.permute.xlu0 %771
          %775 = vset.pattern.permute.xlu0 0
          %776 = vperm.xlu0 %775, %v718
          %v777 = vpop.permute.xlu0 %776
          %780 = vset.pattern.permute.xlu0 0
          %781 = vperm.xlu0 %780, %v719
          %v782 = vpop.permute.xlu0 %781
          %785 = vset.pattern.permute.xlu0 0
          %786 = vperm.xlu0 %785, %v720
          %v787 = vpop.permute.xlu0 %786
          %790 = vset.pattern.permute.xlu0 0
          %791 = vperm.xlu0 %790, %v721
          %v792 = vpop.permute.xlu0 %791
          %795 = vset.pattern.permute.xlu0 0
          %796 = vperm.xlu0 %795, %v722
          %v797 = vpop.permute.xlu0 %796
          %800 = vset.pattern.permute.xlu0 0
          %801 = vperm.xlu0 %800, %v723
          %v802 = vpop.permute.xlu0 %801
          %805 = vset.pattern.permute.xlu0 0
          %806 = vperm.xlu0 %805, %v724
          %v807 = vpop.permute.xlu0 %806
          %810 = vset.pattern.permute.xlu0 0
          %811 = vperm.xlu0 %810, %v725
          %v812 = vpop.permute.xlu0 %811
          %815 = vset.pattern.permute.xlu0 0
          %816 = vperm.xlu0 %815, %v726
          %v817 = vpop.permute.xlu0 %816
          %820 = vset.pattern.permute.xlu0 0
          %821 = vperm.xlu0 %820, %v727
          %v822 = vpop.permute.xlu0 %821
          %v824 = vmul.f32 %v747, %v728
          %v825 = vmul.f32 %v752, %v729
          %v826 = vmul.f32 %v757, %v730
          %v827 = vmul.f32 %v762, %v731
          %v828 = vmul.f32 %v767, %v732
          %v829 = vmul.f32 %v772, %v733
          %v830 = vmul.f32 %v777, %v734
          %v831 = vmul.f32 %v782, %v735
          %v832 = vmul.f32 %v787, %v736
          %v833 = vmul.f32 %v792, %v737
          %v834 = vmul.f32 %v797, %v738
          %v835 = vmul.f32 %v802, %v739
          %v836 = vmul.f32 %v807, %v740
          %v837 = vmul.f32 %v812, %v741
          %v838 = vmul.f32 %v817, %v742
          %v839 = vmul.f32 %v822, %v743
          %v840 = vld [vmem:[#allocation9] sm:$0x1]
          %v842 = vlaneseq
          %v843 = vshrl.u32 %v842, 7
          %v844 = vsub.s32 0, %v843
          %v845 = vrot.slane %v840, %v844
          %v847 = vadd.f32 %v824, %v845
          %v848 = vadd.f32 %v825, %v845
          %v849 = vadd.f32 %v826, %v845
          %v850 = vadd.f32 %v827, %v845
          %v851 = vadd.f32 %v828, %v845
          %v852 = vadd.f32 %v829, %v845
          %v853 = vadd.f32 %v830, %v845
          %v854 = vadd.f32 %v831, %v845
          %v855 = vadd.f32 %v832, %v845
          %v856 = vadd.f32 %v833, %v845
          %v857 = vadd.f32 %v834, %v845
          %v858 = vadd.f32 %v835, %v845
          %v859 = vadd.f32 %v836, %v845
          %v860 = vadd.f32 %v837, %v845
          %v861 = vadd.f32 %v838, %v845
          %v862 = vadd.f32 %v839, %v845
          %v863 = vpack.c.bf16 %v848, %v847
          %v864 = vpack.c.bf16 %v850, %v849
          %v865 = vpack.c.bf16 %v852, %v851
          %v866 = vpack.c.bf16 %v854, %v853
          %v867 = vpack.c.bf16 %v856, %v855
          %v868 = vpack.c.bf16 %v858, %v857
          %v869 = vpack.c.bf16 %v860, %v859
          %v870 = vpack.c.bf16 %v862, %v861
          %v879 = vunpack.c.l.b16 %v863
          %v880 = vunpack.c.h.b16 %v863
          %v881 = vunpack.c.l.b16 %v864
          %v882 = vunpack.c.h.b16 %v864
          %v883 = vunpack.c.l.b16 %v865
          %v884 = vunpack.c.h.b16 %v865
          %v885 = vunpack.c.l.b16 %v866
          %v886 = vunpack.c.h.b16 %v866
          %v887 = vunpack.c.l.b16 %v867
          %v888 = vunpack.c.h.b16 %v867
          %v889 = vunpack.c.l.b16 %v868
          %v890 = vunpack.c.h.b16 %v868
          %v891 = vunpack.c.l.b16 %v869
          %v892 = vunpack.c.h.b16 %v869
          %v893 = vunpack.c.l.b16 %v870
          %v894 = vunpack.c.h.b16 %v870
          %v895 = vpack.c.b16 %v879, %v879
          %v896 = vpack.c.b16 %v880, %v880
          %v897 = vpack.c.b16 %v881, %v881
          %v898 = vpack.c.b16 %v882, %v882
          %v899 = vpack.c.b16 %v883, %v883
          %v900 = vpack.c.b16 %v884, %v884
          %v901 = vpack.c.b16 %v885, %v885
          %v902 = vpack.c.b16 %v886, %v886
          %v903 = vpack.c.b16 %v887, %v887
          %v904 = vpack.c.b16 %v888, %v888
          %v905 = vpack.c.b16 %v889, %v889
          %v906 = vpack.c.b16 %v890, %v890
          %v907 = vpack.c.b16 %v891, %v891
          %v908 = vpack.c.b16 %v892, %v892
          %v909 = vpack.c.b16 %v893, %v893
          %v910 = vpack.c.b16 %v894, %v894
          %927 = vst [vmem:[%s377] sm:$0xf] %v895
          %928 = vst [vmem:[%s377 + $0x4] sm:$0xf] %v896
          %929 = vst [vmem:[%s377 + $0x8] sm:$0xf] %v897
          %930 = vst [vmem:[%s377 + $0xc] sm:$0xf] %v898
          %931 = vst [vmem:[%s377 + $0x10] sm:$0xf] %v899
          %932 = vst [vmem:[%s377 + $0x14] sm:$0xf] %v900
          %933 = vst [vmem:[%s377 + $0x18] sm:$0xf] %v901
          %934 = vst [vmem:[%s377 + $0x1c] sm:$0xf] %v902
          %935 = vst [vmem:[%s377 + $0x20] sm:$0xf] %v903
          %936 = vst [vmem:[%s377 + $0x24] sm:$0xf] %v904
          %937 = vst [vmem:[%s377 + $0x28] sm:$0xf] %v905
          %938 = vst [vmem:[%s377 + $0x2c] sm:$0xf] %v906
          %939 = vst [vmem:[%s377 + $0x30] sm:$0xf] %v907
          %940 = vst [vmem:[%s377 + $0x34] sm:$0xf] %v908
          %941 = vst [vmem:[%s377 + $0x38] sm:$0xf] %v909
          %942 = vst [vmem:[%s377 + $0x3c] sm:$0xf] %v910
          %v943 = vld [vmem:[#allocation10] sm:$0xf]
          %v944 = vld [vmem:[#allocation10 + $0x4] sm:$0xf]
          %v945 = vld [vmem:[#allocation10 + $0x8] sm:$0xf]
          %v946 = vld [vmem:[#allocation10 + $0xc] sm:$0xf]
          %v947 = vld [vmem:[#allocation10 + $0x10] sm:$0xf]
          %v948 = vld [vmem:[#allocation10 + $0x14] sm:$0xf]
          %v949 = vld [vmem:[#allocation10 + $0x18] sm:$0xf]
          %v950 = vld [vmem:[#allocation10 + $0x1c] sm:$0xf]
          %v951 = vld [vmem:[#allocation10 + $0x20] sm:$0xf]
          %v952 = vld [vmem:[#allocation10 + $0x24] sm:$0xf]
          %v953 = vld [vmem:[#allocation10 + $0x28] sm:$0xf]
          %v954 = vld [vmem:[#allocation10 + $0x2c] sm:$0xf]
          %v955 = vld [vmem:[#allocation10 + $0x30] sm:$0xf]
          %v956 = vld [vmem:[#allocation10 + $0x34] sm:$0xf]
          %v957 = vld [vmem:[#allocation10 + $0x38] sm:$0xf]
          %v958 = vld [vmem:[#allocation10 + $0x3c] sm:$0xf]
          %v975 = vunpack.c.l.b16 %v943
          %v976 = vunpack.c.l.b16 %v944
          %v977 = vunpack.c.l.b16 %v945
          %v978 = vunpack.c.l.b16 %v946
          %v979 = vunpack.c.l.b16 %v947
          %v980 = vunpack.c.l.b16 %v948
          %v981 = vunpack.c.l.b16 %v949
          %v982 = vunpack.c.l.b16 %v950
          %v983 = vunpack.c.l.b16 %v951
          %v984 = vunpack.c.l.b16 %v952
          %v985 = vunpack.c.l.b16 %v953
          %v986 = vunpack.c.l.b16 %v954
          %v987 = vunpack.c.l.b16 %v955
          %v988 = vunpack.c.l.b16 %v956
          %v989 = vunpack.c.l.b16 %v957
          %v990 = vunpack.c.l.b16 %v958
          %v991 = vpack.c.b16 %v976, %v975
          %v992 = vpack.c.b16 %v978, %v977
          %v993 = vpack.c.b16 %v980, %v979
          %v994 = vpack.c.b16 %v982, %v981
          %v995 = vpack.c.b16 %v984, %v983
          %v996 = vpack.c.b16 %v986, %v985
          %v997 = vpack.c.b16 %v988, %v987
          %v998 = vpack.c.b16 %v990, %v989
          %1007 = vmatprep.subr.bf16.mxu0 0
          %1008 = vmatpush1.bf16.msra.mxu0 %v991
          %1009 = vmatprep.subr.bf16.mxu0 0
          %1010 = vmatpush1.bf16.msra.mxu0 %v992
          %1011 = vmatprep.subr.bf16.mxu0 0
          %1012 = vmatpush1.bf16.msra.mxu0 %v993
          %1013 = vmatprep.subr.bf16.mxu0 0
          %1014 = vmatpush1.bf16.msra.mxu0 %v994
          %1015 = vmatprep.subr.bf16.mxu0 0
          %1016 = vmatpush1.bf16.msra.mxu0 %v995
          %1017 = vmatprep.subr.bf16.mxu0 0
          %1018 = vmatpush1.bf16.msra.mxu0 %v996
          %1019 = vmatprep.subr.bf16.mxu0 0
          %1020 = vmatpush1.bf16.msra.mxu0 %v997
          %1021 = vmatprep.subr.bf16.mxu0 0
          %1022 = vmatpush1.bf16.msra.mxu0 %v998
          %1023 = vmatprep.subr.bf16.mxu0 0
          %1024 = vmatpush1.bf16.msra.mxu0 0
          %1025 = vmatprep.subr.bf16.mxu0 0
          %1026 = vmatpush1.bf16.msra.mxu0 0
          %1027 = vmatprep.subr.bf16.mxu0 0
          %1028 = vmatpush1.bf16.msra.mxu0 0
          %1029 = vmatprep.subr.bf16.mxu0 0
          %1030 = vmatpush1.bf16.msra.mxu0 0
          %1031 = vmatprep.subr.bf16.mxu0 0
          %1032 = vmatpush1.bf16.msra.mxu0 0
          %1033 = vmatprep.subr.bf16.mxu0 0
          %1034 = vmatpush1.bf16.msra.mxu0 0
          %1035 = vmatprep.subr.bf16.mxu0 0
          %1036 = vmatpush1.bf16.msra.mxu0 0
          %1037 = vmatprep.subr.bf16.mxu0 0
          %1038 = vmatpush1.bf16.msra.mxu0 0
          %1039 = vmatprep.mubr.bf16.mxu0 0
          %1040 = vmatmul.mubr.bf16.gmra.mrb[0].mxu0 %v863
          %v1041 = vpop.f32.mrb[0].mxu0
          %v1042 = vadd.f32 0.0, %v1041
          %v1043 = vpop.f32.mrb[0].mxu0
          %v1044 = vpop.f32.mrb[0].mxu0
          %v1045 = vadd.f32 0.0, %v1044
          %v1046 = vpop.f32.mrb[0].mxu0
          %1047 = vmatprep.mubr.bf16.mxu0 0
          %1048 = vmatmul.mubr.bf16.gmra.mrb[0].mxu0 %v864
          %v1049 = vpop.f32.mrb[0].mxu0
          %v1050 = vadd.f32 0.0, %v1049
          %v1051 = vpop.f32.mrb[0].mxu0
          %v1052 = vpop.f32.mrb[0].mxu0
          %v1053 = vadd.f32 0.0, %v1052
          %v1054 = vpop.f32.mrb[0].mxu0
          %1055 = vmatprep.mubr.bf16.mxu0 0
          %1056 = vmatmul.mubr.bf16.gmra.mrb[0].mxu0 %v865
          %v1057 = vpop.f32.mrb[0].mxu0
          %v1058 = vadd.f32 0.0, %v1057
          %v1059 = vpop.f32.mrb[0].mxu0
          %v1060 = vpop.f32.mrb[0].mxu0
          %v1061 = vadd.f32 0.0, %v1060
          %v1062 = vpop.f32.mrb[0].mxu0
          %1063 = vmatprep.mubr.bf16.mxu0 0
          %1064 = vmatmul.mubr.bf16.gmra.mrb[0].mxu0 %v866
          %v1065 = vpop.f32.mrb[0].mxu0
          %v1066 = vadd.f32 0.0, %v1065
          %v1067 = vpop.f32.mrb[0].mxu0
          %v1068 = vpop.f32.mrb[0].mxu0
          %v1069 = vadd.f32 0.0, %v1068
          %v1070 = vpop.f32.mrb[0].mxu0
          %1071 = vmatprep.mubr.bf16.mxu0 0
          %1072 = vmatmul.mubr.bf16.gmra.mrb[0].mxu0 %v867
          %v1073 = vpop.f32.mrb[0].mxu0
          %v1074 = vadd.f32 0.0, %v1073
          %v1075 = vpop.f32.mrb[0].mxu0
          %v1076 = vpop.f32.mrb[0].mxu0
          %v1077 = vadd.f32 0.0, %v1076
          %v1078 = vpop.f32.mrb[0].mxu0
          %1079 = vmatprep.mubr.bf16.mxu0 0
          %1080 = vmatmul.mubr.bf16.gmra.mrb[0].mxu0 %v868
          %v1081 = vpop.f32.mrb[0].mxu0
          %v1082 = vadd.f32 0.0, %v1081
          %v1083 = vpop.f32.mrb[0].mxu0
          %v1084 = vpop.f32.mrb[0].mxu0
          %v1085 = vadd.f32 0.0, %v1084
          %v1086 = vpop.f32.mrb[0].mxu0
          %1087 = vmatprep.mubr.bf16.mxu0 0
          %1088 = vmatmul.mubr.bf16.gmra.mrb[0].mxu0 %v869
          %v1089 = vpop.f32.mrb[0].mxu0
          %v1090 = vadd.f32 0.0, %v1089
          %v1091 = vpop.f32.mrb[0].mxu0
          %v1092 = vpop.f32.mrb[0].mxu0
          %v1093 = vadd.f32 0.0, %v1092
          %v1094 = vpop.f32.mrb[0].mxu0
          %1095 = vmatprep.mubr.bf16.mxu0 0
          %1096 = vmatmul.mubr.bf16.gmra.mrb[0].mxu0 %v870
          %v1097 = vpop.f32.mrb[0].mxu0
          %v1098 = vadd.f32 0.0, %v1097
          %v1099 = vpop.f32.mrb[0].mxu0
          %v1100 = vpop.f32.mrb[0].mxu0
          %v1101 = vadd.f32 0.0, %v1100
          %v1102 = vpop.f32.mrb[0].mxu0
          %1103 = vdwg.mxu0
          %v1104 = vmul.f32 %v747, %v1042
          %v1105 = vmul.f32 %v752, %v1045
          %v1106 = vmul.f32 %v757, %v1050
          %v1107 = vmul.f32 %v762, %v1053
          %v1108 = vmul.f32 %v767, %v1058
          %v1109 = vmul.f32 %v772, %v1061
          %v1110 = vmul.f32 %v777, %v1066
          %v1111 = vmul.f32 %v782, %v1069
          %v1112 = vmul.f32 %v787, %v1074
          %v1113 = vmul.f32 %v792, %v1077
          %v1114 = vmul.f32 %v797, %v1082
          %v1115 = vmul.f32 %v802, %v1085
          %v1116 = vmul.f32 %v807, %v1090
          %v1117 = vmul.f32 %v812, %v1093
          %v1118 = vmul.f32 %v817, %v1098
          %v1119 = vmul.f32 %v822, %v1101
          %v1120 = vpack.c.bf16 %v1105, %v1104
          %v1121 = vpack.c.bf16 %v1107, %v1106
          %v1122 = vpack.c.bf16 %v1109, %v1108
          %v1123 = vpack.c.bf16 %v1111, %v1110
          %v1124 = vpack.c.bf16 %v1113, %v1112
          %v1125 = vpack.c.bf16 %v1115, %v1114
          %v1126 = vpack.c.bf16 %v1117, %v1116
          %v1127 = vpack.c.bf16 %v1119, %v1118
          %v1136 = vunpack.c.l.b16 %v1120
          %v1137 = vunpack.c.h.b16 %v1120
          %v1138 = vunpack.c.l.b16 %v1121
          %v1139 = vunpack.c.h.b16 %v1121
          %v1140 = vunpack.c.l.b16 %v1122
          %v1141 = vunpack.c.h.b16 %v1122
          %v1142 = vunpack.c.l.b16 %v1123
          %v1143 = vunpack.c.h.b16 %v1123
          %v1144 = vunpack.c.l.b16 %v1124
          %v1145 = vunpack.c.h.b16 %v1124
          %v1146 = vunpack.c.l.b16 %v1125
          %v1147 = vunpack.c.h.b16 %v1125
          %v1148 = vunpack.c.l.b16 %v1126
          %v1149 = vunpack.c.h.b16 %v1126
          %v1150 = vunpack.c.l.b16 %v1127
          %v1151 = vunpack.c.h.b16 %v1127
          %v1152 = vpack.c.b16 %v1136, %v1136
          %v1153 = vpack.c.b16 %v1137, %v1137
          %v1154 = vpack.c.b16 %v1138, %v1138
          %v1155 = vpack.c.b16 %v1139, %v1139
          %v1156 = vpack.c.b16 %v1140, %v1140
          %v1157 = vpack.c.b16 %v1141, %v1141
          %v1158 = vpack.c.b16 %v1142, %v1142
          %v1159 = vpack.c.b16 %v1143, %v1143
          %v1160 = vpack.c.b16 %v1144, %v1144
          %v1161 = vpack.c.b16 %v1145, %v1145
          %v1162 = vpack.c.b16 %v1146, %v1146
          %v1163 = vpack.c.b16 %v1147, %v1147
          %v1164 = vpack.c.b16 %v1148, %v1148
          %v1165 = vpack.c.b16 %v1149, %v1149
          %v1166 = vpack.c.b16 %v1150, %v1150
          %v1167 = vpack.c.b16 %v1151, %v1151
          %1184 = vst [vmem:[%s384] sm:$0xf] %v1152
          %1185 = vst [vmem:[%s384 + $0x4] sm:$0xf] %v1153
          %1186 = vst [vmem:[%s384 + $0x8] sm:$0xf] %v1154
          %1187 = vst [vmem:[%s384 + $0xc] sm:$0xf] %v1155
          %1188 = vst [vmem:[%s384 + $0x10] sm:$0xf] %v1156
          %1189 = vst [vmem:[%s384 + $0x14] sm:$0xf] %v1157
          %1190 = vst [vmem:[%s384 + $0x18] sm:$0xf] %v1158
          %1191 = vst [vmem:[%s384 + $0x1c] sm:$0xf] %v1159
          %1192 = vst [vmem:[%s384 + $0x20] sm:$0xf] %v1160
          %1193 = vst [vmem:[%s384 + $0x24] sm:$0xf] %v1161
          %1194 = vst [vmem:[%s384 + $0x28] sm:$0xf] %v1162
          %1195 = vst [vmem:[%s384 + $0x2c] sm:$0xf] %v1163
          %1196 = vst [vmem:[%s384 + $0x30] sm:$0xf] %v1164
          %1197 = vst [vmem:[%s384 + $0x34] sm:$0xf] %v1165
          %1198 = vst [vmem:[%s384 + $0x38] sm:$0xf] %v1166
          %1199 = vst [vmem:[%s384 + $0x3c] sm:$0xf] %v1167
        $region68: #{gcn_forward.4} parent=39 // pred_fallthru
          _
        %s1200 = sand.u32 %s171, 1
        %s1201 = scalar_lea.sflag [#allocation5], %s1200
        %s1202 = sand.u32 %s171, 1
        %s1203 = smul.addr %s1202, 64
        %s1204 = scalar_lea.vmem [#allocation12], %s1203
        %s1205 = sand.u32 %s197, 1
        %s1206 = scalar_lea.sflag [#allocation14], %s1205
        %s1207 = sand.u32 %s197, 1
        %s1208 = smul.addr %s1207, 64
        %s1209 = scalar_lea.vmem [#allocation13], %s1208
        // Predicated region
        $region69: #{gcn_forward.4} parent=39 // pred_check
          %p1210 = pneg %p181
        $region70: #{gcn_forward.4} parent=39 // pred_check_branch
          %1212 = sbr.rel (%p1210) target = $region72
        $region71: #{gcn_forward.4} parent=39 // pred_region
          %s1213 = smul.u32 16, %s33
          %s1215 = ssub.s32 1024, 1024
          %1216 = vsyncadd %s1201, %s1215
          %s1217 = smul.addr %s1213, 64
          %s1218 = scalar_lea.hbm %s5, %s1217
          %s1219 = sshll.u32 %s1204, 4
          %s1220 = int_to_ptr.vmem [resolvable:$true] %s1219
          %1225 = dma.vmem_to_hbm [thread:$0]  %s1220, 1024, %s1218, %s1201, 64, 64, 4
        $region72: #{gcn_forward.4} parent=39 // pred_fallthru
          _
        // Predicated region
        $region73: #{gcn_forward.4} parent=39 // pred_check
          %p1226 = pneg %p207
        $region74: #{gcn_forward.4} parent=39 // pred_check_branch
          %1228 = sbr.rel (%p1226) target = $region76
        $region75: #{gcn_forward.4} parent=39 // pred_region
          %s1229 = smul.u32 16, %s33
          %s1231 = ssub.s32 1024, 1024
          %1232 = vsyncadd %s1206, %s1231
          %s1233 = smul.addr %s1229, 64
          %s1234 = scalar_lea.hbm %s6, %s1233
          %s1235 = sshll.u32 %s1209, 4
          %s1236 = int_to_ptr.vmem [resolvable:$true] %s1235
          %1241 = dma.vmem_to_hbm [thread:$0]  %s1236, 1024, %s1234, %s1206, 64, 64, 4
        $region76: #{gcn_forward.4} parent=39 // pred_fallthru
          _
      $region40: #{gcn_forward.4} parent=5 // pred_fallthru
        _
      %p1242 = scmp.le.s32.totalorder 2, %s24
      // Predicated region
      $region77: #{gcn_forward.4} parent=5 // pred_check
        %p1243 = pneg %p1242
      $region78: #{gcn_forward.4} parent=5 // pred_check_branch
        %1245 = sbr.rel (%p1243) target = $region80
      $region79: #{gcn_forward.4} parent=5 // pred_region
        %s1246 = ssub.s32 %s24, 2
        // Predicated region
        $region81: #{gcn_forward.4} parent=79 // pred_check
          %p1247 = pneg %p187
        $region82: #{gcn_forward.4} parent=79 // pred_check_branch
          %1249 = sbr.rel (%p1247) target = $region84
        $region83: #{gcn_forward.4} parent=79 // pred_region
          %s1250 = sand.u32 %s172, 1
          %s1251 = scalar_lea.sflag [#allocation5], %s1250
          %s1252 = sand.u32 %s172, 1
          %s1253 = smul.addr %s1252, 64
          %s1254 = scalar_lea.vmem [#allocation12], %s1253
          %1255 = dma.done %s1251, 1024
        $region84: #{gcn_forward.4} parent=79 // pred_fallthru
          _
        // Predicated region
        $region85: #{gcn_forward.4} parent=79 // pred_check
          %p1256 = pneg %p213
        $region86: #{gcn_forward.4} parent=79 // pred_check_branch
          %1258 = sbr.rel (%p1256) target = $region88
        $region87: #{gcn_forward.4} parent=79 // pred_region
          %s1259 = sand.u32 %s198, 1
          %s1260 = scalar_lea.sflag [#allocation14], %s1259
          %s1261 = sand.u32 %s198, 1
          %s1262 = smul.addr %s1261, 64
          %s1263 = scalar_lea.vmem [#allocation13], %s1262
          %1264 = dma.done %s1260, 1024
        $region88: #{gcn_forward.4} parent=79 // pred_fallthru
          _
      $region80: #{gcn_forward.4} parent=5 // pred_fallthru
        _
    $region6: #{gcn_forward.4} parent=1 // loop_footer
      %s28 = sadd.s32 1, %s24
    $region7: #{gcn_forward.4} parent=1 // loop_footer_branch
      %23 = sbr.rel target = $region3
    $region8: #{gcn_forward.4} parent=1 // loop_exit
      _
    %1265 = vsyncpa [#allocation4], 1
    %s1266 = scalar_lea.sflag [#allocation4], 1
    %1267 = vsyncpa %s1266, 1
    %1268 = vsyncpa [#allocation7], 1
    %1269 = vsyncpa [#allocation11], 1
    %1270 = vsyncpa [#allocation5], 1
    %s1271 = scalar_lea.sflag [#allocation5], 1
    %1272 = vsyncpa %s1271, 1
    %1273 = vsyncpa [#allocation14], 1
    %s1274 = scalar_lea.sflag [#allocation14], 1
    %1275 = vsyncpa %s1274, 1

// kernel: gcn_forward.3
$region0: #{gcn_forward.3}
  #allocation0 [shape = 'u32[]', space=smem, size = 0x4, offset = 0x4, fixed_abs, tag = 'smem constant byte address 0x4 - core index']
  #allocation1 [shape = 'u32[144,128]{1,0:T(1,128)}', space=vmem, size = 0x12000, scoped, tag = 'internal scratch']
  %s0 = inlined_call_operand.vmem [shape: f32[192,16], index: 0, kind: input, shape index: {}]
  %s1 = inlined_call_operand.vmem [shape: f32[64,128], index: 1, kind: input, shape index: {}]
  %s2 = inlined_call_operand.vmem [shape: f32[16,128], index: 2, kind: input, shape index: {}]
  %s3 = inlined_call_operand.vmem [shape: f32[1,128], index: 3, kind: input, shape index: {}]
  %s4 = inlined_call_operand.vmem [shape: f32[128,128], index: 4, kind: input, shape index: {}]
  %s5 = inlined_call_operand.vmem [shape: f32[1,128], index: 5, kind: input, shape index: {}]
  %s6 = inlined_call_operand.vmem [shape: f32[256,1], index: 6, kind: input, shape index: {}]
  %s7 = inlined_call_operand.vmem [shape: bf16[128,128], index: 7, kind: input, shape index: {}]
  %s8 = inlined_call_operand.hbm [shape: bf16[256,128], index: 8, kind: output, shape index: {0}]
  %s9 = inlined_call_operand.hbm [shape: bf16[256,128], index: 9, kind: output, shape index: {1}]
  %10 = xla_tuple %s8, %s9
  %s11 = sld [smem:[#allocation0]]
  $region50: #{gcn_forward.3} parent=0
    _
  %s13 = ssub.s32 1, %s11
  %s14 = scalar_select 0, %s13, %s11
  $region1: #{gcn_forward.3} parent=0
    #allocation2 [shape = 'u8[65536]{0}', space=vmem, size = 0x10000, scoped, tag = 'output window, operand 0, single buffered']
    #allocation3 [shape = 's32[1]{0}', space=sflag, size = 0x4, scoped, tag = 'scoped memory for gcn_forward.3']
    #allocation4 [shape = 'u8[65536]{0}', space=vmem, size = 0x10000, scoped, tag = 'output window, operand 1, single buffered']
    #allocation5 [shape = 's32[1]{0}', space=sflag, size = 0x4, scoped, tag = 'scoped memory for gcn_forward.3']
    %15 = vsyncpa [#allocation3], 0
    %16 = vsyncpa [#allocation5], 0
    // Predicated region
    $region2: #{gcn_forward.3} parent=1 // pred_check
      _
    $region3: #{gcn_forward.3} parent=1 // pred_check_branch
      %18 = sbr.rel (0) target = $region5
    $region4: #{gcn_forward.3} parent=1 // pred_region
      _
    $region5: #{gcn_forward.3} parent=1 // pred_fallthru
      _
    // Predicated region
    $region6: #{gcn_forward.3} parent=1 // pred_check
      _
    $region7: #{gcn_forward.3} parent=1 // pred_check_branch
      %20 = sbr.rel (0) target = $region9
    $region8: #{gcn_forward.3} parent=1 // pred_region
      _
    $region9: #{gcn_forward.3} parent=1 // pred_fallthru
      _
    // Predicated region
    $region10: #{gcn_forward.3} parent=1 // pred_check
      _
    $region11: #{gcn_forward.3} parent=1 // pred_check_branch
      %22 = sbr.rel (0) target = $region13
    $region12: #{gcn_forward.3} parent=1 // pred_region
      _
    $region13: #{gcn_forward.3} parent=1 // pred_fallthru
      _
    // Predicated region
    $region14: #{gcn_forward.3} parent=1 // pred_check
      _
    $region15: #{gcn_forward.3} parent=1 // pred_check_branch
      %24 = sbr.rel (0) target = $region17
    $region16: #{gcn_forward.3} parent=1 // pred_region
      _
    $region17: #{gcn_forward.3} parent=1 // pred_fallthru
      _
    // Predicated region
    $region18: #{gcn_forward.3} parent=1 // pred_check
      _
    $region19: #{gcn_forward.3} parent=1 // pred_check_branch
      %26 = sbr.rel (0) target = $region21
    $region20: #{gcn_forward.3} parent=1 // pred_region
      _
    $region21: #{gcn_forward.3} parent=1 // pred_fallthru
      _
    // Predicated region
    $region22: #{gcn_forward.3} parent=1 // pred_check
      _
    $region23: #{gcn_forward.3} parent=1 // pred_check_branch
      %28 = sbr.rel (0) target = $region25
    $region24: #{gcn_forward.3} parent=1 // pred_region
      _
    $region25: #{gcn_forward.3} parent=1 // pred_fallthru
      _
    // Predicated region
    $region26: #{gcn_forward.3} parent=1 // pred_check
      _
    $region27: #{gcn_forward.3} parent=1 // pred_check_branch
      %30 = sbr.rel (0) target = $region29
    $region28: #{gcn_forward.3} parent=1 // pred_region
      _
    $region29: #{gcn_forward.3} parent=1 // pred_fallthru
      _
    // Predicated region
    $region30: #{gcn_forward.3} parent=1 // pred_check
      _
    $region31: #{gcn_forward.3} parent=1 // pred_check_branch
      %32 = sbr.rel (0) target = $region33
    $region32: #{gcn_forward.3} parent=1 // pred_region
      _
    $region33: #{gcn_forward.3} parent=1 // pred_fallthru
      _
    %v34 = vld [vmem:[%s0] sm:$0xff]
    %v35 = vld [vmem:[%s0 + $0x8] sm:$0xff]
    %v36 = vld [vmem:[%s0 + $0x10] sm:$0xff]
    %v37 = vld [vmem:[%s0 + $0x18] sm:$0xff]
    %v38 = vld [vmem:[%s0 + $0x20] sm:$0xff]
    %v39 = vld [vmem:[%s0 + $0x28] sm:$0xff]
    %v40 = vld [vmem:[%s0 + $0x30] sm:$0xff]
    %v41 = vld [vmem:[%s0 + $0x38] sm:$0xff]
    %v42 = vld [vmem:[%s0 + $0x40] sm:$0xff]
    %v43 = vld [vmem:[%s0 + $0x48] sm:$0xff]
    %v44 = vld [vmem:[%s0 + $0x50] sm:$0xff]
    %v45 = vld [vmem:[%s0 + $0x58] sm:$0xff]
    %v46 = vld [vmem:[%s0 + $0x60] sm:$0xff]
    %v47 = vld [vmem:[%s0 + $0x68] sm:$0xff]
    %v48 = vld [vmem:[%s0 + $0x70] sm:$0xff]
    %v49 = vld [vmem:[%s0 + $0x78] sm:$0xff]
    %v50 = vld [vmem:[%s0 + $0x80] sm:$0xff]
    %v51 = vld [vmem:[%s0 + $0x88] sm:$0xff]
    %v52 = vld [vmem:[%s0 + $0x90] sm:$0xff]
    %v53 = vld [vmem:[%s0 + $0x98] sm:$0xff]
    %v54 = vld [vmem:[%s0 + $0xa0] sm:$0xff]
    %v55 = vld [vmem:[%s0 + $0xa8] sm:$0xff]
    %v56 = vld [vmem:[%s0 + $0xb0] sm:$0xff]
    %v57 = vld [vmem:[%s0 + $0xb8] sm:$0xff]
    %v58 = vld [vmem:[%s2] sm:$0xff]
    %v59 = vld [vmem:[%s2 + $0x8] sm:$0xff]
    %v60 = vld [vmem:[%s3] sm:$0x1]
    %v62 = vlaneseq
    %v63 = vshrl.u32 %v62, 7
    %v64 = vsub.s32 0, %v63
    %v65 = vrot.slane %v60, %v64
    %vm67 = vcmask 130048
    %v69 = vsel %vm67, %v34, 0
    %v72 = vsel %vm67, %v35, 0
    %v75 = vsel %vm67, %v36, 0
    %v78 = vsel %vm67, %v37, 0
    %v81 = vsel %vm67, %v38, 0
    %v84 = vsel %vm67, %v39, 0
    %v87 = vsel %vm67, %v40, 0
    %v90 = vsel %vm67, %v41, 0
    %v93 = vsel %vm67, %v42, 0
    %v96 = vsel %vm67, %v43, 0
    %v99 = vsel %vm67, %v44, 0
    %v102 = vsel %vm67, %v45, 0
    %v105 = vsel %vm67, %v46, 0
    %v108 = vsel %vm67, %v47, 0
    %v111 = vsel %vm67, %v48, 0
    %v114 = vsel %vm67, %v49, 0
    %v117 = vsel %vm67, %v50, 0
    %v120 = vsel %vm67, %v51, 0
    %v123 = vsel %vm67, %v52, 0
    %v126 = vsel %vm67, %v53, 0
    %v129 = vsel %vm67, %v54, 0
    %v132 = vsel %vm67, %v55, 0
    %v135 = vsel %vm67, %v56, 0
    %v138 = vsel %vm67, %v57, 0
    %140 = vmatprep.subr.mxu0 0.0
    %141 = vmatpush1.msra.mxu0 %v58
    %142 = vmatprep.subr.mxu0 0.0
    %143 = vmatpush1.msra.mxu0 %v59
    %144 = vmatprep.subr.mxu0 0.0
    %145 = vmatpush1.msra.mxu0 0.0
    %146 = vmatprep.subr.mxu0 0.0
    %147 = vmatpush1.msra.mxu0 0.0
    %148 = vmatprep.subr.mxu0 0.0
    %149 = vmatpush1.msra.mxu0 0.0
    %150 = vmatprep.subr.mxu0 0.0
    %151 = vmatpush1.msra.mxu0 0.0
    %152 = vmatprep.subr.mxu0 0.0
    %153 = vmatpush1.msra.mxu0 0.0
    %154 = vmatprep.subr.mxu0 0.0
    %155 = vmatpush1.msra.mxu0 0.0
    %156 = vmatprep.subr.mxu0 0.0
    %157 = vmatpush1.msra.mxu0 0.0
    %158 = vmatprep.subr.mxu0 0.0
    %159 = vmatpush1.msra.mxu0 0.0
    %160 = vmatprep.subr.mxu0 0.0
    %161 = vmatpush1.msra.mxu0 0.0
    %162 = vmatprep.subr.mxu0 0.0
    %163 = vmatpush1.msra.mxu0 0.0
    %164 = vmatprep.subr.mxu0 0.0
    %165 = vmatpush1.msra.mxu0 0.0
    %166 = vmatprep.subr.mxu0 0.0
    %167 = vmatpush1.msra.mxu0 0.0
    %168 = vmatprep.subr.mxu0 0.0
    %169 = vmatpush1.msra.mxu0 0.0
    %170 = vmatprep.subr.mxu0 0.0
    %171 = vmatpush1.msra.mxu0 0.0
    %172 = vmatprep.subr.mxu0 0.0
    %173 = vmatpush1.msra.mxu0 0.0
    %174 = vmatprep.subr.mxu0 0.0
    %175 = vmatpush1.msra.mxu0 0.0
    %176 = vmatprep.subr.mxu0 0.0
    %177 = vmatpush1.msra.mxu0 0.0
    %178 = vmatprep.subr.mxu0 0.0
    %179 = vmatpush1.msra.mxu0 0.0
    %180 = vmatprep.subr.mxu0 0.0
    %181 = vmatpush1.msra.mxu0 0.0
    %182 = vmatprep.subr.mxu0 0.0
    %183 = vmatpush1.msra.mxu0 0.0
    %184 = vmatprep.subr.mxu0 0.0
    %185 = vmatpush1.msra.mxu0 0.0
    %186 = vmatprep.subr.mxu0 0.0
    %187 = vmatpush1.msra.mxu0 0.0
    %188 = vmatprep.subr.mxu0 0.0
    %189 = vmatpush1.msra.mxu0 0.0
    %190 = vmatprep.subr.mxu0 0.0
    %191 = vmatpush1.msra.mxu0 0.0
    %192 = vmatprep.subr.mxu0 0.0
    %193 = vmatpush1.msra.mxu0 0.0
    %194 = vmatprep.subr.mxu0 0.0
    %195 = vmatpush1.msra.mxu0 0.0
    %196 = vmatprep.subr.mxu0 0.0
    %197 = vmatpush1.msra.mxu0 0.0
    %198 = vmatprep.subr.mxu0 0.0
    %199 = vmatpush1.msra.mxu0 0.0
    %200 = vmatprep.subr.mxu0 0.0
    %201 = vmatpush1.msra.mxu0 0.0
    %202 = vmatprep.subr.mxu0 0.0
    %203 = vmatpush1.msra.mxu0 0.0
    %204 = vmatprep.mubr.f32.mxu0 0.0
    %205 = vmatmul.mubr.f32.gmra.mrb[0].mxu0 %v69
    %v206 = vpop.f32.mrb[0].mxu0
    %v207 = vadd.f32 %v65, %v206
    %v208 = vpop.f32.mrb[0].mxu0
    %209 = vmatprep.mubr.f32.mxu0 0.0
    %210 = vmatmul.mubr.f32.gmra.mrb[0].mxu0 %v72
    %v211 = vpop.f32.mrb[0].mxu0
    %v212 = vadd.f32 %v65, %v211
    %v213 = vpop.f32.mrb[0].mxu0
    %214 = vmatprep.mubr.f32.mxu0 0.0
    %215 = vmatmul.mubr.f32.gmra.mrb[0].mxu0 %v75
    %v216 = vpop.f32.mrb[0].mxu0
    %v217 = vadd.f32 %v65, %v216
    %v218 = vpop.f32.mrb[0].mxu0
    %219 = vmatprep.mubr.f32.mxu0 0.0
    %220 = vmatmul.mubr.f32.gmra.mrb[0].mxu0 %v78
    %v221 = vpop.f32.mrb[0].mxu0
    %v222 = vadd.f32 %v65, %v221
    %v223 = vpop.f32.mrb[0].mxu0
    %224 = vmatprep.mubr.f32.mxu0 0.0
    %225 = vmatmul.mubr.f32.gmra.mrb[0].mxu0 %v81
    %v226 = vpop.f32.mrb[0].mxu0
    %v227 = vadd.f32 %v65, %v226
    %v228 = vpop.f32.mrb[0].mxu0
    %229 = vmatprep.mubr.f32.mxu0 0.0
    %230 = vmatmul.mubr.f32.gmra.mrb[0].mxu0 %v84
    %v231 = vpop.f32.mrb[0].mxu0
    %v232 = vadd.f32 %v65, %v231
    %v233 = vpop.f32.mrb[0].mxu0
    %234 = vmatprep.mubr.f32.mxu0 0.0
    %235 = vmatmul.mubr.f32.gmra.mrb[0].mxu0 %v87
    %v236 = vpop.f32.mrb[0].mxu0
    %v237 = vadd.f32 %v65, %v236
    %v238 = vpop.f32.mrb[0].mxu0
    %239 = vmatprep.mubr.f32.mxu0 0.0
    %240 = vmatmul.mubr.f32.gmra.mrb[0].mxu0 %v90
    %v241 = vpop.f32.mrb[0].mxu0
    %v242 = vadd.f32 %v65, %v241
    %v243 = vpop.f32.mrb[0].mxu0
    %244 = vmatprep.mubr.f32.mxu0 0.0
    %245 = vmatmul.mubr.f32.gmra.mrb[0].mxu0 %v93
    %v246 = vpop.f32.mrb[0].mxu0
    %v247 = vadd.f32 %v65, %v246
    %v248 = vpop.f32.mrb[0].mxu0
    %249 = vmatprep.mubr.f32.mxu0 0.0
    %250 = vmatmul.mubr.f32.gmra.mrb[0].mxu0 %v96
    %v251 = vpop.f32.mrb[0].mxu0
    %v252 = vadd.f32 %v65, %v251
    %v253 = vpop.f32.mrb[0].mxu0
    %254 = vmatprep.mubr.f32.mxu0 0.0
    %255 = vmatmul.mubr.f32.gmra.mrb[0].mxu0 %v99
    %v256 = vpop.f32.mrb[0].mxu0
    %v257 = vadd.f32 %v65, %v256
    %v258 = vpop.f32.mrb[0].mxu0
    %259 = vmatprep.mubr.f32.mxu0 0.0
    %260 = vmatmul.mubr.f32.gmra.mrb[0].mxu0 %v102
    %v261 = vpop.f32.mrb[0].mxu0
    %v262 = vadd.f32 %v65, %v261
    %v263 = vpop.f32.mrb[0].mxu0
    %264 = vmatprep.mubr.f32.mxu0 0.0
    %265 = vmatmul.mubr.f32.gmra.mrb[0].mxu0 %v105
    %v266 = vpop.f32.mrb[0].mxu0
    %v267 = vadd.f32 %v65, %v266
    %v268 = vpop.f32.mrb[0].mxu0
    %269 = vmatprep.mubr.f32.mxu0 0.0
    %270 = vmatmul.mubr.f32.gmra.mrb[0].mxu0 %v108
    %v271 = vpop.f32.mrb[0].mxu0
    %v272 = vadd.f32 %v65, %v271
    %v273 = vpop.f32.mrb[0].mxu0
    %274 = vmatprep.mubr.f32.mxu0 0.0
    %275 = vmatmul.mubr.f32.gmra.mrb[0].mxu0 %v111
    %v276 = vpop.f32.mrb[0].mxu0
    %v277 = vadd.f32 %v65, %v276
    %v278 = vpop.f32.mrb[0].mxu0
    %279 = vmatprep.mubr.f32.mxu0 0.0
    %280 = vmatmul.mubr.f32.gmra.mrb[0].mxu0 %v114
    %v281 = vpop.f32.mrb[0].mxu0
    %v282 = vadd.f32 %v65, %v281
    %v283 = vpop.f32.mrb[0].mxu0
    %284 = vmatprep.mubr.f32.mxu0 0.0
    %285 = vmatmul.mubr.f32.gmra.mrb[0].mxu0 %v117
    %v286 = vpop.f32.mrb[0].mxu0
    %v287 = vadd.f32 %v65, %v286
    %v288 = vpop.f32.mrb[0].mxu0
    %289 = vmatprep.mubr.f32.mxu0 0.0
    %290 = vmatmul.mubr.f32.gmra.mrb[0].mxu0 %v120
    %v291 = vpop.f32.mrb[0].mxu0
    %v292 = vadd.f32 %v65, %v291
    %v293 = vpop.f32.mrb[0].mxu0
    %294 = vmatprep.mubr.f32.mxu0 0.0
    %295 = vmatmul.mubr.f32.gmra.mrb[0].mxu0 %v123
    %v296 = vpop.f32.mrb[0].mxu0
    %v297 = vadd.f32 %v65, %v296
    %v298 = vpop.f32.mrb[0].mxu0
    %299 = vmatprep.mubr.f32.mxu0 0.0
    %300 = vmatmul.mubr.f32.gmra.mrb[0].mxu0 %v126
    %v301 = vpop.f32.mrb[0].mxu0
    %v302 = vadd.f32 %v65, %v301
    %v303 = vpop.f32.mrb[0].mxu0
    %304 = vmatprep.mubr.f32.mxu0 0.0
    %305 = vmatmul.mubr.f32.gmra.mrb[0].mxu0 %v129
    %v306 = vpop.f32.mrb[0].mxu0
    %v307 = vadd.f32 %v65, %v306
    %v308 = vpop.f32.mrb[0].mxu0
    %309 = vmatprep.mubr.f32.mxu0 0.0
    %310 = vmatmul.mubr.f32.gmra.mrb[0].mxu0 %v132
    %v311 = vpop.f32.mrb[0].mxu0
    %v312 = vadd.f32 %v65, %v311
    %v313 = vpop.f32.mrb[0].mxu0
    %314 = vmatprep.mubr.f32.mxu0 0.0
    %315 = vmatmul.mubr.f32.gmra.mrb[0].mxu0 %v135
    %v316 = vpop.f32.mrb[0].mxu0
    %v317 = vadd.f32 %v65, %v316
    %v318 = vpop.f32.mrb[0].mxu0
    %319 = vmatprep.mubr.f32.mxu0 0.0
    %320 = vmatmul.mubr.f32.gmra.mrb[0].mxu0 %v138
    %v321 = vpop.f32.mrb[0].mxu0
    %v322 = vadd.f32 %v65, %v321
    %v323 = vpop.f32.mrb[0].mxu0
    %324 = vdwg.mxu0
    %vm325 = vcmp.ge.f32.partialorder %v207, 0.0
    %vm326 = vcmp.ge.f32.partialorder %v212, 0.0
    %vm327 = vcmp.ge.f32.partialorder %v217, 0.0
    %vm328 = vcmp.ge.f32.partialorder %v222, 0.0
    %vm329 = vcmp.ge.f32.partialorder %v227, 0.0
    %vm330 = vcmp.ge.f32.partialorder %v232, 0.0
    %vm331 = vcmp.ge.f32.partialorder %v237, 0.0
    %vm332 = vcmp.ge.f32.partialorder %v242, 0.0
    %vm333 = vcmp.ge.f32.partialorder %v247, 0.0
    %vm334 = vcmp.ge.f32.partialorder %v252, 0.0
    %vm335 = vcmp.ge.f32.partialorder %v257, 0.0
    %vm336 = vcmp.ge.f32.partialorder %v262, 0.0
    %vm337 = vcmp.ge.f32.partialorder %v267, 0.0
    %vm338 = vcmp.ge.f32.partialorder %v272, 0.0
    %vm339 = vcmp.ge.f32.partialorder %v277, 0.0
    %vm340 = vcmp.ge.f32.partialorder %v282, 0.0
    %vm341 = vcmp.ge.f32.partialorder %v287, 0.0
    %vm342 = vcmp.ge.f32.partialorder %v292, 0.0
    %vm343 = vcmp.ge.f32.partialorder %v297, 0.0
    %vm344 = vcmp.ge.f32.partialorder %v302, 0.0
    %vm345 = vcmp.ge.f32.partialorder %v307, 0.0
    %vm346 = vcmp.ge.f32.partialorder %v312, 0.0
    %vm347 = vcmp.ge.f32.partialorder %v317, 0.0
    %vm348 = vcmp.ge.f32.partialorder %v322, 0.0
    %v349 = vmul.f32 %v207, 0.01
    %v350 = vmul.f32 %v212, 0.01
    %v351 = vmul.f32 %v217, 0.01
    %v352 = vmul.f32 %v222, 0.01
    %v353 = vmul.f32 %v227, 0.01
    %v354 = vmul.f32 %v232, 0.01
    %v355 = vmul.f32 %v237, 0.01
    %v356 = vmul.f32 %v242, 0.01
    %v357 = vmul.f32 %v247, 0.01
    %v358 = vmul.f32 %v252, 0.01
    %v359 = vmul.f32 %v257, 0.01
    %v360 = vmul.f32 %v262, 0.01
    %v361 = vmul.f32 %v267, 0.01
    %v362 = vmul.f32 %v272, 0.01
    %v363 = vmul.f32 %v277, 0.01
    %v364 = vmul.f32 %v282, 0.01
    %v365 = vmul.f32 %v287, 0.01
    %v366 = vmul.f32 %v292, 0.01
    %v367 = vmul.f32 %v297, 0.01
    %v368 = vmul.f32 %v302, 0.01
    %v369 = vmul.f32 %v307, 0.01
    %v370 = vmul.f32 %v312, 0.01
    %v371 = vmul.f32 %v317, 0.01
    %v372 = vmul.f32 %v322, 0.01
    %v373 = vsel %vm325, %v207, %v349
    %v374 = vsel %vm326, %v212, %v350
    %v375 = vsel %vm327, %v217, %v351
    %v376 = vsel %vm328, %v222, %v352
    %v377 = vsel %vm329, %v227, %v353
    %v378 = vsel %vm330, %v232, %v354
    %v379 = vsel %vm331, %v237, %v355
    %v380 = vsel %vm332, %v242, %v356
    %v381 = vsel %vm333, %v247, %v357
    %v382 = vsel %vm334, %v252, %v358
    %v383 = vsel %vm335, %v257, %v359
    %v384 = vsel %vm336, %v262, %v360
    %v385 = vsel %vm337, %v267, %v361
    %v386 = vsel %vm338, %v272, %v362
    %v387 = vsel %vm339, %v277, %v363
    %v388 = vsel %vm340, %v282, %v364
    %v389 = vsel %vm341, %v287, %v365
    %v390 = vsel %vm342, %v292, %v366
    %v391 = vsel %vm343, %v297, %v367
    %v392 = vsel %vm344, %v302, %v368
    %v393 = vsel %vm345, %v307, %v369
    %v394 = vsel %vm346, %v312, %v370
    %v395 = vsel %vm347, %v317, %v371
    %v396 = vsel %vm348, %v322, %v372
    %v397 = vld [vmem:[%s4] sm:$0xff]
    %v398 = vld [vmem:[%s4 + $0x8] sm:$0xff]
    %v399 = vld [vmem:[%s4 + $0x10] sm:$0xff]
    %v400 = vld [vmem:[%s4 + $0x18] sm:$0xff]
    %v401 = vld [vmem:[%s4 + $0x20] sm:$0xff]
    %v402 = vld [vmem:[%s4 + $0x28] sm:$0xff]
    %v403 = vld [vmem:[%s4 + $0x30] sm:$0xff]
    %v404 = vld [vmem:[%s4 + $0x38] sm:$0xff]
    %v405 = vld [vmem:[%s4 + $0x40] sm:$0xff]
    %v406 = vld [vmem:[%s4 + $0x48] sm:$0xff]
    %v407 = vld [vmem:[%s4 + $0x50] sm:$0xff]
    %v408 = vld [vmem:[%s4 + $0x58] sm:$0xff]
    %v409 = vld [vmem:[%s4 + $0x60] sm:$0xff]
    %v410 = vld [vmem:[%s4 + $0x68] sm:$0xff]
    %v411 = vld [vmem:[%s4 + $0x70] sm:$0xff]
    %v412 = vld [vmem:[%s4 + $0x78] sm:$0xff]
    %v413 = vld [vmem:[%s5] sm:$0x1]
    %v415 = vlaneseq
    %v416 = vshrl.u32 %v415, 7
    %v417 = vsub.s32 0, %v416
    %v418 = vrot.slane %v413, %v417
    %420 = vmatprep.subr.mxu0 0.0
    %421 = vmatpush1.msra.mxu0 %v397
    %422 = vmatprep.subr.mxu0 0.0
    %423 = vmatpush1.msra.mxu0 %v398
    %424 = vmatprep.subr.mxu0 0.0
    %425 = vmatpush1.msra.mxu0 %v399
    %426 = vmatprep.subr.mxu0 0.0
    %427 = vmatpush1.msra.mxu0 %v400
    %428 = vmatprep.subr.mxu0 0.0
    %429 = vmatpush1.msra.mxu0 %v401
    %430 = vmatprep.subr.mxu0 0.0
    %431 = vmatpush1.msra.mxu0 %v402
    %432 = vmatprep.subr.mxu0 0.0
    %433 = vmatpush1.msra.mxu0 %v403
    %434 = vmatprep.subr.mxu0 0.0
    %435 = vmatpush1.msra.mxu0 %v404
    %436 = vmatprep.subr.mxu0 0.0
    %437 = vmatpush1.msra.mxu0 %v405
    %438 = vmatprep.subr.mxu0 0.0
    %439 = vmatpush1.msra.mxu0 %v406
    %440 = vmatprep.subr.mxu0 0.0
    %441 = vmatpush1.msra.mxu0 %v407
    %442 = vmatprep.subr.mxu0 0.0
    %443 = vmatpush1.msra.mxu0 %v408
    %444 = vmatprep.subr.mxu0 0.0
    %445 = vmatpush1.msra.mxu0 %v409
    %446 = vmatprep.subr.mxu0 0.0
    %447 = vmatpush1.msra.mxu0 %v410
    %448 = vmatprep.subr.mxu0 0.0
    %449 = vmatpush1.msra.mxu0 %v411
    %450 = vmatprep.subr.mxu0 0.0
    %451 = vmatpush1.msra.mxu0 %v412
    %452 = vmatprep.subr.mxu0 0.0
    %453 = vmatpush1.msra.mxu0 0.0
    %454 = vmatprep.subr.mxu0 0.0
    %455 = vmatpush1.msra.mxu0 0.0
    %456 = vmatprep.subr.mxu0 0.0
    %457 = vmatpush1.msra.mxu0 0.0
    %458 = vmatprep.subr.mxu0 0.0
    %459 = vmatpush1.msra.mxu0 0.0
    %460 = vmatprep.subr.mxu0 0.0
    %461 = vmatpush1.msra.mxu0 0.0
    %462 = vmatprep.subr.mxu0 0.0
    %463 = vmatpush1.msra.mxu0 0.0
    %464 = vmatprep.subr.mxu0 0.0
    %465 = vmatpush1.msra.mxu0 0.0
    %466 = vmatprep.subr.mxu0 0.0
    %467 = vmatpush1.msra.mxu0 0.0
    %468 = vmatprep.subr.mxu0 0.0
    %469 = vmatpush1.msra.mxu0 0.0
    %470 = vmatprep.subr.mxu0 0.0
    %471 = vmatpush1.msra.mxu0 0.0
    %472 = vmatprep.subr.mxu0 0.0
    %473 = vmatpush1.msra.mxu0 0.0
    %474 = vmatprep.subr.mxu0 0.0
    %475 = vmatpush1.msra.mxu0 0.0
    %476 = vmatprep.subr.mxu0 0.0
    %477 = vmatpush1.msra.mxu0 0.0
    %478 = vmatprep.subr.mxu0 0.0
    %479 = vmatpush1.msra.mxu0 0.0
    %480 = vmatprep.subr.mxu0 0.0
    %481 = vmatpush1.msra.mxu0 0.0
    %482 = vmatprep.subr.mxu0 0.0
    %483 = vmatpush1.msra.mxu0 0.0
    %484 = vmatprep.mubr.f32.mxu0 0.0
    %485 = vmatmul.mubr.f32.gmra.mrb[0].mxu0 %v373
    %v486 = vpop.f32.mrb[0].mxu0
    %v487 = vadd.f32 %v418, %v486
    %v488 = vpop.f32.mrb[0].mxu0
    %489 = vmatprep.mubr.f32.mxu0 0.0
    %490 = vmatmul.mubr.f32.gmra.mrb[0].mxu0 %v374
    %v491 = vpop.f32.mrb[0].mxu0
    %v492 = vadd.f32 %v418, %v491
    %v493 = vpop.f32.mrb[0].mxu0
    %494 = vmatprep.mubr.f32.mxu0 0.0
    %495 = vmatmul.mubr.f32.gmra.mrb[0].mxu0 %v375
    %v496 = vpop.f32.mrb[0].mxu0
    %v497 = vadd.f32 %v418, %v496
    %v498 = vpop.f32.mrb[0].mxu0
    %499 = vmatprep.mubr.f32.mxu0 0.0
    %500 = vmatmul.mubr.f32.gmra.mrb[0].mxu0 %v376
    %v501 = vpop.f32.mrb[0].mxu0
    %v502 = vadd.f32 %v418, %v501
    %v503 = vpop.f32.mrb[0].mxu0
    %504 = vmatprep.mubr.f32.mxu0 0.0
    %505 = vmatmul.mubr.f32.gmra.mrb[0].mxu0 %v377
    %v506 = vpop.f32.mrb[0].mxu0
    %v507 = vadd.f32 %v418, %v506
    %v508 = vpop.f32.mrb[0].mxu0
    %509 = vmatprep.mubr.f32.mxu0 0.0
    %510 = vmatmul.mubr.f32.gmra.mrb[0].mxu0 %v378
    %v511 = vpop.f32.mrb[0].mxu0
    %v512 = vadd.f32 %v418, %v511
    %v513 = vpop.f32.mrb[0].mxu0
    %514 = vmatprep.mubr.f32.mxu0 0.0
    %515 = vmatmul.mubr.f32.gmra.mrb[0].mxu0 %v379
    %v516 = vpop.f32.mrb[0].mxu0
    %v517 = vadd.f32 %v418, %v516
    %v518 = vpop.f32.mrb[0].mxu0
    %519 = vmatprep.mubr.f32.mxu0 0.0
    %520 = vmatmul.mubr.f32.gmra.mrb[0].mxu0 %v380
    %v521 = vpop.f32.mrb[0].mxu0
    %v522 = vadd.f32 %v418, %v521
    %v523 = vpop.f32.mrb[0].mxu0
    %524 = vmatprep.mubr.f32.mxu0 0.0
    %525 = vmatmul.mubr.f32.gmra.mrb[0].mxu0 %v381
    %v526 = vpop.f32.mrb[0].mxu0
    %v527 = vadd.f32 %v418, %v526
    %v528 = vpop.f32.mrb[0].mxu0
    %529 = vmatprep.mubr.f32.mxu0 0.0
    %530 = vmatmul.mubr.f32.gmra.mrb[0].mxu0 %v382
    %v531 = vpop.f32.mrb[0].mxu0
    %v532 = vadd.f32 %v418, %v531
    %v533 = vpop.f32.mrb[0].mxu0
    %534 = vmatprep.mubr.f32.mxu0 0.0
    %535 = vmatmul.mubr.f32.gmra.mrb[0].mxu0 %v383
    %v536 = vpop.f32.mrb[0].mxu0
    %v537 = vadd.f32 %v418, %v536
    %v538 = vpop.f32.mrb[0].mxu0
    %539 = vmatprep.mubr.f32.mxu0 0.0
    %540 = vmatmul.mubr.f32.gmra.mrb[0].mxu0 %v384
    %v541 = vpop.f32.mrb[0].mxu0
    %v542 = vadd.f32 %v418, %v541
    %v543 = vpop.f32.mrb[0].mxu0
    %544 = vmatprep.mubr.f32.mxu0 0.0
    %545 = vmatmul.mubr.f32.gmra.mrb[0].mxu0 %v385
    %v546 = vpop.f32.mrb[0].mxu0
    %v547 = vadd.f32 %v418, %v546
    %v548 = vpop.f32.mrb[0].mxu0
    %549 = vmatprep.mubr.f32.mxu0 0.0
    %550 = vmatmul.mubr.f32.gmra.mrb[0].mxu0 %v386
    %v551 = vpop.f32.mrb[0].mxu0
    %v552 = vadd.f32 %v418, %v551
    %v553 = vpop.f32.mrb[0].mxu0
    %554 = vmatprep.mubr.f32.mxu0 0.0
    %555 = vmatmul.mubr.f32.gmra.mrb[0].mxu0 %v387
    %v556 = vpop.f32.mrb[0].mxu0
    %v557 = vadd.f32 %v418, %v556
    %v558 = vpop.f32.mrb[0].mxu0
    %559 = vmatprep.mubr.f32.mxu0 0.0
    %560 = vmatmul.mubr.f32.gmra.mrb[0].mxu0 %v388
    %v561 = vpop.f32.mrb[0].mxu0
    %v562 = vadd.f32 %v418, %v561
    %v563 = vpop.f32.mrb[0].mxu0
    %564 = vmatprep.mubr.f32.mxu0 0.0
    %565 = vmatmul.mubr.f32.gmra.mrb[0].mxu0 %v389
    %v566 = vpop.f32.mrb[0].mxu0
    %v567 = vadd.f32 %v418, %v566
    %v568 = vpop.f32.mrb[0].mxu0
    %569 = vmatprep.mubr.f32.mxu0 0.0
    %570 = vmatmul.mubr.f32.gmra.mrb[0].mxu0 %v390
    %v571 = vpop.f32.mrb[0].mxu0
    %v572 = vadd.f32 %v418, %v571
    %v573 = vpop.f32.mrb[0].mxu0
    %574 = vmatprep.mubr.f32.mxu0 0.0
    %575 = vmatmul.mubr.f32.gmra.mrb[0].mxu0 %v391
    %v576 = vpop.f32.mrb[0].mxu0
    %v577 = vadd.f32 %v418, %v576
    %v578 = vpop.f32.mrb[0].mxu0
    %579 = vmatprep.mubr.f32.mxu0 0.0
    %580 = vmatmul.mubr.f32.gmra.mrb[0].mxu0 %v392
    %v581 = vpop.f32.mrb[0].mxu0
    %v582 = vadd.f32 %v418, %v581
    %v583 = vpop.f32.mrb[0].mxu0
    %584 = vmatprep.mubr.f32.mxu0 0.0
    %585 = vmatmul.mubr.f32.gmra.mrb[0].mxu0 %v393
    %v586 = vpop.f32.mrb[0].mxu0
    %v587 = vadd.f32 %v418, %v586
    %v588 = vpop.f32.mrb[0].mxu0
    %589 = vmatprep.mubr.f32.mxu0 0.0
    %590 = vmatmul.mubr.f32.gmra.mrb[0].mxu0 %v394
    %v591 = vpop.f32.mrb[0].mxu0
    %v592 = vadd.f32 %v418, %v591
    %v593 = vpop.f32.mrb[0].mxu0
    %594 = vmatprep.mubr.f32.mxu0 0.0
    %595 = vmatmul.mubr.f32.gmra.mrb[0].mxu0 %v395
    %v596 = vpop.f32.mrb[0].mxu0
    %v597 = vadd.f32 %v418, %v596
    %v598 = vpop.f32.mrb[0].mxu0
    %599 = vmatprep.mubr.f32.mxu0 0.0
    %600 = vmatmul.mubr.f32.gmra.mrb[0].mxu0 %v396
    %v601 = vpop.f32.mrb[0].mxu0
    %v602 = vadd.f32 %v418, %v601
    %v603 = vpop.f32.mrb[0].mxu0
    %604 = vdwg.mxu0
    %v605 = vld [vmem:[%s1] sm:$0xff]
    %v606 = vld [vmem:[%s1 + $0x8] sm:$0xff]
    %v607 = vld [vmem:[%s1 + $0x10] sm:$0xff]
    %v608 = vld [vmem:[%s1 + $0x18] sm:$0xff]
    %v609 = vld [vmem:[%s1 + $0x20] sm:$0xff]
    %v610 = vld [vmem:[%s1 + $0x28] sm:$0xff]
    %v611 = vld [vmem:[%s1 + $0x30] sm:$0xff]
    %v612 = vld [vmem:[%s1 + $0x38] sm:$0xff]
    %v613 = vmul.f32 %v605, %v605
    %v614 = vmul.f32 %v606, %v606
    %v615 = vmul.f32 %v607, %v607
    %v616 = vmul.f32 %v608, %v608
    %v617 = vmul.f32 %v609, %v609
    %v618 = vmul.f32 %v610, %v610
    %v619 = vmul.f32 %v611, %v611
    %v620 = vmul.f32 %v612, %v612
    %621 = vadd.xlane.f32.xlu0 %v613
    %v622 = vpop.xlane.xlu0 %621
    %623 = vadd.xlane.f32.xlu0 %v614
    %v624 = vpop.xlane.xlu0 %623
    %625 = vadd.xlane.f32.xlu0 %v615
    %v626 = vpop.xlane.xlu0 %625
    %627 = vadd.xlane.f32.xlu0 %v616
    %v628 = vpop.xlane.xlu0 %627
    %629 = vadd.xlane.f32.xlu0 %v617
    %v630 = vpop.xlane.xlu0 %629
    %631 = vadd.xlane.f32.xlu0 %v618
    %v632 = vpop.xlane.xlu0 %631
    %633 = vadd.xlane.f32.xlu0 %v619
    %v634 = vpop.xlane.xlu0 %633
    %635 = vadd.xlane.f32.xlu0 %v620
    %v636 = vpop.xlane.xlu0 %635
    %v637 = vmax.f32 %v622, 1e-24
    %v638 = vmax.f32 %v624, 1e-24
    %v639 = vmax.f32 %v626, 1e-24
    %v640 = vmax.f32 %v628, 1e-24
    %v641 = vmax.f32 %v630, 1e-24
    %v642 = vmax.f32 %v632, 1e-24
    %v643 = vmax.f32 %v634, 1e-24
    %v644 = vmax.f32 %v636, 1e-24
    %v645 = vrsqrt.pop %v637
    %v646 = vrsqrt.pop %v638
    %v647 = vrsqrt.pop %v639
    %v648 = vrsqrt.pop %v640
    %v649 = vrsqrt.pop %v641
    %v650 = vrsqrt.pop %v642
    %v651 = vrsqrt.pop %v643
    %v652 = vrsqrt.pop %v644
    %v653 = vmul.f32 %v605, %v645
    %v654 = vmul.f32 %v606, %v646
    %v655 = vmul.f32 %v607, %v647
    %v656 = vmul.f32 %v608, %v648
    %v657 = vmul.f32 %v609, %v649
    %v658 = vmul.f32 %v610, %v650
    %v659 = vmul.f32 %v611, %v651
    %v660 = vmul.f32 %v612, %v652
    %v661 = vmul.f32 %v487, %v487
    %v662 = vmul.f32 %v492, %v492
    %v663 = vmul.f32 %v497, %v497
    %v664 = vmul.f32 %v502, %v502
    %v665 = vmul.f32 %v507, %v507
    %v666 = vmul.f32 %v512, %v512
    %v667 = vmul.f32 %v517, %v517
    %v668 = vmul.f32 %v522, %v522
    %v669 = vmul.f32 %v527, %v527
    %v670 = vmul.f32 %v532, %v532
    %v671 = vmul.f32 %v537, %v537
    %v672 = vmul.f32 %v542, %v542
    %v673 = vmul.f32 %v547, %v547
    %v674 = vmul.f32 %v552, %v552
    %v675 = vmul.f32 %v557, %v557
    %v676 = vmul.f32 %v562, %v562
    %v677 = vmul.f32 %v567, %v567
    %v678 = vmul.f32 %v572, %v572
    %v679 = vmul.f32 %v577, %v577
    %v680 = vmul.f32 %v582, %v582
    %v681 = vmul.f32 %v587, %v587
    %v682 = vmul.f32 %v592, %v592
    %v683 = vmul.f32 %v597, %v597
    %v684 = vmul.f32 %v602, %v602
    %685 = vadd.xlane.f32.xlu0 %v661
    %v686 = vpop.xlane.xlu0 %685
    %687 = vadd.xlane.f32.xlu0 %v662
    %v688 = vpop.xlane.xlu0 %687
    %689 = vadd.xlane.f32.xlu0 %v663
    %v690 = vpop.xlane.xlu0 %689
    %691 = vadd.xlane.f32.xlu0 %v664
    %v692 = vpop.xlane.xlu0 %691
    %693 = vadd.xlane.f32.xlu0 %v665
    %v694 = vpop.xlane.xlu0 %693
    %695 = vadd.xlane.f32.xlu0 %v666
    %v696 = vpop.xlane.xlu0 %695
    %697 = vadd.xlane.f32.xlu0 %v667
    %v698 = vpop.xlane.xlu0 %697
    %699 = vadd.xlane.f32.xlu0 %v668
    %v700 = vpop.xlane.xlu0 %699
    %701 = vadd.xlane.f32.xlu0 %v669
    %v702 = vpop.xlane.xlu0 %701
    %703 = vadd.xlane.f32.xlu0 %v670
    %v704 = vpop.xlane.xlu0 %703
    %705 = vadd.xlane.f32.xlu0 %v671
    %v706 = vpop.xlane.xlu0 %705
    %707 = vadd.xlane.f32.xlu0 %v672
    %v708 = vpop.xlane.xlu0 %707
    %709 = vadd.xlane.f32.xlu0 %v673
    %v710 = vpop.xlane.xlu0 %709
    %711 = vadd.xlane.f32.xlu0 %v674
    %v712 = vpop.xlane.xlu0 %711
    %713 = vadd.xlane.f32.xlu0 %v675
    %v714 = vpop.xlane.xlu0 %713
    %715 = vadd.xlane.f32.xlu0 %v676
    %v716 = vpop.xlane.xlu0 %715
    %717 = vadd.xlane.f32.xlu0 %v677
    %v718 = vpop.xlane.xlu0 %717
    %719 = vadd.xlane.f32.xlu0 %v678
    %v720 = vpop.xlane.xlu0 %719
    %721 = vadd.xlane.f32.xlu0 %v679
    %v722 = vpop.xlane.xlu0 %721
    %723 = vadd.xlane.f32.xlu0 %v680
    %v724 = vpop.xlane.xlu0 %723
    %725 = vadd.xlane.f32.xlu0 %v681
    %v726 = vpop.xlane.xlu0 %725
    %727 = vadd.xlane.f32.xlu0 %v682
    %v728 = vpop.xlane.xlu0 %727
    %729 = vadd.xlane.f32.xlu0 %v683
    %v730 = vpop.xlane.xlu0 %729
    %731 = vadd.xlane.f32.xlu0 %v684
    %v732 = vpop.xlane.xlu0 %731
    %v733 = vmax.f32 %v686, 1e-24
    %v734 = vmax.f32 %v688, 1e-24
    %v735 = vmax.f32 %v690, 1e-24
    %v736 = vmax.f32 %v692, 1e-24
    %v737 = vmax.f32 %v694, 1e-24
    %v738 = vmax.f32 %v696, 1e-24
    %v739 = vmax.f32 %v698, 1e-24
    %v740 = vmax.f32 %v700, 1e-24
    %v741 = vmax.f32 %v702, 1e-24
    %v742 = vmax.f32 %v704, 1e-24
    %v743 = vmax.f32 %v706, 1e-24
    %v744 = vmax.f32 %v708, 1e-24
    %v745 = vmax.f32 %v710, 1e-24
    %v746 = vmax.f32 %v712, 1e-24
    %v747 = vmax.f32 %v714, 1e-24
    %v748 = vmax.f32 %v716, 1e-24
    %v749 = vmax.f32 %v718, 1e-24
    %v750 = vmax.f32 %v720, 1e-24
    %v751 = vmax.f32 %v722, 1e-24
    %v752 = vmax.f32 %v724, 1e-24
    %v753 = vmax.f32 %v726, 1e-24
    %v754 = vmax.f32 %v728, 1e-24
    %v755 = vmax.f32 %v730, 1e-24
    %v756 = vmax.f32 %v732, 1e-24
    %v757 = vrsqrt.pop %v733
    %v758 = vrsqrt.pop %v734
    %v759 = vrsqrt.pop %v735
    %v760 = vrsqrt.pop %v736
    %v761 = vrsqrt.pop %v737
    %v762 = vrsqrt.pop %v738
    %v763 = vrsqrt.pop %v739
    %v764 = vrsqrt.pop %v740
    %v765 = vrsqrt.pop %v741
    %v766 = vrsqrt.pop %v742
    %v767 = vrsqrt.pop %v743
    %v768 = vrsqrt.pop %v744
    %v769 = vrsqrt.pop %v745
    %v770 = vrsqrt.pop %v746
    %v771 = vrsqrt.pop %v747
    %v772 = vrsqrt.pop %v748
    %v773 = vrsqrt.pop %v749
    %v774 = vrsqrt.pop %v750
    %v775 = vrsqrt.pop %v751
    %v776 = vrsqrt.pop %v752
    %v777 = vrsqrt.pop %v753
    %v778 = vrsqrt.pop %v754
    %v779 = vrsqrt.pop %v755
    %v780 = vrsqrt.pop %v756
    %v781 = vmul.f32 %v487, %v757
    %v782 = vmul.f32 %v492, %v758
    %v783 = vmul.f32 %v497, %v759
    %v784 = vmul.f32 %v502, %v760
    %v785 = vmul.f32 %v507, %v761
    %v786 = vmul.f32 %v512, %v762
    %v787 = vmul.f32 %v517, %v763
    %v788 = vmul.f32 %v522, %v764
    %v789 = vmul.f32 %v527, %v765
    %v790 = vmul.f32 %v532, %v766
    %v791 = vmul.f32 %v537, %v767
    %v792 = vmul.f32 %v542, %v768
    %v793 = vmul.f32 %v547, %v769
    %v794 = vmul.f32 %v552, %v770
    %v795 = vmul.f32 %v557, %v771
    %v796 = vmul.f32 %v562, %v772
    %v797 = vmul.f32 %v567, %v773
    %v798 = vmul.f32 %v572, %v774
    %v799 = vmul.f32 %v577, %v775
    %v800 = vmul.f32 %v582, %v776
    %v801 = vmul.f32 %v587, %v777
    %v802 = vmul.f32 %v592, %v778
    %v803 = vmul.f32 %v597, %v779
    %v804 = vmul.f32 %v602, %v780
    %v805 = vpack.c.bf16 %v654, %v653
    %v806 = vpack.c.bf16 %v656, %v655
    %v807 = vpack.c.bf16 %v658, %v657
    %v808 = vpack.c.bf16 %v660, %v659
    %v813 = vunpack.c.l.b16 %v805
    %v814 = vunpack.c.h.b16 %v805
    %v815 = vunpack.c.l.b16 %v806
    %v816 = vunpack.c.h.b16 %v806
    %v817 = vunpack.c.l.b16 %v807
    %v818 = vunpack.c.h.b16 %v807
    %v819 = vunpack.c.l.b16 %v808
    %v820 = vunpack.c.h.b16 %v808
    %v821 = vpack.c.b16 %v813, %v813
    %v822 = vpack.c.b16 %v814, %v814
    %v823 = vpack.c.b16 %v815, %v815
    %v824 = vpack.c.b16 %v816, %v816
    %v825 = vpack.c.b16 %v817, %v817
    %v826 = vpack.c.b16 %v818, %v818
    %v827 = vpack.c.b16 %v819, %v819
    %v828 = vpack.c.b16 %v820, %v820
    %837 = vst [vmem:[#allocation2] sm:$0xf] %v821
    %838 = vst [vmem:[#allocation2 + $0x4] sm:$0xf] %v822
    %839 = vst [vmem:[#allocation2 + $0x8] sm:$0xf] %v823
    %840 = vst [vmem:[#allocation2 + $0xc] sm:$0xf] %v824
    %841 = vst [vmem:[#allocation2 + $0x10] sm:$0xf] %v825
    %842 = vst [vmem:[#allocation2 + $0x14] sm:$0xf] %v826
    %843 = vst [vmem:[#allocation2 + $0x18] sm:$0xf] %v827
    %844 = vst [vmem:[#allocation2 + $0x1c] sm:$0xf] %v828
    %v845 = vpack.c.bf16 %v782, %v781
    %v846 = vpack.c.bf16 %v784, %v783
    %v847 = vpack.c.bf16 %v786, %v785
    %v848 = vpack.c.bf16 %v788, %v787
    %v849 = vpack.c.bf16 %v790, %v789
    %v850 = vpack.c.bf16 %v792, %v791
    %v851 = vpack.c.bf16 %v794, %v793
    %v852 = vpack.c.bf16 %v796, %v795
    %v853 = vpack.c.bf16 %v798, %v797
    %v854 = vpack.c.bf16 %v800, %v799
    %v855 = vpack.c.bf16 %v802, %v801
    %v856 = vpack.c.bf16 %v804, %v803
    %v869 = vunpack.c.l.b16 %v845
    %v870 = vunpack.c.h.b16 %v845
    %v871 = vunpack.c.l.b16 %v846
    %v872 = vunpack.c.h.b16 %v846
    %v873 = vunpack.c.l.b16 %v847
    %v874 = vunpack.c.h.b16 %v847
    %v875 = vunpack.c.l.b16 %v848
    %v876 = vunpack.c.h.b16 %v848
    %v877 = vunpack.c.l.b16 %v849
    %v878 = vunpack.c.h.b16 %v849
    %v879 = vunpack.c.l.b16 %v850
    %v880 = vunpack.c.h.b16 %v850
    %v881 = vunpack.c.l.b16 %v851
    %v882 = vunpack.c.h.b16 %v851
    %v883 = vunpack.c.l.b16 %v852
    %v884 = vunpack.c.h.b16 %v852
    %v885 = vunpack.c.l.b16 %v853
    %v886 = vunpack.c.h.b16 %v853
    %v887 = vunpack.c.l.b16 %v854
    %v888 = vunpack.c.h.b16 %v854
    %v889 = vunpack.c.l.b16 %v855
    %v890 = vunpack.c.h.b16 %v855
    %v891 = vunpack.c.l.b16 %v856
    %v892 = vunpack.c.h.b16 %v856
    %v893 = vpack.c.b16 %v869, %v869
    %v894 = vpack.c.b16 %v870, %v870
    %v895 = vpack.c.b16 %v871, %v871
    %v896 = vpack.c.b16 %v872, %v872
    %v897 = vpack.c.b16 %v873, %v873
    %v898 = vpack.c.b16 %v874, %v874
    %v899 = vpack.c.b16 %v875, %v875
    %v900 = vpack.c.b16 %v876, %v876
    %v901 = vpack.c.b16 %v877, %v877
    %v902 = vpack.c.b16 %v878, %v878
    %v903 = vpack.c.b16 %v879, %v879
    %v904 = vpack.c.b16 %v880, %v880
    %v905 = vpack.c.b16 %v881, %v881
    %v906 = vpack.c.b16 %v882, %v882
    %v907 = vpack.c.b16 %v883, %v883
    %v908 = vpack.c.b16 %v884, %v884
    %v909 = vpack.c.b16 %v885, %v885
    %v910 = vpack.c.b16 %v886, %v886
    %v911 = vpack.c.b16 %v887, %v887
    %v912 = vpack.c.b16 %v888, %v888
    %v913 = vpack.c.b16 %v889, %v889
    %v914 = vpack.c.b16 %v890, %v890
    %v915 = vpack.c.b16 %v891, %v891
    %v916 = vpack.c.b16 %v892, %v892
    %941 = vst [vmem:[#allocation2 + $0x20] sm:$0xf] %v893
    %942 = vst [vmem:[#allocation2 + $0x24] sm:$0xf] %v894
    %943 = vst [vmem:[#allocation2 + $0x28] sm:$0xf] %v895
    %944 = vst [vmem:[#allocation2 + $0x2c] sm:$0xf] %v896
    %945 = vst [vmem:[#allocation2 + $0x30] sm:$0xf] %v897
    %946 = vst [vmem:[#allocation2 + $0x34] sm:$0xf] %v898
    %947 = vst [vmem:[#allocation2 + $0x38] sm:$0xf] %v899
    %948 = vst [vmem:[#allocation2 + $0x3c] sm:$0xf] %v900
    %949 = vst [vmem:[#allocation2 + $0x40] sm:$0xf] %v901
    %950 = vst [vmem:[#allocation2 + $0x44] sm:$0xf] %v902
    %951 = vst [vmem:[#allocation2 + $0x48] sm:$0xf] %v903
    %952 = vst [vmem:[#allocation2 + $0x4c] sm:$0xf] %v904
    %953 = vst [vmem:[#allocation2 + $0x50] sm:$0xf] %v905
    %954 = vst [vmem:[#allocation2 + $0x54] sm:$0xf] %v906
    %955 = vst [vmem:[#allocation2 + $0x58] sm:$0xf] %v907
    %956 = vst [vmem:[#allocation2 + $0x5c] sm:$0xf] %v908
    %957 = vst [vmem:[#allocation2 + $0x60] sm:$0xf] %v909
    %958 = vst [vmem:[#allocation2 + $0x64] sm:$0xf] %v910
    %959 = vst [vmem:[#allocation2 + $0x68] sm:$0xf] %v911
    %960 = vst [vmem:[#allocation2 + $0x6c] sm:$0xf] %v912
    %961 = vst [vmem:[#allocation2 + $0x70] sm:$0xf] %v913
    %962 = vst [vmem:[#allocation2 + $0x74] sm:$0xf] %v914
    %963 = vst [vmem:[#allocation2 + $0x78] sm:$0xf] %v915
    %964 = vst [vmem:[#allocation2 + $0x7c] sm:$0xf] %v916
    %v965 = vld [vmem:[%s7] sm:$0xf]
    %v966 = vld [vmem:[%s7 + $0x4] sm:$0xf]
    %v967 = vld [vmem:[%s7 + $0x8] sm:$0xf]
    %v968 = vld [vmem:[%s7 + $0xc] sm:$0xf]
    %v969 = vld [vmem:[%s7 + $0x10] sm:$0xf]
    %v970 = vld [vmem:[%s7 + $0x14] sm:$0xf]
    %v971 = vld [vmem:[%s7 + $0x18] sm:$0xf]
    %v972 = vld [vmem:[%s7 + $0x1c] sm:$0xf]
    %v973 = vld [vmem:[%s7 + $0x20] sm:$0xf]
    %v974 = vld [vmem:[%s7 + $0x24] sm:$0xf]
    %v975 = vld [vmem:[%s7 + $0x28] sm:$0xf]
    %v976 = vld [vmem:[%s7 + $0x2c] sm:$0xf]
    %v977 = vld [vmem:[%s7 + $0x30] sm:$0xf]
    %v978 = vld [vmem:[%s7 + $0x34] sm:$0xf]
    %v979 = vld [vmem:[%s7 + $0x38] sm:$0xf]
    %v980 = vld [vmem:[%s7 + $0x3c] sm:$0xf]
    %v981 = vld [vmem:[%s6] sm:$0xff]
    %v982 = vld [vmem:[%s6 + $0x8] sm:$0xff]
    %v983 = vld [vmem:[%s6 + $0x10] sm:$0xff]
    %v984 = vld [vmem:[%s6 + $0x18] sm:$0xff]
    %v985 = vld [vmem:[%s6 + $0x20] sm:$0xff]
    %v986 = vld [vmem:[%s6 + $0x28] sm:$0xff]
    %v987 = vld [vmem:[%s6 + $0x30] sm:$0xff]
    %v988 = vld [vmem:[%s6 + $0x38] sm:$0xff]
    %v989 = vld [vmem:[%s6 + $0x40] sm:$0xff]
    %v990 = vld [vmem:[%s6 + $0x48] sm:$0xff]
    %v991 = vld [vmem:[%s6 + $0x50] sm:$0xff]
    %v992 = vld [vmem:[%s6 + $0x58] sm:$0xff]
    %v993 = vld [vmem:[%s6 + $0x60] sm:$0xff]
    %v994 = vld [vmem:[%s6 + $0x68] sm:$0xff]
    %v995 = vld [vmem:[%s6 + $0x70] sm:$0xff]
    %v996 = vld [vmem:[%s6 + $0x78] sm:$0xff]
    %v997 = vld [vmem:[%s6 + $0x80] sm:$0xff]
    %v998 = vld [vmem:[%s6 + $0x88] sm:$0xff]
    %v999 = vld [vmem:[%s6 + $0x90] sm:$0xff]
    %v1000 = vld [vmem:[%s6 + $0x98] sm:$0xff]
    %v1001 = vld [vmem:[%s6 + $0xa0] sm:$0xff]
    %v1002 = vld [vmem:[%s6 + $0xa8] sm:$0xff]
    %v1003 = vld [vmem:[%s6 + $0xb0] sm:$0xff]
    %v1004 = vld [vmem:[%s6 + $0xb8] sm:$0xff]
    %v1005 = vld [vmem:[%s6 + $0xc0] sm:$0xff]
    %v1006 = vld [vmem:[%s6 + $0xc8] sm:$0xff]
    %v1007 = vld [vmem:[%s6 + $0xd0] sm:$0xff]
    %v1008 = vld [vmem:[%s6 + $0xd8] sm:$0xff]
    %v1009 = vld [vmem:[%s6 + $0xe0] sm:$0xff]
    %v1010 = vld [vmem:[%s6 + $0xe8] sm:$0xff]
    %v1011 = vld [vmem:[%s6 + $0xf0] sm:$0xff]
    %v1012 = vld [vmem:[%s6 + $0xf8] sm:$0xff]
    %v1029 = vunpack.c.l.b16 %v965
    %v1030 = vunpack.c.l.b16 %v966
    %v1031 = vunpack.c.l.b16 %v967
    %v1032 = vunpack.c.l.b16 %v968
    %v1033 = vunpack.c.l.b16 %v969
    %v1034 = vunpack.c.l.b16 %v970
    %v1035 = vunpack.c.l.b16 %v971
    %v1036 = vunpack.c.l.b16 %v972
    %v1037 = vunpack.c.l.b16 %v973
    %v1038 = vunpack.c.l.b16 %v974
    %v1039 = vunpack.c.l.b16 %v975
    %v1040 = vunpack.c.l.b16 %v976
    %v1041 = vunpack.c.l.b16 %v977
    %v1042 = vunpack.c.l.b16 %v978
    %v1043 = vunpack.c.l.b16 %v979
    %v1044 = vunpack.c.l.b16 %v980
    %v1045 = vpack.c.b16 %v1030, %v1029
    %v1046 = vpack.c.b16 %v1032, %v1031
    %v1047 = vpack.c.b16 %v1034, %v1033
    %v1048 = vpack.c.b16 %v1036, %v1035
    %v1049 = vpack.c.b16 %v1038, %v1037
    %v1050 = vpack.c.b16 %v1040, %v1039
    %v1051 = vpack.c.b16 %v1042, %v1041
    %v1052 = vpack.c.b16 %v1044, %v1043
    %1061 = vmatprep.subr.bf16.mxu0 0
    %1062 = vmatpush1.bf16.msra.mxu0 %v1045
    %1063 = vmatprep.subr.bf16.mxu0 0
    %1064 = vmatpush1.bf16.msra.mxu0 %v1046
    %1065 = vmatprep.subr.bf16.mxu0 0
    %1066 = vmatpush1.bf16.msra.mxu0 %v1047
    %1067 = vmatprep.subr.bf16.mxu0 0
    %1068 = vmatpush1.bf16.msra.mxu0 %v1048
    %1069 = vmatprep.subr.bf16.mxu0 0
    %1070 = vmatpush1.bf16.msra.mxu0 %v1049
    %1071 = vmatprep.subr.bf16.mxu0 0
    %1072 = vmatpush1.bf16.msra.mxu0 %v1050
    %1073 = vmatprep.subr.bf16.mxu0 0
    %1074 = vmatpush1.bf16.msra.mxu0 %v1051
    %1075 = vmatprep.subr.bf16.mxu0 0
    %1076 = vmatpush1.bf16.msra.mxu0 %v1052
    %1077 = vmatprep.subr.bf16.mxu0 0
    %1078 = vmatpush1.bf16.msra.mxu0 0
    %1079 = vmatprep.subr.bf16.mxu0 0
    %1080 = vmatpush1.bf16.msra.mxu0 0
    %1081 = vmatprep.subr.bf16.mxu0 0
    %1082 = vmatpush1.bf16.msra.mxu0 0
    %1083 = vmatprep.subr.bf16.mxu0 0
    %1084 = vmatpush1.bf16.msra.mxu0 0
    %1085 = vmatprep.subr.bf16.mxu0 0
    %1086 = vmatpush1.bf16.msra.mxu0 0
    %1087 = vmatprep.subr.bf16.mxu0 0
    %1088 = vmatpush1.bf16.msra.mxu0 0
    %1089 = vmatprep.subr.bf16.mxu0 0
    %1090 = vmatpush1.bf16.msra.mxu0 0
    %1091 = vmatprep.subr.bf16.mxu0 0
    %1092 = vmatpush1.bf16.msra.mxu0 0
    %1093 = vmatprep.mubr.bf16.mxu0 0
    %1094 = vmatmul.mubr.bf16.gmra.mrb[0].mxu0 %v805
    %v1095 = vpop.f32.mrb[0].mxu0
    %v1096 = vadd.f32 0.0, %v1095
    %v1097 = vpop.f32.mrb[0].mxu0
    %v1098 = vpop.f32.mrb[0].mxu0
    %v1099 = vadd.f32 0.0, %v1098
    %v1100 = vpop.f32.mrb[0].mxu0
    %1101 = vmatprep.mubr.bf16.mxu0 0
    %1102 = vmatmul.mubr.bf16.gmra.mrb[0].mxu0 %v806
    %v1103 = vpop.f32.mrb[0].mxu0
    %v1104 = vadd.f32 0.0, %v1103
    %v1105 = vpop.f32.mrb[0].mxu0
    %v1106 = vpop.f32.mrb[0].mxu0
    %v1107 = vadd.f32 0.0, %v1106
    %v1108 = vpop.f32.mrb[0].mxu0
    %1109 = vmatprep.mubr.bf16.mxu0 0
    %1110 = vmatmul.mubr.bf16.gmra.mrb[0].mxu0 %v807
    %v1111 = vpop.f32.mrb[0].mxu0
    %v1112 = vadd.f32 0.0, %v1111
    %v1113 = vpop.f32.mrb[0].mxu0
    %v1114 = vpop.f32.mrb[0].mxu0
    %v1115 = vadd.f32 0.0, %v1114
    %v1116 = vpop.f32.mrb[0].mxu0
    %1117 = vmatprep.mubr.bf16.mxu0 0
    %1118 = vmatmul.mubr.bf16.gmra.mrb[0].mxu0 %v808
    %v1119 = vpop.f32.mrb[0].mxu0
    %v1120 = vadd.f32 0.0, %v1119
    %v1121 = vpop.f32.mrb[0].mxu0
    %v1122 = vpop.f32.mrb[0].mxu0
    %v1123 = vadd.f32 0.0, %v1122
    %v1124 = vpop.f32.mrb[0].mxu0
    %1125 = vdwg.mxu0
    %1127 = vset.pattern.permute.xlu0 0
    %1128 = vperm.xlu0 %1127, %v981
    %v1129 = vpop.permute.xlu0 %1128
    %1132 = vset.pattern.permute.xlu0 0
    %1133 = vperm.xlu0 %1132, %v982
    %v1134 = vpop.permute.xlu0 %1133
    %1137 = vset.pattern.permute.xlu0 0
    %1138 = vperm.xlu0 %1137, %v983
    %v1139 = vpop.permute.xlu0 %1138
    %1142 = vset.pattern.permute.xlu0 0
    %1143 = vperm.xlu0 %1142, %v984
    %v1144 = vpop.permute.xlu0 %1143
    %1147 = vset.pattern.permute.xlu0 0
    %1148 = vperm.xlu0 %1147, %v985
    %v1149 = vpop.permute.xlu0 %1148
    %1152 = vset.pattern.permute.xlu0 0
    %1153 = vperm.xlu0 %1152, %v986
    %v1154 = vpop.permute.xlu0 %1153
    %1157 = vset.pattern.permute.xlu0 0
    %1158 = vperm.xlu0 %1157, %v987
    %v1159 = vpop.permute.xlu0 %1158
    %1162 = vset.pattern.permute.xlu0 0
    %1163 = vperm.xlu0 %1162, %v988
    %v1164 = vpop.permute.xlu0 %1163
    %v1166 = vmul.f32 %v1129, %v1096
    %v1167 = vmul.f32 %v1134, %v1099
    %v1168 = vmul.f32 %v1139, %v1104
    %v1169 = vmul.f32 %v1144, %v1107
    %v1170 = vmul.f32 %v1149, %v1112
    %v1171 = vmul.f32 %v1154, %v1115
    %v1172 = vmul.f32 %v1159, %v1120
    %v1173 = vmul.f32 %v1164, %v1123
    %1174 = vmatprep.subr.bf16.mxu0 0
    %1175 = vmatpush1.bf16.msra.mxu0 %v1045
    %1176 = vmatprep.subr.bf16.mxu0 0
    %1177 = vmatpush1.bf16.msra.mxu0 %v1046
    %1178 = vmatprep.subr.bf16.mxu0 0
    %1179 = vmatpush1.bf16.msra.mxu0 %v1047
    %1180 = vmatprep.subr.bf16.mxu0 0
    %1181 = vmatpush1.bf16.msra.mxu0 %v1048
    %1182 = vmatprep.subr.bf16.mxu0 0
    %1183 = vmatpush1.bf16.msra.mxu0 %v1049
    %1184 = vmatprep.subr.bf16.mxu0 0
    %1185 = vmatpush1.bf16.msra.mxu0 %v1050
    %1186 = vmatprep.subr.bf16.mxu0 0
    %1187 = vmatpush1.bf16.msra.mxu0 %v1051
    %1188 = vmatprep.subr.bf16.mxu0 0
    %1189 = vmatpush1.bf16.msra.mxu0 %v1052
    %1190 = vmatprep.subr.bf16.mxu0 0
    %1191 = vmatpush1.bf16.msra.mxu0 0
    %1192 = vmatprep.subr.bf16.mxu0 0
    %1193 = vmatpush1.bf16.msra.mxu0 0
    %1194 = vmatprep.subr.bf16.mxu0 0
    %1195 = vmatpush1.bf16.msra.mxu0 0
    %1196 = vmatprep.subr.bf16.mxu0 0
    %1197 = vmatpush1.bf16.msra.mxu0 0
    %1198 = vmatprep.subr.bf16.mxu0 0
    %1199 = vmatpush1.bf16.msra.mxu0 0
    %1200 = vmatprep.subr.bf16.mxu0 0
    %1201 = vmatpush1.bf16.msra.mxu0 0
    %1202 = vmatprep.subr.bf16.mxu0 0
    %1203 = vmatpush1.bf16.msra.mxu0 0
    %1204 = vmatprep.subr.bf16.mxu0 0
    %1205 = vmatpush1.bf16.msra.mxu0 0
    %1206 = vmatprep.mubr.bf16.mxu0 0
    %1207 = vmatmul.mubr.bf16.gmra.mrb[0].mxu0 %v845
    %v1208 = vpop.f32.mrb[0].mxu0
    %v1209 = vadd.f32 0.0, %v1208
    %v1210 = vpop.f32.mrb[0].mxu0
    %v1211 = vpop.f32.mrb[0].mxu0
    %v1212 = vadd.f32 0.0, %v1211
    %v1213 = vpop.f32.mrb[0].mxu0
    %1214 = vmatprep.mubr.bf16.mxu0 0
    %1215 = vmatmul.mubr.bf16.gmra.mrb[0].mxu0 %v846
    %v1216 = vpop.f32.mrb[0].mxu0
    %v1217 = vadd.f32 0.0, %v1216
    %v1218 = vpop.f32.mrb[0].mxu0
    %v1219 = vpop.f32.mrb[0].mxu0
    %v1220 = vadd.f32 0.0, %v1219
    %v1221 = vpop.f32.mrb[0].mxu0
    %1222 = vmatprep.mubr.bf16.mxu0 0
    %1223 = vmatmul.mubr.bf16.gmra.mrb[0].mxu0 %v847
    %v1224 = vpop.f32.mrb[0].mxu0
    %v1225 = vadd.f32 0.0, %v1224
    %v1226 = vpop.f32.mrb[0].mxu0
    %v1227 = vpop.f32.mrb[0].mxu0
    %v1228 = vadd.f32 0.0, %v1227
    %v1229 = vpop.f32.mrb[0].mxu0
    %1230 = vmatprep.mubr.bf16.mxu0 0
    %1231 = vmatmul.mubr.bf16.gmra.mrb[0].mxu0 %v848
    %v1232 = vpop.f32.mrb[0].mxu0
    %v1233 = vadd.f32 0.0, %v1232
    %v1234 = vpop.f32.mrb[0].mxu0
    %v1235 = vpop.f32.mrb[0].mxu0
    %v1236 = vadd.f32 0.0, %v1235
    %v1237 = vpop.f32.mrb[0].mxu0
    %1238 = vmatprep.mubr.bf16.mxu0 0
    %1239 = vmatmul.mubr.bf16.gmra.mrb[0].mxu0 %v849
    %v1240 = vpop.f32.mrb[0].mxu0
    %v1241 = vadd.f32 0.0, %v1240
    %v1242 = vpop.f32.mrb[0].mxu0
    %v1243 = vpop.f32.mrb[0].mxu0
    %v1244 = vadd.f32 0.0, %v1243
    %v1245 = vpop.f32.mrb[0].mxu0
    %1246 = vmatprep.mubr.bf16.mxu0 0
    %1247 = vmatmul.mubr.bf16.gmra.mrb[0].mxu0 %v850
    %v1248 = vpop.f32.mrb[0].mxu0
    %v1249 = vadd.f32 0.0, %v1248
    %v1250 = vpop.f32.mrb[0].mxu0
    %v1251 = vpop.f32.mrb[0].mxu0
    %v1252 = vadd.f32 0.0, %v1251
    %v1253 = vpop.f32.mrb[0].mxu0
    %1254 = vmatprep.mubr.bf16.mxu0 0
    %1255 = vmatmul.mubr.bf16.gmra.mrb[0].mxu0 %v851
    %v1256 = vpop.f32.mrb[0].mxu0
    %v1257 = vadd.f32 0.0, %v1256
    %v1258 = vpop.f32.mrb[0].mxu0
    %v1259 = vpop.f32.mrb[0].mxu0
    %v1260 = vadd.f32 0.0, %v1259
    %v1261 = vpop.f32.mrb[0].mxu0
    %1262 = vmatprep.mubr.bf16.mxu0 0
    %1263 = vmatmul.mubr.bf16.gmra.mrb[0].mxu0 %v852
    %v1264 = vpop.f32.mrb[0].mxu0
    %v1265 = vadd.f32 0.0, %v1264
    %v1266 = vpop.f32.mrb[0].mxu0
    %v1267 = vpop.f32.mrb[0].mxu0
    %v1268 = vadd.f32 0.0, %v1267
    %v1269 = vpop.f32.mrb[0].mxu0
    %1270 = vmatprep.mubr.bf16.mxu0 0
    %1271 = vmatmul.mubr.bf16.gmra.mrb[0].mxu0 %v853
    %v1272 = vpop.f32.mrb[0].mxu0
    %v1273 = vadd.f32 0.0, %v1272
    %v1274 = vpop.f32.mrb[0].mxu0
    %v1275 = vpop.f32.mrb[0].mxu0
    %v1276 = vadd.f32 0.0, %v1275
    %v1277 = vpop.f32.mrb[0].mxu0
    %1278 = vmatprep.mubr.bf16.mxu0 0
    %1279 = vmatmul.mubr.bf16.gmra.mrb[0].mxu0 %v854
    %v1280 = vpop.f32.mrb[0].mxu0
    %v1281 = vadd.f32 0.0, %v1280
    %v1282 = vpop.f32.mrb[0].mxu0
    %v1283 = vpop.f32.mrb[0].mxu0
    %v1284 = vadd.f32 0.0, %v1283
    %v1285 = vpop.f32.mrb[0].mxu0
    %1286 = vmatprep.mubr.bf16.mxu0 0
    %1287 = vmatmul.mubr.bf16.gmra.mrb[0].mxu0 %v855
    %v1288 = vpop.f32.mrb[0].mxu0
    %v1289 = vadd.f32 0.0, %v1288
    %v1290 = vpop.f32.mrb[0].mxu0
    %v1291 = vpop.f32.mrb[0].mxu0
    %v1292 = vadd.f32 0.0, %v1291
    %v1293 = vpop.f32.mrb[0].mxu0
    %1294 = vmatprep.mubr.bf16.mxu0 0
    %1295 = vmatmul.mubr.bf16.gmra.mrb[0].mxu0 %v856
    %v1296 = vpop.f32.mrb[0].mxu0
    %v1297 = vadd.f32 0.0, %v1296
    %v1298 = vpop.f32.mrb[0].mxu0
    %v1299 = vpop.f32.mrb[0].mxu0
    %v1300 = vadd.f32 0.0, %v1299
    %v1301 = vpop.f32.mrb[0].mxu0
    %1302 = vdwg.mxu0
    %1304 = vset.pattern.permute.xlu0 0
    %1305 = vperm.xlu0 %1304, %v989
    %v1306 = vpop.permute.xlu0 %1305
    %1309 = vset.pattern.permute.xlu0 0
    %1310 = vperm.xlu0 %1309, %v990
    %v1311 = vpop.permute.xlu0 %1310
    %1314 = vset.pattern.permute.xlu0 0
    %1315 = vperm.xlu0 %1314, %v991
    %v1316 = vpop.permute.xlu0 %1315
    %1319 = vset.pattern.permute.xlu0 0
    %1320 = vperm.xlu0 %1319, %v992
    %v1321 = vpop.permute.xlu0 %1320
    %1324 = vset.pattern.permute.xlu0 0
    %1325 = vperm.xlu0 %1324, %v993
    %v1326 = vpop.permute.xlu0 %1325
    %1329 = vset.pattern.permute.xlu0 0
    %1330 = vperm.xlu0 %1329, %v994
    %v1331 = vpop.permute.xlu0 %1330
    %1334 = vset.pattern.permute.xlu0 0
    %1335 = vperm.xlu0 %1334, %v995
    %v1336 = vpop.permute.xlu0 %1335
    %1339 = vset.pattern.permute.xlu0 0
    %1340 = vperm.xlu0 %1339, %v996
    %v1341 = vpop.permute.xlu0 %1340
    %1344 = vset.pattern.permute.xlu0 0
    %1345 = vperm.xlu0 %1344, %v997
    %v1346 = vpop.permute.xlu0 %1345
    %1349 = vset.pattern.permute.xlu0 0
    %1350 = vperm.xlu0 %1349, %v998
    %v1351 = vpop.permute.xlu0 %1350
    %1354 = vset.pattern.permute.xlu0 0
    %1355 = vperm.xlu0 %1354, %v999
    %v1356 = vpop.permute.xlu0 %1355
    %1359 = vset.pattern.permute.xlu0 0
    %1360 = vperm.xlu0 %1359, %v1000
    %v1361 = vpop.permute.xlu0 %1360
    %1364 = vset.pattern.permute.xlu0 0
    %1365 = vperm.xlu0 %1364, %v1001
    %v1366 = vpop.permute.xlu0 %1365
    %1369 = vset.pattern.permute.xlu0 0
    %1370 = vperm.xlu0 %1369, %v1002
    %v1371 = vpop.permute.xlu0 %1370
    %1374 = vset.pattern.permute.xlu0 0
    %1375 = vperm.xlu0 %1374, %v1003
    %v1376 = vpop.permute.xlu0 %1375
    %1379 = vset.pattern.permute.xlu0 0
    %1380 = vperm.xlu0 %1379, %v1004
    %v1381 = vpop.permute.xlu0 %1380
    %1384 = vset.pattern.permute.xlu0 0
    %1385 = vperm.xlu0 %1384, %v1005
    %v1386 = vpop.permute.xlu0 %1385
    %1389 = vset.pattern.permute.xlu0 0
    %1390 = vperm.xlu0 %1389, %v1006
    %v1391 = vpop.permute.xlu0 %1390
    %1394 = vset.pattern.permute.xlu0 0
    %1395 = vperm.xlu0 %1394, %v1007
    %v1396 = vpop.permute.xlu0 %1395
    %1399 = vset.pattern.permute.xlu0 0
    %1400 = vperm.xlu0 %1399, %v1008
    %v1401 = vpop.permute.xlu0 %1400
    %1404 = vset.pattern.permute.xlu0 0
    %1405 = vperm.xlu0 %1404, %v1009
    %v1406 = vpop.permute.xlu0 %1405
    %1409 = vset.pattern.permute.xlu0 0
    %1410 = vperm.xlu0 %1409, %v1010
    %v1411 = vpop.permute.xlu0 %1410
    %1414 = vset.pattern.permute.xlu0 0
    %1415 = vperm.xlu0 %1414, %v1011
    %v1416 = vpop.permute.xlu0 %1415
    %1419 = vset.pattern.permute.xlu0 0
    %1420 = vperm.xlu0 %1419, %v1012
    %v1421 = vpop.permute.xlu0 %1420
    %v1423 = vmul.f32 %v1306, %v1209
    %v1424 = vmul.f32 %v1311, %v1212
    %v1425 = vmul.f32 %v1316, %v1217
    %v1426 = vmul.f32 %v1321, %v1220
    %v1427 = vmul.f32 %v1326, %v1225
    %v1428 = vmul.f32 %v1331, %v1228
    %v1429 = vmul.f32 %v1336, %v1233
    %v1430 = vmul.f32 %v1341, %v1236
    %v1431 = vmul.f32 %v1346, %v1241
    %v1432 = vmul.f32 %v1351, %v1244
    %v1433 = vmul.f32 %v1356, %v1249
    %v1434 = vmul.f32 %v1361, %v1252
    %v1435 = vmul.f32 %v1366, %v1257
    %v1436 = vmul.f32 %v1371, %v1260
    %v1437 = vmul.f32 %v1376, %v1265
    %v1438 = vmul.f32 %v1381, %v1268
    %v1439 = vmul.f32 %v1386, %v1273
    %v1440 = vmul.f32 %v1391, %v1276
    %v1441 = vmul.f32 %v1396, %v1281
    %v1442 = vmul.f32 %v1401, %v1284
    %v1443 = vmul.f32 %v1406, %v1289
    %v1444 = vmul.f32 %v1411, %v1292
    %v1445 = vmul.f32 %v1416, %v1297
    %v1446 = vmul.f32 %v1421, %v1300
    %v1447 = vpack.c.bf16 %v1167, %v1166
    %v1448 = vpack.c.bf16 %v1169, %v1168
    %v1449 = vpack.c.bf16 %v1171, %v1170
    %v1450 = vpack.c.bf16 %v1173, %v1172
    %v1455 = vunpack.c.l.b16 %v1447
    %v1456 = vunpack.c.h.b16 %v1447
    %v1457 = vunpack.c.l.b16 %v1448
    %v1458 = vunpack.c.h.b16 %v1448
    %v1459 = vunpack.c.l.b16 %v1449
    %v1460 = vunpack.c.h.b16 %v1449
    %v1461 = vunpack.c.l.b16 %v1450
    %v1462 = vunpack.c.h.b16 %v1450
    %v1463 = vpack.c.b16 %v1455, %v1455
    %v1464 = vpack.c.b16 %v1456, %v1456
    %v1465 = vpack.c.b16 %v1457, %v1457
    %v1466 = vpack.c.b16 %v1458, %v1458
    %v1467 = vpack.c.b16 %v1459, %v1459
    %v1468 = vpack.c.b16 %v1460, %v1460
    %v1469 = vpack.c.b16 %v1461, %v1461
    %v1470 = vpack.c.b16 %v1462, %v1462
    %1479 = vst [vmem:[#allocation4] sm:$0xf] %v1463
    %1480 = vst [vmem:[#allocation4 + $0x4] sm:$0xf] %v1464
    %1481 = vst [vmem:[#allocation4 + $0x8] sm:$0xf] %v1465
    %1482 = vst [vmem:[#allocation4 + $0xc] sm:$0xf] %v1466
    %1483 = vst [vmem:[#allocation4 + $0x10] sm:$0xf] %v1467
    %1484 = vst [vmem:[#allocation4 + $0x14] sm:$0xf] %v1468
    %1485 = vst [vmem:[#allocation4 + $0x18] sm:$0xf] %v1469
    %1486 = vst [vmem:[#allocation4 + $0x1c] sm:$0xf] %v1470
    %v1487 = vpack.c.bf16 %v1424, %v1423
    %v1488 = vpack.c.bf16 %v1426, %v1425
    %v1489 = vpack.c.bf16 %v1428, %v1427
    %v1490 = vpack.c.bf16 %v1430, %v1429
    %v1491 = vpack.c.bf16 %v1432, %v1431
    %v1492 = vpack.c.bf16 %v1434, %v1433
    %v1493 = vpack.c.bf16 %v1436, %v1435
    %v1494 = vpack.c.bf16 %v1438, %v1437
    %v1495 = vpack.c.bf16 %v1440, %v1439
    %v1496 = vpack.c.bf16 %v1442, %v1441
    %v1497 = vpack.c.bf16 %v1444, %v1443
    %v1498 = vpack.c.bf16 %v1446, %v1445
    %v1511 = vunpack.c.l.b16 %v1487
    %v1512 = vunpack.c.h.b16 %v1487
    %v1513 = vunpack.c.l.b16 %v1488
    %v1514 = vunpack.c.h.b16 %v1488
    %v1515 = vunpack.c.l.b16 %v1489
    %v1516 = vunpack.c.h.b16 %v1489
    %v1517 = vunpack.c.l.b16 %v1490
    %v1518 = vunpack.c.h.b16 %v1490
    %v1519 = vunpack.c.l.b16 %v1491
    %v1520 = vunpack.c.h.b16 %v1491
    %v1521 = vunpack.c.l.b16 %v1492
    %v1522 = vunpack.c.h.b16 %v1492
    %v1523 = vunpack.c.l.b16 %v1493
    %v1524 = vunpack.c.h.b16 %v1493
    %v1525 = vunpack.c.l.b16 %v1494
    %v1526 = vunpack.c.h.b16 %v1494
    %v1527 = vunpack.c.l.b16 %v1495
    %v1528 = vunpack.c.h.b16 %v1495
    %v1529 = vunpack.c.l.b16 %v1496
    %v1530 = vunpack.c.h.b16 %v1496
    %v1531 = vunpack.c.l.b16 %v1497
    %v1532 = vunpack.c.h.b16 %v1497
    %v1533 = vunpack.c.l.b16 %v1498
    %v1534 = vunpack.c.h.b16 %v1498
    %v1535 = vpack.c.b16 %v1511, %v1511
    %v1536 = vpack.c.b16 %v1512, %v1512
    %v1537 = vpack.c.b16 %v1513, %v1513
    %v1538 = vpack.c.b16 %v1514, %v1514
    %v1539 = vpack.c.b16 %v1515, %v1515
    %v1540 = vpack.c.b16 %v1516, %v1516
    %v1541 = vpack.c.b16 %v1517, %v1517
    %v1542 = vpack.c.b16 %v1518, %v1518
    %v1543 = vpack.c.b16 %v1519, %v1519
    %v1544 = vpack.c.b16 %v1520, %v1520
    %v1545 = vpack.c.b16 %v1521, %v1521
    %v1546 = vpack.c.b16 %v1522, %v1522
    %v1547 = vpack.c.b16 %v1523, %v1523
    %v1548 = vpack.c.b16 %v1524, %v1524
    %v1549 = vpack.c.b16 %v1525, %v1525
    %v1550 = vpack.c.b16 %v1526, %v1526
    %v1551 = vpack.c.b16 %v1527, %v1527
    %v1552 = vpack.c.b16 %v1528, %v1528
    %v1553 = vpack.c.b16 %v1529, %v1529
    %v1554 = vpack.c.b16 %v1530, %v1530
    %v1555 = vpack.c.b16 %v1531, %v1531
    %v1556 = vpack.c.b16 %v1532, %v1532
    %v1557 = vpack.c.b16 %v1533, %v1533
    %v1558 = vpack.c.b16 %v1534, %v1534
    %1583 = vst [vmem:[#allocation4 + $0x20] sm:$0xf] %v1535
    %1584 = vst [vmem:[#allocation4 + $0x24] sm:$0xf] %v1536
    %1585 = vst [vmem:[#allocation4 + $0x28] sm:$0xf] %v1537
    %1586 = vst [vmem:[#allocation4 + $0x2c] sm:$0xf] %v1538
    %1587 = vst [vmem:[#allocation4 + $0x30] sm:$0xf] %v1539
    %1588 = vst [vmem:[#allocation4 + $0x34] sm:$0xf] %v1540
    %1589 = vst [vmem:[#allocation4 + $0x38] sm:$0xf] %v1541
    %1590 = vst [vmem:[#allocation4 + $0x3c] sm:$0xf] %v1542
    %1591 = vst [vmem:[#allocation4 + $0x40] sm:$0xf] %v1543
    %1592 = vst [vmem:[#allocation4 + $0x44] sm:$0xf] %v1544
    %1593 = vst [vmem:[#allocation4 + $0x48] sm:$0xf] %v1545
    %1594 = vst [vmem:[#allocation4 + $0x4c] sm:$0xf] %v1546
    %1595 = vst [vmem:[#allocation4 + $0x50] sm:$0xf] %v1547
    %1596 = vst [vmem:[#allocation4 + $0x54] sm:$0xf] %v1548
    %1597 = vst [vmem:[#allocation4 + $0x58] sm:$0xf] %v1549
    %1598 = vst [vmem:[#allocation4 + $0x5c] sm:$0xf] %v1550
    %1599 = vst [vmem:[#allocation4 + $0x60] sm:$0xf] %v1551
    %1600 = vst [vmem:[#allocation4 + $0x64] sm:$0xf] %v1552
    %1601 = vst [vmem:[#allocation4 + $0x68] sm:$0xf] %v1553
    %1602 = vst [vmem:[#allocation4 + $0x6c] sm:$0xf] %v1554
    %1603 = vst [vmem:[#allocation4 + $0x70] sm:$0xf] %v1555
    %1604 = vst [vmem:[#allocation4 + $0x74] sm:$0xf] %v1556
    %1605 = vst [vmem:[#allocation4 + $0x78] sm:$0xf] %v1557
    %1606 = vst [vmem:[#allocation4 + $0x7c] sm:$0xf] %v1558
    // Predicated region
    $region34: #{gcn_forward.3} parent=1 // pred_check
      _
    $region35: #{gcn_forward.3} parent=1 // pred_check_branch
      %1608 = sbr.rel (0) target = $region37
    $region36: #{gcn_forward.3} parent=1 // pred_region
      %s1610 = ssub.s32 2048, 2048
      %1611 = vsyncadd [#allocation3], %s1610
      %s1612 = sshll.u32 [#allocation2], 4
      %s1613 = int_to_ptr.vmem [resolvable:$true] %s1612
      %1618 = dma.vmem_to_hbm [thread:$0]  %s1613, 2048, %s8, [#allocation3], 64, 64, 4
    $region37: #{gcn_forward.3} parent=1 // pred_fallthru
      _
    // Predicated region
    $region38: #{gcn_forward.3} parent=1 // pred_check
      _
    $region39: #{gcn_forward.3} parent=1 // pred_check_branch
      %1620 = sbr.rel (0) target = $region41
    $region40: #{gcn_forward.3} parent=1 // pred_region
      %s1622 = ssub.s32 2048, 2048
      %1623 = vsyncadd [#allocation5], %s1622
      %s1624 = sshll.u32 [#allocation4], 4
      %s1625 = int_to_ptr.vmem [resolvable:$true] %s1624
      %1630 = dma.vmem_to_hbm [thread:$0]  %s1625, 2048, %s9, [#allocation5], 64, 64, 4
    $region41: #{gcn_forward.3} parent=1 // pred_fallthru
      _
    // Predicated region
    $region42: #{gcn_forward.3} parent=1 // pred_check
      _
    $region43: #{gcn_forward.3} parent=1 // pred_check_branch
      %1632 = sbr.rel (0) target = $region45
    $region44: #{gcn_forward.3} parent=1 // pred_region
      %1633 = dma.done [#allocation3], 2048
    $region45: #{gcn_forward.3} parent=1 // pred_fallthru
      _
    // Predicated region
    $region46: #{gcn_forward.3} parent=1 // pred_check
      _
    $region47: #{gcn_forward.3} parent=1 // pred_check_branch
      %1635 = sbr.rel (0) target = $region49
    $region48: #{gcn_forward.3} parent=1 // pred_region
      %1636 = dma.done [#allocation5], 2048
    $region49: #{gcn_forward.3} parent=1 // pred_fallthru
      _
    %1637 = vsyncpa [#allocation3], 1
    %1638 = vsyncpa [#allocation5], 1

</llo_original>
